<compile_context>
chip_gen: v7x
topology: tpu7x:2x2x1
jax: 0.10.0
libtpu: 0.0.40
codegen_flags: <defaults>
</compile_context>

<pallas_src>
import functools

import jax
import jax.numpy as jnp
import numpy as np
from jax.experimental import pallas as pl
from jax.experimental.pallas import tpu as pltpu

LN_EPS = 1e-5


def _ln(x, g, b, eps):
    mu = jnp.mean(x, axis=-1, keepdims=True)
    var = jnp.mean((x - mu) ** 2, axis=-1, keepdims=True)
    return (x - mu) * jax.lax.rsqrt(var + eps) * g + b


# ----------------------------------------------------------------------------
# Fused depth-step kernel: deep-MLP -> encoder layer -> relu(res(img)) residual.
# Grid iterates over batch; one invocation handles one (S, .) batch row.
# ----------------------------------------------------------------------------
def _depth_block_kernel(x_ref, img_ref, *refs, n_heads, eps):
    o_ref = refs[-1]
    mlp_refs = refs[0:20]                                  # 5 layers x (w, b, g, beta)
    w_in, b_in, w_o, b_o, ln1_g, ln1_b = refs[20:26]       # self-attention
    wf1, bf1, wf2, bf2, ln2_g, ln2_b = refs[26:32]         # FFN
    w_res, b_res = refs[32:34]                             # residual linear on img

    x = x_ref[0].astype(jnp.float32)       # (S, Din)
    img = img_ref[0].astype(jnp.float32)   # (S, P)

    # --- deep MLP: 5 x (Linear -> Tanh -> LayerNorm); dropout == identity ---
    h = x
    for j in range(5):
        w, b, g, be = mlp_refs[4 * j:4 * j + 4]
        h = jnp.dot(h, w[...], preferred_element_type=jnp.float32) + b[...]
        h = jnp.tanh(h)
        h = _ln(h, g[...], be[...], eps)
    # h: (S, z)

    # --- self-attention (post-norm TransformerEncoderLayer, nhead heads) ---
    z_dim = h.shape[-1]
    hd = z_dim // n_heads
    scale = 1.0 / float(np.sqrt(hd))

    proj = jnp.dot(h, w_in[...], preferred_element_type=jnp.float32) + b_in[...]  # (S, 3z)
    heads = []
    for hh in range(n_heads):
        qs = proj[:, hh * hd:(hh + 1) * hd] * scale
        ks = proj[:, z_dim + hh * hd:z_dim + (hh + 1) * hd]
        vs = proj[:, 2 * z_dim + hh * hd:2 * z_dim + (hh + 1) * hd]
        # scores without materializing ks.T (contract last dims)
        s = jax.lax.dot_general(qs, ks, (((1,), (1,)), ((), ())),
                                preferred_element_type=jnp.float32)   # (S, S)
        s = s - jnp.max(s, axis=-1, keepdims=True)
        p = jnp.exp(s)
        p = p * pl.reciprocal(jnp.sum(p, axis=-1, keepdims=True), approx=True)
        heads.append(jnp.dot(p, vs, preferred_element_type=jnp.float32))  # (S, hd)
    attn = jnp.concatenate(heads, axis=-1)                                # (S, z)
    attn = jnp.dot(attn, w_o[...], preferred_element_type=jnp.float32) + b_o[...]
    y = _ln(h + attn, ln1_g[...], ln1_b[...], eps)

    # --- FFN: linear -> relu -> linear, residual + LayerNorm ---
    f = jnp.dot(y, wf1[...], preferred_element_type=jnp.float32) + bf1[...]
    f = jnp.maximum(f, 0.0)
    f = jnp.dot(f, wf2[...], preferred_element_type=jnp.float32) + bf2[...]
    y = _ln(y + f, ln2_g[...], ln2_b[...], eps)

    # --- residual from the raw input: x + relu(img @ W_res + b_res) ---
    r = jnp.dot(img, w_res[...], preferred_element_type=jnp.float32) + b_res[...]
    o_ref[0] = (y + jnp.maximum(r, 0.0)).astype(o_ref.dtype)


def depth_block(x, img, p, *, n_heads, eps=LN_EPS):
    B, S, Din = x.shape
    _, _, P = img.shape
    z_dim = p["attn"]["w_o"].shape[0]

    flat_inputs = [x, img]
    in_specs = [
        pl.BlockSpec((1, S, Din), lambda b: (b, 0, 0)),
        pl.BlockSpec((1, S, P), lambda b: (b, 0, 0)),
    ]

    def add_full(arr):
        flat_inputs.append(arr)
        nd = arr.ndim
        in_specs.append(pl.BlockSpec(arr.shape, lambda b, nd=nd: (0,) * nd))

    for layer in p["mlp"]:
        for k in ("w", "b", "g", "beta"):
            add_full(layer[k])
    for k in ("w_in", "b_in", "w_o", "b_o", "ln1_g", "ln1_b"):
        add_full(p["attn"][k])
    for k in ("w1", "b1", "w2", "b2", "ln2_g", "ln2_b"):
        add_full(p["ffn"][k])
    add_full(p["res"]["w"])
    add_full(p["res"]["b"])

    kernel = functools.partial(_depth_block_kernel, n_heads=n_heads, eps=eps)
    return pl.pallas_call(
        kernel,
        out_shape=jax.ShapeDtypeStruct((B, S, z_dim), x.dtype),
        grid=(B,),
        in_specs=in_specs,
        out_specs=pl.BlockSpec((1, S, z_dim), lambda b: (b, 0, 0)),
        compiler_params=pltpu.CompilerParams(dimension_semantics=("parallel",)),
    )(*flat_inputs)


# ----------------------------------------------------------------------------
# mlp_head: LayerNorm(z) -> Linear(z, num_classes)
# ----------------------------------------------------------------------------
def _head_kernel(x_ref, g_ref, b_ref, w_ref, bias_ref, o_ref, *, eps):
    x = x_ref[0].astype(jnp.float32)                      # (S, z)
    xn = _ln(x, g_ref[...], b_ref[...], eps)
    o_ref[0] = (jnp.dot(xn, w_ref[...], preferred_element_type=jnp.float32)
                + bias_ref[...]).astype(o_ref.dtype)


def mlp_head(x, p, *, eps=LN_EPS):
    B, S, z_dim = x.shape
    C = p["w"].shape[1]

    def full(arr):
        nd = arr.ndim
        return pl.BlockSpec(arr.shape, lambda b, nd=nd: (0,) * nd)

    kernel = functools.partial(_head_kernel, eps=eps)
    return pl.pallas_call(
        kernel,
        out_shape=jax.ShapeDtypeStruct((B, S, C), x.dtype),
        grid=(B,),
        in_specs=[
            pl.BlockSpec((1, S, z_dim), lambda b: (b, 0, 0)),
            full(p["g"]), full(p["b"]), full(p["w"]), full(p["bias"]),
        ],
        out_specs=pl.BlockSpec((1, S, C), lambda b: (b, 0, 0)),
        compiler_params=pltpu.CompilerParams(dimension_semantics=("parallel",)),
    )(x, p["g"], p["b"], p["w"], p["bias"])


# ----------------------------------------------------------------------------
# Full TransformerBackbone forward: returns (mlp_head(x), x)
# ----------------------------------------------------------------------------
def transformer_backbone(img, params, *, n_heads=2):
    x = img
    for p in params["blocks"]:
        x = depth_block(x, img, p, n_heads=n_heads)
    logits = mlp_head(x, params["head"])
    return logits, x


# ----------------------------------------------------------------------------
# Deterministic parameter init (same shapes as the PyTorch module; weights are
# stored pre-transposed as (in_dim, out_dim) so kernels never transpose).
# ----------------------------------------------------------------------------
def init_params(key, *, patch_dim, z_dim, depth, d_ff, num_classes):
    def lin(k, din, dout):
        bound = 1.0 / np.sqrt(din)
        kw, kb = jax.random.split(k)
        w = jax.random.uniform(kw, (din, dout), jnp.float32, -bound, bound)
        b = jax.random.uniform(kb, (1, dout), jnp.float32, -bound, bound)
        return w, b

    blocks = []
    for i in range(depth):
        kb = jax.random.fold_in(key, i)
        din = patch_dim if i == 0 else z_dim
        dims = [(din, 2 * z_dim), (2 * z_dim, 4 * z_dim), (4 * z_dim, 2 * z_dim),
                (2 * z_dim, 2 * z_dim), (2 * z_dim, z_dim)]
        mlp = []
        for j, (a, d_out) in enumerate(dims):
            w, b = lin(jax.random.fold_in(kb, j), a, d_out)
            mlp.append({"w": w, "b": b,
                        "g": jnp.ones((1, d_out), jnp.float32),
                        "beta": jnp.zeros((1, d_out), jnp.float32)})
        k_in, k_o, k1, k2, kr = jax.random.split(jax.random.fold_in(kb, 100), 5)
        w_in, b_in = lin(k_in, z_dim, 3 * z_dim)
        w_o, b_o = lin(k_o, z_dim, z_dim)
        w1, b1 = lin(k1, z_dim, d_ff)
        w2, b2 = lin(k2, d_ff, z_dim)
        wr, br = lin(kr, patch_dim, z_dim)
        blocks.append({
            "mlp": mlp,
            "attn": {"w_in": w_in, "b_in": b_in, "w_o": w_o, "b_o": b_o,
                     "ln1_g": jnp.ones((1, z_dim), jnp.float32),
                     "ln1_b": jnp.zeros((1, z_dim), jnp.float32)},
            "ffn": {"w1": w1, "b1": b1, "w2": w2, "b2": b2,
                    "ln2_g": jnp.ones((1, z_dim), jnp.float32),
                    "ln2_b": jnp.zeros((1, z_dim), jnp.float32)},
            "res": {"w": wr, "b": br},
        })
    kh = jax.random.fold_in(key, 10_000)
    wh, bh = lin(kh, z_dim, num_classes)
    head = {"g": jnp.ones((1, z_dim), jnp.float32),
            "b": jnp.zeros((1, z_dim), jnp.float32),
            "w": wh, "bias": bh}
    return {"blocks": blocks, "head": head}


# ----------------------------------------------------------------------------
# Pure-JAX reference (PyTorch semantics) for the correctness check.
# ----------------------------------------------------------------------------
def _ln_ref(x, g, b, eps=LN_EPS):
    mu = x.mean(-1, keepdims=True)
    var = ((x - mu) ** 2).mean(-1, keepdims=True)
    return (x - mu) * jax.lax.rsqrt(var + eps) * g + b


def ref_forward(img, params, *, n_heads=2):
    x = img
    for p in params["blocks"]:
        h = x
        for layer in p["mlp"]:
            h = _ln_ref(jnp.tanh(h @ layer["w"] + layer["b"]), layer["g"], layer["beta"])
        B, S, z = h.shape
        hd = z // n_heads
        proj = h @ p["attn"]["w_in"] + p["attn"]["b_in"]
        q, k, v = jnp.split(proj, 3, axis=-1)
        q = q.reshape(B, S, n_heads, hd) / np.sqrt(hd)
        k = k.reshape(B, S, n_heads, hd)
        v = v.reshape(B, S, n_heads, hd)
        s = jnp.einsum("bqhd,bkhd->bhqk", q, k)
        a = jax.nn.softmax(s, axis=-1)
        o = jnp.einsum("bhqk,bkhd->bqhd", a, v).reshape(B, S, z)
        o = o @ p["attn"]["w_o"] + p["attn"]["b_o"]
        y = _ln_ref(h + o, p["attn"]["ln1_g"], p["attn"]["ln1_b"])
        f = jnp.maximum(y @ p["ffn"]["w1"] + p["ffn"]["b1"], 0.0)
        f = f @ p["ffn"]["w2"] + p["ffn"]["b2"]
        y = _ln_ref(y + f, p["ffn"]["ln2_g"], p["ffn"]["ln2_b"])
        x = y + jnp.maximum(img @ p["res"]["w"] + p["res"]["b"], 0.0)
    hp = params["head"]
    logits = _ln_ref(x, hp["g"], hp["b"]) @ hp["w"] + hp["bias"]
    return logits, x


if __name__ == "__main__":
    # Small shapes consistent with the module: img is (B, seq, patch_dim);
    # nhead=2 and dim_feedforward=2048 are fixed by the PyTorch module defaults.
    patch_dim, z_dim, depth, n_heads, d_ff, num_classes = 16, 32, 2, 2, 2048, 8
    B, S = 2, 8

    key = jax.random.PRNGKey(0)
    k_img, k_par = jax.random.split(key)
    img = jax.random.normal(k_img, (B, S, patch_dim), jnp.float32)
    params = init_params(k_par, patch_dim=patch_dim, z_dim=z_dim, depth=depth,
                         d_ff=d_ff, num_classes=num_classes)

    logits, feats = transformer_backbone(img, params, n_heads=n_heads)
    logits, feats = jax.block_until_ready((logits, feats))

    ref_logits, ref_feats = ref_forward(img, params, n_heads=n_heads)
    ref_logits, ref_feats = jax.block_until_ready((ref_logits, ref_feats))

    assert feats.shape == (B, S, z_dim)
    assert logits.shape == (B, S, num_classes)
    assert np.allclose(np.asarray(feats), np.asarray(ref_feats), atol=2e-2, rtol=2e-2)
    assert np.allclose(np.asarray(logits), np.asarray(ref_logits), atol=2e-2, rtol=2e-2)

    print("KERNEL_OK")
</pallas_src>

<mosaic_0001>
module attributes {stable_mosaic.version = 11 : i64} {
  func.func @_depth_block_kernel(%arg0: i32, %arg1: memref<1x8x16xf32, #tpu.memory_space<vmem>>, %arg2: memref<1x8x16xf32, #tpu.memory_space<vmem>>, %arg3: memref<16x64xf32, #tpu.memory_space<vmem>>, %arg4: memref<1x64xf32, #tpu.memory_space<vmem>>, %arg5: memref<1x64xf32, #tpu.memory_space<vmem>>, %arg6: memref<1x64xf32, #tpu.memory_space<vmem>>, %arg7: memref<64x128xf32, #tpu.memory_space<vmem>>, %arg8: memref<1x128xf32, #tpu.memory_space<vmem>>, %arg9: memref<1x128xf32, #tpu.memory_space<vmem>>, %arg10: memref<1x128xf32, #tpu.memory_space<vmem>>, %arg11: memref<128x64xf32, #tpu.memory_space<vmem>>, %arg12: memref<1x64xf32, #tpu.memory_space<vmem>>, %arg13: memref<1x64xf32, #tpu.memory_space<vmem>>, %arg14: memref<1x64xf32, #tpu.memory_space<vmem>>, %arg15: memref<64x64xf32, #tpu.memory_space<vmem>>, %arg16: memref<1x64xf32, #tpu.memory_space<vmem>>, %arg17: memref<1x64xf32, #tpu.memory_space<vmem>>, %arg18: memref<1x64xf32, #tpu.memory_space<vmem>>, %arg19: memref<64x32xf32, #tpu.memory_space<vmem>>, %arg20: memref<1x32xf32, #tpu.memory_space<vmem>>, %arg21: memref<1x32xf32, #tpu.memory_space<vmem>>, %arg22: memref<1x32xf32, #tpu.memory_space<vmem>>, %arg23: memref<32x96xf32, #tpu.memory_space<vmem>>, %arg24: memref<1x96xf32, #tpu.memory_space<vmem>>, %arg25: memref<32x32xf32, #tpu.memory_space<vmem>>, %arg26: memref<1x32xf32, #tpu.memory_space<vmem>>, %arg27: memref<1x32xf32, #tpu.memory_space<vmem>>, %arg28: memref<1x32xf32, #tpu.memory_space<vmem>>, %arg29: memref<32x2048xf32, #tpu.memory_space<vmem>>, %arg30: memref<1x2048xf32, #tpu.memory_space<vmem>>, %arg31: memref<2048x32xf32, #tpu.memory_space<vmem>>, %arg32: memref<1x32xf32, #tpu.memory_space<vmem>>, %arg33: memref<1x32xf32, #tpu.memory_space<vmem>>, %arg34: memref<1x32xf32, #tpu.memory_space<vmem>>, %arg35: memref<16x32xf32, #tpu.memory_space<vmem>>, %arg36: memref<1x32xf32, #tpu.memory_space<vmem>>, %arg37: memref<1x8x32xf32, #tpu.memory_space<vmem>>) attributes {dimension_semantics = [#tpu.dimension_semantics<parallel>], iteration_bounds = array<i64: 2>, scalar_prefetch = 0 : i64, scratch_operands = 0 : i64, tpu.core_type = #tpu.core_type<tc>, window_params = [{transform_indices = @transform_0, window_bounds = array<i64: 1, 8, 16>}, {transform_indices = @transform_1, window_bounds = array<i64: 1, 8, 16>}, {pipeline_mode = #tpu.pipeline_mode<synchronous>, transform_indices = @transform_2, window_bounds = array<i64: 16, 64>}, {pipeline_mode = #tpu.pipeline_mode<synchronous>, transform_indices = @transform_3, window_bounds = array<i64: 1, 64>}, {pipeline_mode = #tpu.pipeline_mode<synchronous>, transform_indices = @transform_4, window_bounds = array<i64: 1, 64>}, {pipeline_mode = #tpu.pipeline_mode<synchronous>, transform_indices = @transform_5, window_bounds = array<i64: 1, 64>}, {pipeline_mode = #tpu.pipeline_mode<synchronous>, transform_indices = @transform_6, window_bounds = array<i64: 64, 128>}, {pipeline_mode = #tpu.pipeline_mode<synchronous>, transform_indices = @transform_7, window_bounds = array<i64: 1, 128>}, {pipeline_mode = #tpu.pipeline_mode<synchronous>, transform_indices = @transform_8, window_bounds = array<i64: 1, 128>}, {pipeline_mode = #tpu.pipeline_mode<synchronous>, transform_indices = @transform_9, window_bounds = array<i64: 1, 128>}, {pipeline_mode = #tpu.pipeline_mode<synchronous>, transform_indices = @transform_10, window_bounds = array<i64: 128, 64>}, {pipeline_mode = #tpu.pipeline_mode<synchronous>, transform_indices = @transform_11, window_bounds = array<i64: 1, 64>}, {pipeline_mode = #tpu.pipeline_mode<synchronous>, transform_indices = @transform_12, window_bounds = array<i64: 1, 64>}, {pipeline_mode = #tpu.pipeline_mode<synchronous>, transform_indices = @transform_13, window_bounds = array<i64: 1, 64>}, {pipeline_mode = #tpu.pipeline_mode<synchronous>, transform_indices = @transform_14, window_bounds = array<i64: 64, 64>}, {pipeline_mode = #tpu.pipeline_mode<synchronous>, transform_indices = @transform_15, window_bounds = array<i64: 1, 64>}, {pipeline_mode = #tpu.pipeline_mode<synchronous>, transform_indices = @transform_16, window_bounds = array<i64: 1, 64>}, {pipeline_mode = #tpu.pipeline_mode<synchronous>, transform_indices = @transform_17, window_bounds = array<i64: 1, 64>}, {pipeline_mode = #tpu.pipeline_mode<synchronous>, transform_indices = @transform_18, window_bounds = array<i64: 64, 32>}, {pipeline_mode = #tpu.pipeline_mode<synchronous>, transform_indices = @transform_19, window_bounds = array<i64: 1, 32>}, {pipeline_mode = #tpu.pipeline_mode<synchronous>, transform_indices = @transform_20, window_bounds = array<i64: 1, 32>}, {pipeline_mode = #tpu.pipeline_mode<synchronous>, transform_indices = @transform_21, window_bounds = array<i64: 1, 32>}, {pipeline_mode = #tpu.pipeline_mode<synchronous>, transform_indices = @transform_22, window_bounds = array<i64: 32, 96>}, {pipeline_mode = #tpu.pipeline_mode<synchronous>, transform_indices = @transform_23, window_bounds = array<i64: 1, 96>}, {pipeline_mode = #tpu.pipeline_mode<synchronous>, transform_indices = @transform_24, window_bounds = array<i64: 32, 32>}, {pipeline_mode = #tpu.pipeline_mode<synchronous>, transform_indices = @transform_25, window_bounds = array<i64: 1, 32>}, {pipeline_mode = #tpu.pipeline_mode<synchronous>, transform_indices = @transform_26, window_bounds = array<i64: 1, 32>}, {pipeline_mode = #tpu.pipeline_mode<synchronous>, transform_indices = @transform_27, window_bounds = array<i64: 1, 32>}, {pipeline_mode = #tpu.pipeline_mode<synchronous>, transform_indices = @transform_28, window_bounds = array<i64: 32, 2048>}, {pipeline_mode = #tpu.pipeline_mode<synchronous>, transform_indices = @transform_29, window_bounds = array<i64: 1, 2048>}, {pipeline_mode = #tpu.pipeline_mode<synchronous>, transform_indices = @transform_30, window_bounds = array<i64: 2048, 32>}, {pipeline_mode = #tpu.pipeline_mode<synchronous>, transform_indices = @transform_31, window_bounds = array<i64: 1, 32>}, {pipeline_mode = #tpu.pipeline_mode<synchronous>, transform_indices = @transform_32, window_bounds = array<i64: 1, 32>}, {pipeline_mode = #tpu.pipeline_mode<synchronous>, transform_indices = @transform_33, window_bounds = array<i64: 1, 32>}, {pipeline_mode = #tpu.pipeline_mode<synchronous>, transform_indices = @transform_34, window_bounds = array<i64: 16, 32>}, {pipeline_mode = #tpu.pipeline_mode<synchronous>, transform_indices = @transform_35, window_bounds = array<i64: 1, 32>}, {transform_indices = @transform_36, window_bounds = array<i64: 1, 8, 32>}]} {
    %c0 = arith.constant 0 : index
    %c0_0 = arith.constant 0 : index
    %c0_1 = arith.constant 0 : index
    %0 = vector.load %arg1[%c0, %c0_0, %c0_1] : memref<1x8x16xf32, #tpu.memory_space<vmem>>, vector<1x8x16xf32>
    %1 = vector.shape_cast %0 : vector<1x8x16xf32> to vector<8x16xf32>
    %c0_2 = arith.constant 0 : index
    %c0_3 = arith.constant 0 : index
    %c0_4 = arith.constant 0 : index
    %2 = vector.load %arg2[%c0_2, %c0_3, %c0_4] : memref<1x8x16xf32, #tpu.memory_space<vmem>>, vector<1x8x16xf32>
    %3 = vector.shape_cast %2 : vector<1x8x16xf32> to vector<8x16xf32>
    %c0_5 = arith.constant 0 : index
    %c0_6 = arith.constant 0 : index
    %4 = vector.load %arg3[%c0_5, %c0_6] : memref<16x64xf32, #tpu.memory_space<vmem>>, vector<16x64xf32>
    %cst = arith.constant dense<0.000000e+00> : vector<8x64xf32>
    %5 = tpu.matmul %1, %4, %cst {dimension_numbers = #tpu.dot_dimension_numbers<[1], [0], [0], [1], [0, 0, 1, 1], [], []>} : vector<8x16xf32>, vector<16x64xf32>, vector<8x64xf32> -> vector<8x64xf32>
    %c0_7 = arith.constant 0 : index
    %c0_8 = arith.constant 0 : index
    %6 = vector.load %arg4[%c0_7, %c0_8] : memref<1x64xf32, #tpu.memory_space<vmem>>, vector<1x64xf32>
    %7 = vector.broadcast %6 : vector<1x64xf32> to vector<8x64xf32>
    %8 = arith.addf %5, %7 : vector<8x64xf32>
    %9 = math.tanh %8 : vector<8x64xf32>
    %c0_9 = arith.constant 0 : index
    %c0_10 = arith.constant 0 : index
    %10 = vector.load %arg5[%c0_9, %c0_10] : memref<1x64xf32, #tpu.memory_space<vmem>>, vector<1x64xf32>
    %c0_11 = arith.constant 0 : index
    %c0_12 = arith.constant 0 : index
    %11 = vector.load %arg6[%c0_11, %c0_12] : memref<1x64xf32, #tpu.memory_space<vmem>>, vector<1x64xf32>
    %cst_13 = arith.constant dense<0.000000e+00> : vector<8xf32>
    %12 = vector.multi_reduction <add>, %9, %cst_13 [1] : vector<8x64xf32> to vector<8xf32>
    %13 = vector.shape_cast %12 : vector<8xf32> to vector<8x1xf32>
    %cst_14 = arith.constant 6.400000e+01 : f32
    %14 = vector.broadcast %cst_14 : f32 to vector<8x1xf32>
    %15 = arith.divf %13, %14 : vector<8x1xf32>
    %16 = vector.broadcast %15 : vector<8x1xf32> to vector<8x64xf32>
    %17 = arith.subf %9, %16 : vector<8x64xf32>
    %18 = arith.mulf %17, %17 : vector<8x64xf32>
    %cst_15 = arith.constant dense<0.000000e+00> : vector<8xf32>
    %19 = vector.multi_reduction <add>, %18, %cst_15 [1] : vector<8x64xf32> to vector<8xf32>
    %20 = vector.shape_cast %19 : vector<8xf32> to vector<8x1xf32>
    %cst_16 = arith.constant 6.400000e+01 : f32
    %21 = vector.broadcast %cst_16 : f32 to vector<8x1xf32>
    %22 = arith.divf %20, %21 : vector<8x1xf32>
    %23 = vector.broadcast %15 : vector<8x1xf32> to vector<8x64xf32>
    %24 = arith.subf %9, %23 : vector<8x64xf32>
    %cst_17 = arith.constant 9.99999974E-6 : f32
    %25 = vector.broadcast %cst_17 : f32 to vector<8x1xf32>
    %26 = arith.addf %22, %25 : vector<8x1xf32>
    %27 = math.rsqrt %26 : vector<8x1xf32>
    %28 = vector.broadcast %27 : vector<8x1xf32> to vector<8x64xf32>
    %29 = arith.mulf %24, %28 : vector<8x64xf32>
    %30 = vector.broadcast %10 : vector<1x64xf32> to vector<8x64xf32>
    %31 = arith.mulf %29, %30 : vector<8x64xf32>
    %32 = vector.broadcast %11 : vector<1x64xf32> to vector<8x64xf32>
    %33 = arith.addf %31, %32 : vector<8x64xf32>
    %c0_18 = arith.constant 0 : index
    %c0_19 = arith.constant 0 : index
    %34 = vector.load %arg7[%c0_18, %c0_19] : memref<64x128xf32, #tpu.memory_space<vmem>>, vector<64x128xf32>
    %cst_20 = arith.constant dense<0.000000e+00> : vector<8x128xf32>
    %35 = tpu.matmul %33, %34, %cst_20 {dimension_numbers = #tpu.dot_dimension_numbers<[1], [0], [0], [1], [0, 0, 1, 1], [], []>} : vector<8x64xf32>, vector<64x128xf32>, vector<8x128xf32> -> vector<8x128xf32>
    %c0_21 = arith.constant 0 : index
    %c0_22 = arith.constant 0 : index
    %36 = vector.load %arg8[%c0_21, %c0_22] : memref<1x128xf32, #tpu.memory_space<vmem>>, vector<1x128xf32>
    %37 = vector.broadcast %36 : vector<1x128xf32> to vector<8x128xf32>
    %38 = arith.addf %35, %37 : vector<8x128xf32>
    %39 = math.tanh %38 : vector<8x128xf32>
    %c0_23 = arith.constant 0 : index
    %c0_24 = arith.constant 0 : index
    %40 = vector.load %arg9[%c0_23, %c0_24] : memref<1x128xf32, #tpu.memory_space<vmem>>, vector<1x128xf32>
    %c0_25 = arith.constant 0 : index
    %c0_26 = arith.constant 0 : index
    %41 = vector.load %arg10[%c0_25, %c0_26] : memref<1x128xf32, #tpu.memory_space<vmem>>, vector<1x128xf32>
    %cst_27 = arith.constant dense<0.000000e+00> : vector<8xf32>
    %42 = vector.multi_reduction <add>, %39, %cst_27 [1] : vector<8x128xf32> to vector<8xf32>
    %43 = vector.shape_cast %42 : vector<8xf32> to vector<8x1xf32>
    %cst_28 = arith.constant 1.280000e+02 : f32
    %44 = vector.broadcast %cst_28 : f32 to vector<8x1xf32>
    %45 = arith.divf %43, %44 : vector<8x1xf32>
    %46 = vector.broadcast %45 : vector<8x1xf32> to vector<8x128xf32>
    %47 = arith.subf %39, %46 : vector<8x128xf32>
    %48 = arith.mulf %47, %47 : vector<8x128xf32>
    %cst_29 = arith.constant dense<0.000000e+00> : vector<8xf32>
    %49 = vector.multi_reduction <add>, %48, %cst_29 [1] : vector<8x128xf32> to vector<8xf32>
    %50 = vector.shape_cast %49 : vector<8xf32> to vector<8x1xf32>
    %cst_30 = arith.constant 1.280000e+02 : f32
    %51 = vector.broadcast %cst_30 : f32 to vector<8x1xf32>
    %52 = arith.divf %50, %51 : vector<8x1xf32>
    %53 = vector.broadcast %45 : vector<8x1xf32> to vector<8x128xf32>
    %54 = arith.subf %39, %53 : vector<8x128xf32>
    %cst_31 = arith.constant 9.99999974E-6 : f32
    %55 = vector.broadcast %cst_31 : f32 to vector<8x1xf32>
    %56 = arith.addf %52, %55 : vector<8x1xf32>
    %57 = math.rsqrt %56 : vector<8x1xf32>
    %58 = vector.broadcast %57 : vector<8x1xf32> to vector<8x128xf32>
    %59 = arith.mulf %54, %58 : vector<8x128xf32>
    %60 = vector.broadcast %40 : vector<1x128xf32> to vector<8x128xf32>
    %61 = arith.mulf %59, %60 : vector<8x128xf32>
    %62 = vector.broadcast %41 : vector<1x128xf32> to vector<8x128xf32>
    %63 = arith.addf %61, %62 : vector<8x128xf32>
    %c0_32 = arith.constant 0 : index
    %c0_33 = arith.constant 0 : index
    %64 = vector.load %arg11[%c0_32, %c0_33] : memref<128x64xf32, #tpu.memory_space<vmem>>, vector<128x64xf32>
    %cst_34 = arith.constant dense<0.000000e+00> : vector<8x64xf32>
    %65 = tpu.matmul %63, %64, %cst_34 {dimension_numbers = #tpu.dot_dimension_numbers<[1], [0], [0], [1], [0, 0, 1, 1], [], []>} : vector<8x128xf32>, vector<128x64xf32>, vector<8x64xf32> -> vector<8x64xf32>
    %c0_35 = arith.constant 0 : index
    %c0_36 = arith.constant 0 : index
    %66 = vector.load %arg12[%c0_35, %c0_36] : memref<1x64xf32, #tpu.memory_space<vmem>>, vector<1x64xf32>
    %67 = vector.broadcast %66 : vector<1x64xf32> to vector<8x64xf32>
    %68 = arith.addf %65, %67 : vector<8x64xf32>
    %69 = math.tanh %68 : vector<8x64xf32>
    %c0_37 = arith.constant 0 : index
    %c0_38 = arith.constant 0 : index
    %70 = vector.load %arg13[%c0_37, %c0_38] : memref<1x64xf32, #tpu.memory_space<vmem>>, vector<1x64xf32>
    %c0_39 = arith.constant 0 : index
    %c0_40 = arith.constant 0 : index
    %71 = vector.load %arg14[%c0_39, %c0_40] : memref<1x64xf32, #tpu.memory_space<vmem>>, vector<1x64xf32>
    %cst_41 = arith.constant dense<0.000000e+00> : vector<8xf32>
    %72 = vector.multi_reduction <add>, %69, %cst_41 [1] : vector<8x64xf32> to vector<8xf32>
    %73 = vector.shape_cast %72 : vector<8xf32> to vector<8x1xf32>
    %cst_42 = arith.constant 6.400000e+01 : f32
    %74 = vector.broadcast %cst_42 : f32 to vector<8x1xf32>
    %75 = arith.divf %73, %74 : vector<8x1xf32>
    %76 = vector.broadcast %75 : vector<8x1xf32> to vector<8x64xf32>
    %77 = arith.subf %69, %76 : vector<8x64xf32>
    %78 = arith.mulf %77, %77 : vector<8x64xf32>
    %cst_43 = arith.constant dense<0.000000e+00> : vector<8xf32>
    %79 = vector.multi_reduction <add>, %78, %cst_43 [1] : vector<8x64xf32> to vector<8xf32>
    %80 = vector.shape_cast %79 : vector<8xf32> to vector<8x1xf32>
    %cst_44 = arith.constant 6.400000e+01 : f32
    %81 = vector.broadcast %cst_44 : f32 to vector<8x1xf32>
    %82 = arith.divf %80, %81 : vector<8x1xf32>
    %83 = vector.broadcast %75 : vector<8x1xf32> to vector<8x64xf32>
    %84 = arith.subf %69, %83 : vector<8x64xf32>
    %cst_45 = arith.constant 9.99999974E-6 : f32
    %85 = vector.broadcast %cst_45 : f32 to vector<8x1xf32>
    %86 = arith.addf %82, %85 : vector<8x1xf32>
    %87 = math.rsqrt %86 : vector<8x1xf32>
    %88 = vector.broadcast %87 : vector<8x1xf32> to vector<8x64xf32>
    %89 = arith.mulf %84, %88 : vector<8x64xf32>
    %90 = vector.broadcast %70 : vector<1x64xf32> to vector<8x64xf32>
    %91 = arith.mulf %89, %90 : vector<8x64xf32>
    %92 = vector.broadcast %71 : vector<1x64xf32> to vector<8x64xf32>
    %93 = arith.addf %91, %92 : vector<8x64xf32>
    %c0_46 = arith.constant 0 : index
    %c0_47 = arith.constant 0 : index
    %94 = vector.load %arg15[%c0_46, %c0_47] : memref<64x64xf32, #tpu.memory_space<vmem>>, vector<64x64xf32>
    %cst_48 = arith.constant dense<0.000000e+00> : vector<8x64xf32>
    %95 = tpu.matmul %93, %94, %cst_48 {dimension_numbers = #tpu.dot_dimension_numbers<[1], [0], [0], [1], [0, 0, 1, 1], [], []>} : vector<8x64xf32>, vector<64x64xf32>, vector<8x64xf32> -> vector<8x64xf32>
    %c0_49 = arith.constant 0 : index
    %c0_50 = arith.constant 0 : index
    %96 = vector.load %arg16[%c0_49, %c0_50] : memref<1x64xf32, #tpu.memory_space<vmem>>, vector<1x64xf32>
    %97 = vector.broadcast %96 : vector<1x64xf32> to vector<8x64xf32>
    %98 = arith.addf %95, %97 : vector<8x64xf32>
    %99 = math.tanh %98 : vector<8x64xf32>
    %c0_51 = arith.constant 0 : index
    %c0_52 = arith.constant 0 : index
    %100 = vector.load %arg17[%c0_51, %c0_52] : memref<1x64xf32, #tpu.memory_space<vmem>>, vector<1x64xf32>
    %c0_53 = arith.constant 0 : index
    %c0_54 = arith.constant 0 : index
    %101 = vector.load %arg18[%c0_53, %c0_54] : memref<1x64xf32, #tpu.memory_space<vmem>>, vector<1x64xf32>
    %cst_55 = arith.constant dense<0.000000e+00> : vector<8xf32>
    %102 = vector.multi_reduction <add>, %99, %cst_55 [1] : vector<8x64xf32> to vector<8xf32>
    %103 = vector.shape_cast %102 : vector<8xf32> to vector<8x1xf32>
    %cst_56 = arith.constant 6.400000e+01 : f32
    %104 = vector.broadcast %cst_56 : f32 to vector<8x1xf32>
    %105 = arith.divf %103, %104 : vector<8x1xf32>
    %106 = vector.broadcast %105 : vector<8x1xf32> to vector<8x64xf32>
    %107 = arith.subf %99, %106 : vector<8x64xf32>
    %108 = arith.mulf %107, %107 : vector<8x64xf32>
    %cst_57 = arith.constant dense<0.000000e+00> : vector<8xf32>
    %109 = vector.multi_reduction <add>, %108, %cst_57 [1] : vector<8x64xf32> to vector<8xf32>
    %110 = vector.shape_cast %109 : vector<8xf32> to vector<8x1xf32>
    %cst_58 = arith.constant 6.400000e+01 : f32
    %111 = vector.broadcast %cst_58 : f32 to vector<8x1xf32>
    %112 = arith.divf %110, %111 : vector<8x1xf32>
    %113 = vector.broadcast %105 : vector<8x1xf32> to vector<8x64xf32>
    %114 = arith.subf %99, %113 : vector<8x64xf32>
    %cst_59 = arith.constant 9.99999974E-6 : f32
    %115 = vector.broadcast %cst_59 : f32 to vector<8x1xf32>
    %116 = arith.addf %112, %115 : vector<8x1xf32>
    %117 = math.rsqrt %116 : vector<8x1xf32>
    %118 = vector.broadcast %117 : vector<8x1xf32> to vector<8x64xf32>
    %119 = arith.mulf %114, %118 : vector<8x64xf32>
    %120 = vector.broadcast %100 : vector<1x64xf32> to vector<8x64xf32>
    %121 = arith.mulf %119, %120 : vector<8x64xf32>
    %122 = vector.broadcast %101 : vector<1x64xf32> to vector<8x64xf32>
    %123 = arith.addf %121, %122 : vector<8x64xf32>
    %c0_60 = arith.constant 0 : index
    %c0_61 = arith.constant 0 : index
    %124 = vector.load %arg19[%c0_60, %c0_61] : memref<64x32xf32, #tpu.memory_space<vmem>>, vector<64x32xf32>
    %cst_62 = arith.constant dense<0.000000e+00> : vector<8x32xf32>
    %125 = tpu.matmul %123, %124, %cst_62 {dimension_numbers = #tpu.dot_dimension_numbers<[1], [0], [0], [1], [0, 0, 1, 1], [], []>} : vector<8x64xf32>, vector<64x32xf32>, vector<8x32xf32> -> vector<8x32xf32>
    %c0_63 = arith.constant 0 : index
    %c0_64 = arith.constant 0 : index
    %126 = vector.load %arg20[%c0_63, %c0_64] : memref<1x32xf32, #tpu.memory_space<vmem>>, vector<1x32xf32>
    %127 = vector.broadcast %126 : vector<1x32xf32> to vector<8x32xf32>
    %128 = arith.addf %125, %127 : vector<8x32xf32>
    %129 = math.tanh %128 : vector<8x32xf32>
    %c0_65 = arith.constant 0 : index
    %c0_66 = arith.constant 0 : index
    %130 = vector.load %arg21[%c0_65, %c0_66] : memref<1x32xf32, #tpu.memory_space<vmem>>, vector<1x32xf32>
    %c0_67 = arith.constant 0 : index
    %c0_68 = arith.constant 0 : index
    %131 = vector.load %arg22[%c0_67, %c0_68] : memref<1x32xf32, #tpu.memory_space<vmem>>, vector<1x32xf32>
    %cst_69 = arith.constant dense<0.000000e+00> : vector<8xf32>
    %132 = vector.multi_reduction <add>, %129, %cst_69 [1] : vector<8x32xf32> to vector<8xf32>
    %133 = vector.shape_cast %132 : vector<8xf32> to vector<8x1xf32>
    %cst_70 = arith.constant 3.200000e+01 : f32
    %134 = vector.broadcast %cst_70 : f32 to vector<8x1xf32>
    %135 = arith.divf %133, %134 : vector<8x1xf32>
    %136 = vector.broadcast %135 : vector<8x1xf32> to vector<8x32xf32>
    %137 = arith.subf %129, %136 : vector<8x32xf32>
    %138 = arith.mulf %137, %137 : vector<8x32xf32>
    %cst_71 = arith.constant dense<0.000000e+00> : vector<8xf32>
    %139 = vector.multi_reduction <add>, %138, %cst_71 [1] : vector<8x32xf32> to vector<8xf32>
    %140 = vector.shape_cast %139 : vector<8xf32> to vector<8x1xf32>
    %cst_72 = arith.constant 3.200000e+01 : f32
    %141 = vector.broadcast %cst_72 : f32 to vector<8x1xf32>
    %142 = arith.divf %140, %141 : vector<8x1xf32>
    %143 = vector.broadcast %135 : vector<8x1xf32> to vector<8x32xf32>
    %144 = arith.subf %129, %143 : vector<8x32xf32>
    %cst_73 = arith.constant 9.99999974E-6 : f32
    %145 = vector.broadcast %cst_73 : f32 to vector<8x1xf32>
    %146 = arith.addf %142, %145 : vector<8x1xf32>
    %147 = math.rsqrt %146 : vector<8x1xf32>
    %148 = vector.broadcast %147 : vector<8x1xf32> to vector<8x32xf32>
    %149 = arith.mulf %144, %148 : vector<8x32xf32>
    %150 = vector.broadcast %130 : vector<1x32xf32> to vector<8x32xf32>
    %151 = arith.mulf %149, %150 : vector<8x32xf32>
    %152 = vector.broadcast %131 : vector<1x32xf32> to vector<8x32xf32>
    %153 = arith.addf %151, %152 : vector<8x32xf32>
    %c0_74 = arith.constant 0 : index
    %c0_75 = arith.constant 0 : index
    %154 = vector.load %arg23[%c0_74, %c0_75] : memref<32x96xf32, #tpu.memory_space<vmem>>, vector<32x96xf32>
    %cst_76 = arith.constant dense<0.000000e+00> : vector<8x96xf32>
    %155 = tpu.matmul %153, %154, %cst_76 {dimension_numbers = #tpu.dot_dimension_numbers<[1], [0], [0], [1], [0, 0, 1, 1], [], []>} : vector<8x32xf32>, vector<32x96xf32>, vector<8x96xf32> -> vector<8x96xf32>
    %c0_77 = arith.constant 0 : index
    %c0_78 = arith.constant 0 : index
    %156 = vector.load %arg24[%c0_77, %c0_78] : memref<1x96xf32, #tpu.memory_space<vmem>>, vector<1x96xf32>
    %157 = vector.broadcast %156 : vector<1x96xf32> to vector<8x96xf32>
    %158 = arith.addf %155, %157 : vector<8x96xf32>
    %159 = vector.extract_strided_slice %158 {offsets = [0, 0], sizes = [8, 16], strides = [1, 1]} : vector<8x96xf32> to vector<8x16xf32>
    %cst_79 = arith.constant 2.500000e-01 : f32
    %160 = vector.broadcast %cst_79 : f32 to vector<8x16xf32>
    %161 = arith.mulf %159, %160 : vector<8x16xf32>
    %162 = vector.extract_strided_slice %158 {offsets = [0, 32], sizes = [8, 16], strides = [1, 1]} : vector<8x96xf32> to vector<8x16xf32>
    %163 = vector.extract_strided_slice %158 {offsets = [0, 64], sizes = [8, 16], strides = [1, 1]} : vector<8x96xf32> to vector<8x16xf32>
    %cst_80 = arith.constant dense<0.000000e+00> : vector<8x8xf32>
    %164 = tpu.matmul %161, %162, %cst_80 {dimension_numbers = #tpu.dot_dimension_numbers<[1], [1], [0], [0], [0, 0, 1, 0], [], []>} : vector<8x16xf32>, vector<8x16xf32>, vector<8x8xf32> -> vector<8x8xf32>
    %cst_81 = arith.constant dense<0xFF800000> : vector<8xf32>
    %165 = vector.multi_reduction <maximumf>, %164, %cst_81 [1] : vector<8x8xf32> to vector<8xf32>
    %166 = vector.shape_cast %165 : vector<8xf32> to vector<8x1xf32>
    %167 = vector.broadcast %166 : vector<8x1xf32> to vector<8x8xf32>
    %168 = arith.subf %164, %167 : vector<8x8xf32>
    %169 = math.exp %168 : vector<8x8xf32>
    %cst_82 = arith.constant dense<0.000000e+00> : vector<8xf32>
    %170 = vector.multi_reduction <add>, %169, %cst_82 [1] : vector<8x8xf32> to vector<8xf32>
    %171 = vector.shape_cast %170 : vector<8xf32> to vector<8x1xf32>
    %172 = tpu.reciprocal %171 {approx = true} : vector<8x1xf32> -> vector<8x1xf32>
    %173 = vector.broadcast %172 : vector<8x1xf32> to vector<8x8xf32>
    %174 = arith.mulf %169, %173 : vector<8x8xf32>
    %cst_83 = arith.constant dense<0.000000e+00> : vector<8x16xf32>
    %175 = tpu.matmul %174, %163, %cst_83 {dimension_numbers = #tpu.dot_dimension_numbers<[1], [0], [0], [1], [0, 0, 1, 1], [], []>} : vector<8x8xf32>, vector<8x16xf32>, vector<8x16xf32> -> vector<8x16xf32>
    %176 = vector.extract_strided_slice %158 {offsets = [0, 16], sizes = [8, 16], strides = [1, 1]} : vector<8x96xf32> to vector<8x16xf32>
    %cst_84 = arith.constant 2.500000e-01 : f32
    %177 = vector.broadcast %cst_84 : f32 to vector<8x16xf32>
    %178 = arith.mulf %176, %177 : vector<8x16xf32>
    %179 = vector.extract_strided_slice %158 {offsets = [0, 48], sizes = [8, 16], strides = [1, 1]} : vector<8x96xf32> to vector<8x16xf32>
    %180 = vector.extract_strided_slice %158 {offsets = [0, 80], sizes = [8, 16], strides = [1, 1]} : vector<8x96xf32> to vector<8x16xf32>
    %cst_85 = arith.constant dense<0.000000e+00> : vector<8x8xf32>
    %181 = tpu.matmul %178, %179, %cst_85 {dimension_numbers = #tpu.dot_dimension_numbers<[1], [1], [0], [0], [0, 0, 1, 0], [], []>} : vector<8x16xf32>, vector<8x16xf32>, vector<8x8xf32> -> vector<8x8xf32>
    %cst_86 = arith.constant dense<0xFF800000> : vector<8xf32>
    %182 = vector.multi_reduction <maximumf>, %181, %cst_86 [1] : vector<8x8xf32> to vector<8xf32>
    %183 = vector.shape_cast %182 : vector<8xf32> to vector<8x1xf32>
    %184 = vector.broadcast %183 : vector<8x1xf32> to vector<8x8xf32>
    %185 = arith.subf %181, %184 : vector<8x8xf32>
    %186 = math.exp %185 : vector<8x8xf32>
    %cst_87 = arith.constant dense<0.000000e+00> : vector<8xf32>
    %187 = vector.multi_reduction <add>, %186, %cst_87 [1] : vector<8x8xf32> to vector<8xf32>
    %188 = vector.shape_cast %187 : vector<8xf32> to vector<8x1xf32>
    %189 = tpu.reciprocal %188 {approx = true} : vector<8x1xf32> -> vector<8x1xf32>
    %190 = vector.broadcast %189 : vector<8x1xf32> to vector<8x8xf32>
    %191 = arith.mulf %186, %190 : vector<8x8xf32>
    %cst_88 = arith.constant dense<0.000000e+00> : vector<8x16xf32>
    %192 = tpu.matmul %191, %180, %cst_88 {dimension_numbers = #tpu.dot_dimension_numbers<[1], [0], [0], [1], [0, 0, 1, 1], [], []>} : vector<8x8xf32>, vector<8x16xf32>, vector<8x16xf32> -> vector<8x16xf32>
    %193 = tpu.concatenate %175, %192 in 1 : vector<8x16xf32>, vector<8x16xf32> -> vector<8x32xf32>
    %c0_89 = arith.constant 0 : index
    %c0_90 = arith.constant 0 : index
    %194 = vector.load %arg25[%c0_89, %c0_90] : memref<32x32xf32, #tpu.memory_space<vmem>>, vector<32x32xf32>
    %cst_91 = arith.constant dense<0.000000e+00> : vector<8x32xf32>
    %195 = tpu.matmul %193, %194, %cst_91 {dimension_numbers = #tpu.dot_dimension_numbers<[1], [0], [0], [1], [0, 0, 1, 1], [], []>} : vector<8x32xf32>, vector<32x32xf32>, vector<8x32xf32> -> vector<8x32xf32>
    %c0_92 = arith.constant 0 : index
    %c0_93 = arith.constant 0 : index
    %196 = vector.load %arg26[%c0_92, %c0_93] : memref<1x32xf32, #tpu.memory_space<vmem>>, vector<1x32xf32>
    %197 = vector.broadcast %196 : vector<1x32xf32> to vector<8x32xf32>
    %198 = arith.addf %195, %197 : vector<8x32xf32>
    %199 = arith.addf %153, %198 : vector<8x32xf32>
    %c0_94 = arith.constant 0 : index
    %c0_95 = arith.constant 0 : index
    %200 = vector.load %arg27[%c0_94, %c0_95] : memref<1x32xf32, #tpu.memory_space<vmem>>, vector<1x32xf32>
    %c0_96 = arith.constant 0 : index
    %c0_97 = arith.constant 0 : index
    %201 = vector.load %arg28[%c0_96, %c0_97] : memref<1x32xf32, #tpu.memory_space<vmem>>, vector<1x32xf32>
    %cst_98 = arith.constant dense<0.000000e+00> : vector<8xf32>
    %202 = vector.multi_reduction <add>, %199, %cst_98 [1] : vector<8x32xf32> to vector<8xf32>
    %203 = vector.shape_cast %202 : vector<8xf32> to vector<8x1xf32>
    %cst_99 = arith.constant 3.200000e+01 : f32
    %204 = vector.broadcast %cst_99 : f32 to vector<8x1xf32>
    %205 = arith.divf %203, %204 : vector<8x1xf32>
    %206 = vector.broadcast %205 : vector<8x1xf32> to vector<8x32xf32>
    %207 = arith.subf %199, %206 : vector<8x32xf32>
    %208 = arith.mulf %207, %207 : vector<8x32xf32>
    %cst_100 = arith.constant dense<0.000000e+00> : vector<8xf32>
    %209 = vector.multi_reduction <add>, %208, %cst_100 [1] : vector<8x32xf32> to vector<8xf32>
    %210 = vector.shape_cast %209 : vector<8xf32> to vector<8x1xf32>
    %cst_101 = arith.constant 3.200000e+01 : f32
    %211 = vector.broadcast %cst_101 : f32 to vector<8x1xf32>
    %212 = arith.divf %210, %211 : vector<8x1xf32>
    %213 = vector.broadcast %205 : vector<8x1xf32> to vector<8x32xf32>
    %214 = arith.subf %199, %213 : vector<8x32xf32>
    %cst_102 = arith.constant 9.99999974E-6 : f32
    %215 = vector.broadcast %cst_102 : f32 to vector<8x1xf32>
    %216 = arith.addf %212, %215 : vector<8x1xf32>
    %217 = math.rsqrt %216 : vector<8x1xf32>
    %218 = vector.broadcast %217 : vector<8x1xf32> to vector<8x32xf32>
    %219 = arith.mulf %214, %218 : vector<8x32xf32>
    %220 = vector.broadcast %200 : vector<1x32xf32> to vector<8x32xf32>
    %221 = arith.mulf %219, %220 : vector<8x32xf32>
    %222 = vector.broadcast %201 : vector<1x32xf32> to vector<8x32xf32>
    %223 = arith.addf %221, %222 : vector<8x32xf32>
    %c0_103 = arith.constant 0 : index
    %c0_104 = arith.constant 0 : index
    %224 = vector.load %arg29[%c0_103, %c0_104] : memref<32x2048xf32, #tpu.memory_space<vmem>>, vector<32x2048xf32>
    %cst_105 = arith.constant dense<0.000000e+00> : vector<8x2048xf32>
    %225 = tpu.matmul %223, %224, %cst_105 {dimension_numbers = #tpu.dot_dimension_numbers<[1], [0], [0], [1], [0, 0, 1, 1], [], []>} : vector<8x32xf32>, vector<32x2048xf32>, vector<8x2048xf32> -> vector<8x2048xf32>
    %c0_106 = arith.constant 0 : index
    %c0_107 = arith.constant 0 : index
    %226 = vector.load %arg30[%c0_106, %c0_107] : memref<1x2048xf32, #tpu.memory_space<vmem>>, vector<1x2048xf32>
    %227 = vector.broadcast %226 : vector<1x2048xf32> to vector<8x2048xf32>
    %228 = arith.addf %225, %227 : vector<8x2048xf32>
    %cst_108 = arith.constant 0.000000e+00 : f32
    %229 = vector.broadcast %cst_108 : f32 to vector<8x2048xf32>
    %230 = arith.maximumf %228, %229 : vector<8x2048xf32>
    %c0_109 = arith.constant 0 : index
    %c0_110 = arith.constant 0 : index
    %231 = vector.load %arg31[%c0_109, %c0_110] : memref<2048x32xf32, #tpu.memory_space<vmem>>, vector<2048x32xf32>
    %cst_111 = arith.constant dense<0.000000e+00> : vector<8x32xf32>
    %232 = tpu.matmul %230, %231, %cst_111 {dimension_numbers = #tpu.dot_dimension_numbers<[1], [0], [0], [1], [0, 0, 1, 1], [], []>} : vector<8x2048xf32>, vector<2048x32xf32>, vector<8x32xf32> -> vector<8x32xf32>
    %c0_112 = arith.constant 0 : index
    %c0_113 = arith.constant 0 : index
    %233 = vector.load %arg32[%c0_112, %c0_113] : memref<1x32xf32, #tpu.memory_space<vmem>>, vector<1x32xf32>
    %234 = vector.broadcast %233 : vector<1x32xf32> to vector<8x32xf32>
    %235 = arith.addf %232, %234 : vector<8x32xf32>
    %236 = arith.addf %223, %235 : vector<8x32xf32>
    %c0_114 = arith.constant 0 : index
    %c0_115 = arith.constant 0 : index
    %237 = vector.load %arg33[%c0_114, %c0_115] : memref<1x32xf32, #tpu.memory_space<vmem>>, vector<1x32xf32>
    %c0_116 = arith.constant 0 : index
    %c0_117 = arith.constant 0 : index
    %238 = vector.load %arg34[%c0_116, %c0_117] : memref<1x32xf32, #tpu.memory_space<vmem>>, vector<1x32xf32>
    %cst_118 = arith.constant dense<0.000000e+00> : vector<8xf32>
    %239 = vector.multi_reduction <add>, %236, %cst_118 [1] : vector<8x32xf32> to vector<8xf32>
    %240 = vector.shape_cast %239 : vector<8xf32> to vector<8x1xf32>
    %cst_119 = arith.constant 3.200000e+01 : f32
    %241 = vector.broadcast %cst_119 : f32 to vector<8x1xf32>
    %242 = arith.divf %240, %241 : vector<8x1xf32>
    %243 = vector.broadcast %242 : vector<8x1xf32> to vector<8x32xf32>
    %244 = arith.subf %236, %243 : vector<8x32xf32>
    %245 = arith.mulf %244, %244 : vector<8x32xf32>
    %cst_120 = arith.constant dense<0.000000e+00> : vector<8xf32>
    %246 = vector.multi_reduction <add>, %245, %cst_120 [1] : vector<8x32xf32> to vector<8xf32>
    %247 = vector.shape_cast %246 : vector<8xf32> to vector<8x1xf32>
    %cst_121 = arith.constant 3.200000e+01 : f32
    %248 = vector.broadcast %cst_121 : f32 to vector<8x1xf32>
    %249 = arith.divf %247, %248 : vector<8x1xf32>
    %250 = vector.broadcast %242 : vector<8x1xf32> to vector<8x32xf32>
    %251 = arith.subf %236, %250 : vector<8x32xf32>
    %cst_122 = arith.constant 9.99999974E-6 : f32
    %252 = vector.broadcast %cst_122 : f32 to vector<8x1xf32>
    %253 = arith.addf %249, %252 : vector<8x1xf32>
    %254 = math.rsqrt %253 : vector<8x1xf32>
    %255 = vector.broadcast %254 : vector<8x1xf32> to vector<8x32xf32>
    %256 = arith.mulf %251, %255 : vector<8x32xf32>
    %257 = vector.broadcast %237 : vector<1x32xf32> to vector<8x32xf32>
    %258 = arith.mulf %256, %257 : vector<8x32xf32>
    %259 = vector.broadcast %238 : vector<1x32xf32> to vector<8x32xf32>
    %260 = arith.addf %258, %259 : vector<8x32xf32>
    %c0_123 = arith.constant 0 : index
    %c0_124 = arith.constant 0 : index
    %261 = vector.load %arg35[%c0_123, %c0_124] : memref<16x32xf32, #tpu.memory_space<vmem>>, vector<16x32xf32>
    %cst_125 = arith.constant dense<0.000000e+00> : vector<8x32xf32>
    %262 = tpu.matmul %3, %261, %cst_125 {dimension_numbers = #tpu.dot_dimension_numbers<[1], [0], [0], [1], [0, 0, 1, 1], [], []>} : vector<8x16xf32>, vector<16x32xf32>, vector<8x32xf32> -> vector<8x32xf32>
    %c0_126 = arith.constant 0 : index
    %c0_127 = arith.constant 0 : index
    %263 = vector.load %arg36[%c0_126, %c0_127] : memref<1x32xf32, #tpu.memory_space<vmem>>, vector<1x32xf32>
    %264 = vector.broadcast %263 : vector<1x32xf32> to vector<8x32xf32>
    %265 = arith.addf %262, %264 : vector<8x32xf32>
    %cst_128 = arith.constant 0.000000e+00 : f32
    %266 = vector.broadcast %cst_128 : f32 to vector<8x32xf32>
    %267 = arith.maximumf %265, %266 : vector<8x32xf32>
    %268 = arith.addf %260, %267 : vector<8x32xf32>
    %c0_129 = arith.constant 0 : index
    %c0_130 = arith.constant 0 : index
    %c0_131 = arith.constant 0 : index
    %269 = vector.load %arg37[%c0_129, %c0_130, %c0_131] : memref<1x8x32xf32, #tpu.memory_space<vmem>>, vector<1x8x32xf32>
    %270 = vector.shape_cast %269 : vector<1x8x32xf32> to vector<8x32xf32>
    %271 = vector.shape_cast %268 : vector<8x32xf32> to vector<1x8x32xf32>
    tpu.vector_store %arg37[%c0_129, %c0_130, %c0_131], %271 {strides = array<i32>} : memref<1x8x32xf32, #tpu.memory_space<vmem>>, vector<1x8x32xf32>,
    return
  }
  func.func @transform_0(%arg0: i32) -> (i32, i32, i32) {
    %c0_i32 = arith.constant 0 : i32
    %c0_i32_0 = arith.constant 0 : i32
    %c0_i32_1 = arith.constant 0 : i32
    return %arg0, %c0_i32, %c0_i32_0 : i32, i32, i32
  }
  func.func @transform_1(%arg0: i32) -> (i32, i32, i32) {
    %c0_i32 = arith.constant 0 : i32
    %c0_i32_0 = arith.constant 0 : i32
    %c0_i32_1 = arith.constant 0 : i32
    return %arg0, %c0_i32, %c0_i32_0 : i32, i32, i32
  }
  func.func @transform_2(%arg0: i32) -> (i32, i32) {
    %c0_i32 = arith.constant 0 : i32
    %c0_i32_0 = arith.constant 0 : i32
    %c0_i32_1 = arith.constant 0 : i32
    return %c0_i32, %c0_i32_0 : i32, i32
  }
  func.func @transform_3(%arg0: i32) -> (i32, i32) {
    %c0_i32 = arith.constant 0 : i32
    %c0_i32_0 = arith.constant 0 : i32
    %c0_i32_1 = arith.constant 0 : i32
    return %c0_i32, %c0_i32_0 : i32, i32
  }
  func.func @transform_4(%arg0: i32) -> (i32, i32) {
    %c0_i32 = arith.constant 0 : i32
    %c0_i32_0 = arith.constant 0 : i32
    %c0_i32_1 = arith.constant 0 : i32
    return %c0_i32, %c0_i32_0 : i32, i32
  }
  func.func @transform_5(%arg0: i32) -> (i32, i32) {
    %c0_i32 = arith.constant 0 : i32
    %c0_i32_0 = arith.constant 0 : i32
    %c0_i32_1 = arith.constant 0 : i32
    return %c0_i32, %c0_i32_0 : i32, i32
  }
  func.func @transform_6(%arg0: i32) -> (i32, i32) {
    %c0_i32 = arith.constant 0 : i32
    %c0_i32_0 = arith.constant 0 : i32
    %c0_i32_1 = arith.constant 0 : i32
    return %c0_i32, %c0_i32_0 : i32, i32
  }
  func.func @transform_7(%arg0: i32) -> (i32, i32) {
    %c0_i32 = arith.constant 0 : i32
    %c0_i32_0 = arith.constant 0 : i32
    %c0_i32_1 = arith.constant 0 : i32
    return %c0_i32, %c0_i32_0 : i32, i32
  }
  func.func @transform_8(%arg0: i32) -> (i32, i32) {
    %c0_i32 = arith.constant 0 : i32
    %c0_i32_0 = arith.constant 0 : i32
    %c0_i32_1 = arith.constant 0 : i32
    return %c0_i32, %c0_i32_0 : i32, i32
  }
  func.func @transform_9(%arg0: i32) -> (i32, i32) {
    %c0_i32 = arith.constant 0 : i32
    %c0_i32_0 = arith.constant 0 : i32
    %c0_i32_1 = arith.constant 0 : i32
    return %c0_i32, %c0_i32_0 : i32, i32
  }
  func.func @transform_10(%arg0: i32) -> (i32, i32) {
    %c0_i32 = arith.constant 0 : i32
    %c0_i32_0 = arith.constant 0 : i32
    %c0_i32_1 = arith.constant 0 : i32
    return %c0_i32, %c0_i32_0 : i32, i32
  }
  func.func @transform_11(%arg0: i32) -> (i32, i32) {
    %c0_i32 = arith.constant 0 : i32
    %c0_i32_0 = arith.constant 0 : i32
    %c0_i32_1 = arith.constant 0 : i32
    return %c0_i32, %c0_i32_0 : i32, i32
  }
  func.func @transform_12(%arg0: i32) -> (i32, i32) {
    %c0_i32 = arith.constant 0 : i32
    %c0_i32_0 = arith.constant 0 : i32
    %c0_i32_1 = arith.constant 0 : i32
    return %c0_i32, %c0_i32_0 : i32, i32
  }
  func.func @transform_13(%arg0: i32) -> (i32, i32) {
    %c0_i32 = arith.constant 0 : i32
    %c0_i32_0 = arith.constant 0 : i32
    %c0_i32_1 = arith.constant 0 : i32
    return %c0_i32, %c0_i32_0 : i32, i32
  }
  func.func @transform_14(%arg0: i32) -> (i32, i32) {
    %c0_i32 = arith.constant 0 : i32
    %c0_i32_0 = arith.constant 0 : i32
    %c0_i32_1 = arith.constant 0 : i32
    return %c0_i32, %c0_i32_0 : i32, i32
  }
  func.func @transform_15(%arg0: i32) -> (i32, i32) {
    %c0_i32 = arith.constant 0 : i32
    %c0_i32_0 = arith.constant 0 : i32
    %c0_i32_1 = arith.constant 0 : i32
    return %c0_i32, %c0_i32_0 : i32, i32
  }
  func.func @transform_16(%arg0: i32) -> (i32, i32) {
    %c0_i32 = arith.constant 0 : i32
    %c0_i32_0 = arith.constant 0 : i32
    %c0_i32_1 = arith.constant 0 : i32
    return %c0_i32, %c0_i32_0 : i32, i32
  }
  func.func @transform_17(%arg0: i32) -> (i32, i32) {
    %c0_i32 = arith.constant 0 : i32
    %c0_i32_0 = arith.constant 0 : i32
    %c0_i32_1 = arith.constant 0 : i32
    return %c0_i32, %c0_i32_0 : i32, i32
  }
  func.func @transform_18(%arg0: i32) -> (i32, i32) {
    %c0_i32 = arith.constant 0 : i32
    %c0_i32_0 = arith.constant 0 : i32
    %c0_i32_1 = arith.constant 0 : i32
    return %c0_i32, %c0_i32_0 : i32, i32
  }
  func.func @transform_19(%arg0: i32) -> (i32, i32) {
    %c0_i32 = arith.constant 0 : i32
    %c0_i32_0 = arith.constant 0 : i32
    %c0_i32_1 = arith.constant 0 : i32
    return %c0_i32, %c0_i32_0 : i32, i32
  }
  func.func @transform_20(%arg0: i32) -> (i32, i32) {
    %c0_i32 = arith.constant 0 : i32
    %c0_i32_0 = arith.constant 0 : i32
    %c0_i32_1 = arith.constant 0 : i32
    return %c0_i32, %c0_i32_0 : i32, i32
  }
  func.func @transform_21(%arg0: i32) -> (i32, i32) {
    %c0_i32 = arith.constant 0 : i32
    %c0_i32_0 = arith.constant 0 : i32
    %c0_i32_1 = arith.constant 0 : i32
    return %c0_i32, %c0_i32_0 : i32, i32
  }
  func.func @transform_22(%arg0: i32) -> (i32, i32) {
    %c0_i32 = arith.constant 0 : i32
    %c0_i32_0 = arith.constant 0 : i32
    %c0_i32_1 = arith.constant 0 : i32
    return %c0_i32, %c0_i32_0 : i32, i32
  }
  func.func @transform_23(%arg0: i32) -> (i32, i32) {
    %c0_i32 = arith.constant 0 : i32
    %c0_i32_0 = arith.constant 0 : i32
    %c0_i32_1 = arith.constant 0 : i32
    return %c0_i32, %c0_i32_0 : i32, i32
  }
  func.func @transform_24(%arg0: i32) -> (i32, i32) {
    %c0_i32 = arith.constant 0 : i32
    %c0_i32_0 = arith.constant 0 : i32
    %c0_i32_1 = arith.constant 0 : i32
    return %c0_i32, %c0_i32_0 : i32, i32
  }
  func.func @transform_25(%arg0: i32) -> (i32, i32) {
    %c0_i32 = arith.constant 0 : i32
    %c0_i32_0 = arith.constant 0 : i32
    %c0_i32_1 = arith.constant 0 : i32
    return %c0_i32, %c0_i32_0 : i32, i32
  }
  func.func @transform_26(%arg0: i32) -> (i32, i32) {
    %c0_i32 = arith.constant 0 : i32
    %c0_i32_0 = arith.constant 0 : i32
    %c0_i32_1 = arith.constant 0 : i32
    return %c0_i32, %c0_i32_0 : i32, i32
  }
  func.func @transform_27(%arg0: i32) -> (i32, i32) {
    %c0_i32 = arith.constant 0 : i32
    %c0_i32_0 = arith.constant 0 : i32
    %c0_i32_1 = arith.constant 0 : i32
    return %c0_i32, %c0_i32_0 : i32, i32
  }
  func.func @transform_28(%arg0: i32) -> (i32, i32) {
    %c0_i32 = arith.constant 0 : i32
    %c0_i32_0 = arith.constant 0 : i32
    %c0_i32_1 = arith.constant 0 : i32
    return %c0_i32, %c0_i32_0 : i32, i32
  }
  func.func @transform_29(%arg0: i32) -> (i32, i32) {
    %c0_i32 = arith.constant 0 : i32
    %c0_i32_0 = arith.constant 0 : i32
    %c0_i32_1 = arith.constant 0 : i32
    return %c0_i32, %c0_i32_0 : i32, i32
  }
  func.func @transform_30(%arg0: i32) -> (i32, i32) {
    %c0_i32 = arith.constant 0 : i32
    %c0_i32_0 = arith.constant 0 : i32
    %c0_i32_1 = arith.constant 0 : i32
    return %c0_i32, %c0_i32_0 : i32, i32
  }
  func.func @transform_31(%arg0: i32) -> (i32, i32) {
    %c0_i32 = arith.constant 0 : i32
    %c0_i32_0 = arith.constant 0 : i32
    %c0_i32_1 = arith.constant 0 : i32
    return %c0_i32, %c0_i32_0 : i32, i32
  }
  func.func @transform_32(%arg0: i32) -> (i32, i32) {
    %c0_i32 = arith.constant 0 : i32
    %c0_i32_0 = arith.constant 0 : i32
    %c0_i32_1 = arith.constant 0 : i32
    return %c0_i32, %c0_i32_0 : i32, i32
  }
  func.func @transform_33(%arg0: i32) -> (i32, i32) {
    %c0_i32 = arith.constant 0 : i32
    %c0_i32_0 = arith.constant 0 : i32
    %c0_i32_1 = arith.constant 0 : i32
    return %c0_i32, %c0_i32_0 : i32, i32
  }
  func.func @transform_34(%arg0: i32) -> (i32, i32) {
    %c0_i32 = arith.constant 0 : i32
    %c0_i32_0 = arith.constant 0 : i32
    %c0_i32_1 = arith.constant 0 : i32
    return %c0_i32, %c0_i32_0 : i32, i32
  }
  func.func @transform_35(%arg0: i32) -> (i32, i32) {
    %c0_i32 = arith.constant 0 : i32
    %c0_i32_0 = arith.constant 0 : i32
    %c0_i32_1 = arith.constant 0 : i32
    return %c0_i32, %c0_i32_0 : i32, i32
  }
  func.func @transform_36(%arg0: i32) -> (i32, i32, i32) {
    %c0_i32 = arith.constant 0 : i32
    %c0_i32_0 = arith.constant 0 : i32
    %c0_i32_1 = arith.constant 0 : i32
    return %arg0, %c0_i32, %c0_i32_0 : i32, i32, i32
  }
}

</mosaic_0001>

<llo_original>
// kernel: tpu_custom_call.1
$region0: #{tpu_custom_call.1}
  #allocation0 [shape = 'u32[]', space=smem, size = 0x4, offset = 0x4, fixed_abs, tag = 'smem constant byte address 0x4 - core index']
  #allocation1 [shape = 'u32[144,128]{1,0:T(1,128)}', space=vmem, size = 0x12000, scoped, tag = 'internal scratch']
  %s0 = inlined_call_operand.smem [shape: u32[37], index: -1, kind: input, shape index: {}]
  %s1 = sld [smem:[%s0]]
  %s2 = scalar_lea.smem %s0, 1
  %s3 = sld [smem:[%s2]]
  %s4 = scalar_lea.smem %s0, 2
  %s5 = sld [smem:[%s4]]
  %s6 = scalar_lea.smem %s0, 3
  %s7 = sld [smem:[%s6]]
  %s8 = scalar_lea.smem %s0, 4
  %s9 = sld [smem:[%s8]]
  %s10 = scalar_lea.smem %s0, 5
  %s11 = sld [smem:[%s10]]
  %s12 = scalar_lea.smem %s0, 6
  %s13 = sld [smem:[%s12]]
  %s14 = scalar_lea.smem %s0, 7
  %s15 = sld [smem:[%s14]]
  %s16 = scalar_lea.smem %s0, 8
  %s17 = sld [smem:[%s16]]
  %s18 = scalar_lea.smem %s0, 9
  %s19 = sld [smem:[%s18]]
  %s20 = scalar_lea.smem %s0, 10
  %s21 = sld [smem:[%s20]]
  %s22 = scalar_lea.smem %s0, 11
  %s23 = sld [smem:[%s22]]
  %s24 = scalar_lea.smem %s0, 12
  %s25 = sld [smem:[%s24]]
  %s26 = scalar_lea.smem %s0, 13
  %s27 = sld [smem:[%s26]]
  %s28 = scalar_lea.smem %s0, 14
  %s29 = sld [smem:[%s28]]
  %s30 = scalar_lea.smem %s0, 15
  %s31 = sld [smem:[%s30]]
  %s32 = scalar_lea.smem %s0, 16
  %s33 = sld [smem:[%s32]]
  %s34 = scalar_lea.smem %s0, 17
  %s35 = sld [smem:[%s34]]
  %s36 = scalar_lea.smem %s0, 18
  %s37 = sld [smem:[%s36]]
  %s38 = scalar_lea.smem %s0, 19
  %s39 = sld [smem:[%s38]]
  %s40 = scalar_lea.smem %s0, 20
  %s41 = sld [smem:[%s40]]
  %s42 = scalar_lea.smem %s0, 21
  %s43 = sld [smem:[%s42]]
  %s44 = scalar_lea.smem %s0, 22
  %s45 = sld [smem:[%s44]]
  %s46 = scalar_lea.smem %s0, 23
  %s47 = sld [smem:[%s46]]
  %s48 = scalar_lea.smem %s0, 24
  %s49 = sld [smem:[%s48]]
  %s50 = scalar_lea.smem %s0, 25
  %s51 = sld [smem:[%s50]]
  %s52 = scalar_lea.smem %s0, 26
  %s53 = sld [smem:[%s52]]
  %s54 = scalar_lea.smem %s0, 27
  %s55 = sld [smem:[%s54]]
  %s56 = scalar_lea.smem %s0, 28
  %s57 = sld [smem:[%s56]]
  %s58 = scalar_lea.smem %s0, 29
  %s59 = sld [smem:[%s58]]
  %s60 = scalar_lea.smem %s0, 30
  %s61 = sld [smem:[%s60]]
  %s62 = scalar_lea.smem %s0, 31
  %s63 = sld [smem:[%s62]]
  %s64 = scalar_lea.smem %s0, 32
  %s65 = sld [smem:[%s64]]
  %s66 = scalar_lea.smem %s0, 33
  %s67 = sld [smem:[%s66]]
  %s68 = scalar_lea.smem %s0, 34
  %s69 = sld [smem:[%s68]]
  %s70 = scalar_lea.smem %s0, 35
  %s71 = sld [smem:[%s70]]
  %s72 = scalar_lea.smem %s0, 36
  %s73 = sld [smem:[%s72]]
  %s74 = sld [smem:[#allocation0]]
  $region177: #{tpu_custom_call.1} parent=0
    _
  %s76 = ssub.s32 1, %s74
  %s77 = scalar_select 0, %s76, %s74
  $region1: #{tpu_custom_call.1} parent=0
    #allocation2 [shape = 'u8[8192]{0}', space=vmem, size = 0x2000, scoped, tag = 'output window, operand 0']
    #allocation3 [shape = 's32[2]{0}', space=sflag, size = 0x8, scoped, tag = 'scoped memory for tpu_custom_call.1']
    %78 = vsyncpa [#allocation3], 0
    %s79 = scalar_lea.sflag [#allocation3], 1
    %80 = vsyncpa %s79, 0
    loop: start=0, step=1, limit=4
    $region2: #{tpu_custom_call.1} parent=1 // loop_pre_header
      _
    $region3: #{tpu_custom_call.1} parent=1 // loop_header
      %s82 = sphi 0, %s86
      %p83 = scmp.ge.s32.totalorder %s82, 4
      %s92 = sphi 0, %s94
      %s95 = sphi 0, %s92
      %s96 = sphi 0, %s95
      %s112 = sphi 0, %s96
      %s118 = sphi 0, %s120
      %s121 = sphi 0, %s118
      %s122 = sphi 0, %s121
      %s138 = sphi 0, %s122
      %s142 = sphi 0, %s142
      %s144 = sphi 0, %s142
      %s145 = sphi 0, %s144
      %s159 = sphi 0, %s145
      %s163 = sphi 0, %s163
      %s165 = sphi 0, %s163
      %s166 = sphi 0, %s165
      %s180 = sphi 0, %s166
      %s184 = sphi 0, %s184
      %s186 = sphi 0, %s184
      %s187 = sphi 0, %s186
      %s201 = sphi 0, %s187
      %s205 = sphi 0, %s205
      %s207 = sphi 0, %s205
      %s208 = sphi 0, %s207
      %s222 = sphi 0, %s208
      %s226 = sphi 0, %s226
      %s228 = sphi 0, %s226
      %s229 = sphi 0, %s228
      %s243 = sphi 0, %s229
      %s247 = sphi 0, %s247
      %s249 = sphi 0, %s247
      %s250 = sphi 0, %s249
      %s264 = sphi 0, %s250
      %s268 = sphi 0, %s268
      %s270 = sphi 0, %s268
      %s271 = sphi 0, %s270
      %s285 = sphi 0, %s271
      %s289 = sphi 0, %s289
      %s291 = sphi 0, %s289
      %s292 = sphi 0, %s291
      %s306 = sphi 0, %s292
      %s310 = sphi 0, %s310
      %s312 = sphi 0, %s310
      %s313 = sphi 0, %s312
      %s327 = sphi 0, %s313
      %s331 = sphi 0, %s331
      %s333 = sphi 0, %s331
      %s334 = sphi 0, %s333
      %s348 = sphi 0, %s334
      %s352 = sphi 0, %s352
      %s354 = sphi 0, %s352
      %s355 = sphi 0, %s354
      %s369 = sphi 0, %s355
      %s373 = sphi 0, %s373
      %s375 = sphi 0, %s373
      %s376 = sphi 0, %s375
      %s390 = sphi 0, %s376
      %s394 = sphi 0, %s394
      %s396 = sphi 0, %s394
      %s397 = sphi 0, %s396
      %s411 = sphi 0, %s397
      %s415 = sphi 0, %s415
      %s417 = sphi 0, %s415
      %s418 = sphi 0, %s417
      %s432 = sphi 0, %s418
      %s436 = sphi 0, %s436
      %s438 = sphi 0, %s436
      %s439 = sphi 0, %s438
      %s453 = sphi 0, %s439
      %s457 = sphi 0, %s457
      %s459 = sphi 0, %s457
      %s460 = sphi 0, %s459
      %s474 = sphi 0, %s460
      %s478 = sphi 0, %s478
      %s480 = sphi 0, %s478
      %s481 = sphi 0, %s480
      %s495 = sphi 0, %s481
      %s499 = sphi 0, %s499
      %s501 = sphi 0, %s499
      %s502 = sphi 0, %s501
      %s516 = sphi 0, %s502
      %s520 = sphi 0, %s520
      %s522 = sphi 0, %s520
      %s523 = sphi 0, %s522
      %s537 = sphi 0, %s523
      %s541 = sphi 0, %s541
      %s543 = sphi 0, %s541
      %s544 = sphi 0, %s543
      %s558 = sphi 0, %s544
      %s562 = sphi 0, %s562
      %s564 = sphi 0, %s562
      %s565 = sphi 0, %s564
      %s579 = sphi 0, %s565
      %s583 = sphi 0, %s583
      %s585 = sphi 0, %s583
      %s586 = sphi 0, %s585
      %s600 = sphi 0, %s586
      %s604 = sphi 0, %s604
      %s606 = sphi 0, %s604
      %s607 = sphi 0, %s606
      %s621 = sphi 0, %s607
      %s625 = sphi 0, %s625
      %s627 = sphi 0, %s625
      %s628 = sphi 0, %s627
      %s642 = sphi 0, %s628
      %s646 = sphi 0, %s646
      %s648 = sphi 0, %s646
      %s649 = sphi 0, %s648
      %s663 = sphi 0, %s649
      %s667 = sphi 0, %s667
      %s669 = sphi 0, %s667
      %s670 = sphi 0, %s669
      %s684 = sphi 0, %s670
      %s688 = sphi 0, %s688
      %s690 = sphi 0, %s688
      %s691 = sphi 0, %s690
      %s705 = sphi 0, %s691
      %s709 = sphi 0, %s709
      %s711 = sphi 0, %s709
      %s712 = sphi 0, %s711
      %s726 = sphi 0, %s712
      %s730 = sphi 0, %s730
      %s732 = sphi 0, %s730
      %s733 = sphi 0, %s732
      %s747 = sphi 0, %s733
      %s751 = sphi 0, %s751
      %s753 = sphi 0, %s751
      %s754 = sphi 0, %s753
      %s768 = sphi 0, %s754
      %s772 = sphi 0, %s772
      %s774 = sphi 0, %s772
      %s775 = sphi 0, %s774
      %s789 = sphi 0, %s775
      %s793 = sphi 0, %s793
      %s795 = sphi 0, %s793
      %s796 = sphi 0, %s795
      %s810 = sphi 0, %s796
      %s814 = sphi 0, %s814
      %s816 = sphi 0, %s814
      %s817 = sphi 0, %s816
      %s831 = sphi 0, %s817
      %s835 = sphi 0, %s835
      %s837 = sphi 0, %s835
      %s838 = sphi 0, %s837
      %s852 = sphi 0, %s838
      %s858 = sphi 0, %s860
      %s861 = sphi 0, %s858
      %s862 = sphi 0, %s861
      %s878 = sphi 0, %s862
    $region4: #{tpu_custom_call.1} parent=1 // loop_header_branch
      %85 = sbr.rel (%p83) target = $region8
    $region5: #{tpu_custom_call.1} parent=1 // loop_body
      %s87 = ssub.s32 %s82, 1
      %s88 = ssub.s32 %s82, 2
      %s89 = sadd.s32 %s82, 1
      %s90 = ssub.s32 %s82, %s89
      %p91 = scmp.eq.s32.totalorder %s90, 0
      %s93 = sadd.s32 %s92, 1
      %s94 = scalar_select %p91, %s92, %s93
      %p97 = pneg %p91
      %p98 = scmp.eq.s32.totalorder %s82, 1
      %p99 = por %p97, %p98
      %p100 = scmp.ne.s32.totalorder %s92, %s95
      %p101 = scmp.eq.s32.totalorder %s82, 0
      %p102 = por %p100, %p101
      %p103 = scmp.ne.s32.totalorder %s92, %s95
      %p104 = scmp.eq.s32.totalorder %s87, 1
      %p105 = por %p103, %p104
      %p106 = scmp.ne.s32.totalorder %s95, %s96
      %p107 = scmp.eq.s32.totalorder %s87, 0
      %p108 = por %p106, %p107
      %p109 = scmp.ne.s32.totalorder %s95, %s96
      %p110 = scmp.eq.s32.totalorder %s88, 1
      %p111 = por %p109, %p110
      %p113 = scmp.ne.s32.totalorder %s96, %s112
      %p114 = scmp.eq.s32.totalorder %s88, 0
      %p115 = por %p113, %p114
      %s116 = ssub.s32 %s82, %s89
      %p117 = scmp.eq.s32.totalorder %s116, 0
      %s119 = sadd.s32 %s118, 1
      %s120 = scalar_select %p117, %s118, %s119
      %p123 = pneg %p117
      %p124 = scmp.eq.s32.totalorder %s82, 1
      %p125 = por %p123, %p124
      %p126 = scmp.ne.s32.totalorder %s118, %s121
      %p127 = scmp.eq.s32.totalorder %s82, 0
      %p128 = por %p126, %p127
      %p129 = scmp.ne.s32.totalorder %s118, %s121
      %p130 = scmp.eq.s32.totalorder %s87, 1
      %p131 = por %p129, %p130
      %p132 = scmp.ne.s32.totalorder %s121, %s122
      %p133 = scmp.eq.s32.totalorder %s87, 0
      %p134 = por %p132, %p133
      %p135 = scmp.ne.s32.totalorder %s121, %s122
      %p136 = scmp.eq.s32.totalorder %s88, 1
      %p137 = por %p135, %p136
      %p139 = scmp.ne.s32.totalorder %s122, %s138
      %p140 = scmp.eq.s32.totalorder %s88, 0
      %p141 = por %p139, %p140
      %s143 = sadd.s32 %s142, 1
      %p146 = scmp.eq.s32.totalorder %s82, 1
      %p147 = scmp.ne.s32.totalorder %s142, %s144
      %p148 = scmp.eq.s32.totalorder %s82, 0
      %p149 = por %p147, %p148
      %p150 = scmp.ne.s32.totalorder %s142, %s144
      %p151 = scmp.eq.s32.totalorder %s87, 1
      %p152 = por %p150, %p151
      %p153 = scmp.ne.s32.totalorder %s144, %s145
      %p154 = scmp.eq.s32.totalorder %s87, 0
      %p155 = por %p153, %p154
      %p156 = scmp.ne.s32.totalorder %s144, %s145
      %p157 = scmp.eq.s32.totalorder %s88, 1
      %p158 = por %p156, %p157
      %p160 = scmp.ne.s32.totalorder %s145, %s159
      %p161 = scmp.eq.s32.totalorder %s88, 0
      %p162 = por %p160, %p161
      %s164 = sadd.s32 %s163, 1
      %p167 = scmp.eq.s32.totalorder %s82, 1
      %p168 = scmp.ne.s32.totalorder %s163, %s165
      %p169 = scmp.eq.s32.totalorder %s82, 0
      %p170 = por %p168, %p169
      %p171 = scmp.ne.s32.totalorder %s163, %s165
      %p172 = scmp.eq.s32.totalorder %s87, 1
      %p173 = por %p171, %p172
      %p174 = scmp.ne.s32.totalorder %s165, %s166
      %p175 = scmp.eq.s32.totalorder %s87, 0
      %p176 = por %p174, %p175
      %p177 = scmp.ne.s32.totalorder %s165, %s166
      %p178 = scmp.eq.s32.totalorder %s88, 1
      %p179 = por %p177, %p178
      %p181 = scmp.ne.s32.totalorder %s166, %s180
      %p182 = scmp.eq.s32.totalorder %s88, 0
      %p183 = por %p181, %p182
      %s185 = sadd.s32 %s184, 1
      %p188 = scmp.eq.s32.totalorder %s82, 1
      %p189 = scmp.ne.s32.totalorder %s184, %s186
      %p190 = scmp.eq.s32.totalorder %s82, 0
      %p191 = por %p189, %p190
      %p192 = scmp.ne.s32.totalorder %s184, %s186
      %p193 = scmp.eq.s32.totalorder %s87, 1
      %p194 = por %p192, %p193
      %p195 = scmp.ne.s32.totalorder %s186, %s187
      %p196 = scmp.eq.s32.totalorder %s87, 0
      %p197 = por %p195, %p196
      %p198 = scmp.ne.s32.totalorder %s186, %s187
      %p199 = scmp.eq.s32.totalorder %s88, 1
      %p200 = por %p198, %p199
      %p202 = scmp.ne.s32.totalorder %s187, %s201
      %p203 = scmp.eq.s32.totalorder %s88, 0
      %p204 = por %p202, %p203
      %s206 = sadd.s32 %s205, 1
      %p209 = scmp.eq.s32.totalorder %s82, 1
      %p210 = scmp.ne.s32.totalorder %s205, %s207
      %p211 = scmp.eq.s32.totalorder %s82, 0
      %p212 = por %p210, %p211
      %p213 = scmp.ne.s32.totalorder %s205, %s207
      %p214 = scmp.eq.s32.totalorder %s87, 1
      %p215 = por %p213, %p214
      %p216 = scmp.ne.s32.totalorder %s207, %s208
      %p217 = scmp.eq.s32.totalorder %s87, 0
      %p218 = por %p216, %p217
      %p219 = scmp.ne.s32.totalorder %s207, %s208
      %p220 = scmp.eq.s32.totalorder %s88, 1
      %p221 = por %p219, %p220
      %p223 = scmp.ne.s32.totalorder %s208, %s222
      %p224 = scmp.eq.s32.totalorder %s88, 0
      %p225 = por %p223, %p224
      %s227 = sadd.s32 %s226, 1
      %p230 = scmp.eq.s32.totalorder %s82, 1
      %p231 = scmp.ne.s32.totalorder %s226, %s228
      %p232 = scmp.eq.s32.totalorder %s82, 0
      %p233 = por %p231, %p232
      %p234 = scmp.ne.s32.totalorder %s226, %s228
      %p235 = scmp.eq.s32.totalorder %s87, 1
      %p236 = por %p234, %p235
      %p237 = scmp.ne.s32.totalorder %s228, %s229
      %p238 = scmp.eq.s32.totalorder %s87, 0
      %p239 = por %p237, %p238
      %p240 = scmp.ne.s32.totalorder %s228, %s229
      %p241 = scmp.eq.s32.totalorder %s88, 1
      %p242 = por %p240, %p241
      %p244 = scmp.ne.s32.totalorder %s229, %s243
      %p245 = scmp.eq.s32.totalorder %s88, 0
      %p246 = por %p244, %p245
      %s248 = sadd.s32 %s247, 1
      %p251 = scmp.eq.s32.totalorder %s82, 1
      %p252 = scmp.ne.s32.totalorder %s247, %s249
      %p253 = scmp.eq.s32.totalorder %s82, 0
      %p254 = por %p252, %p253
      %p255 = scmp.ne.s32.totalorder %s247, %s249
      %p256 = scmp.eq.s32.totalorder %s87, 1
      %p257 = por %p255, %p256
      %p258 = scmp.ne.s32.totalorder %s249, %s250
      %p259 = scmp.eq.s32.totalorder %s87, 0
      %p260 = por %p258, %p259
      %p261 = scmp.ne.s32.totalorder %s249, %s250
      %p262 = scmp.eq.s32.totalorder %s88, 1
      %p263 = por %p261, %p262
      %p265 = scmp.ne.s32.totalorder %s250, %s264
      %p266 = scmp.eq.s32.totalorder %s88, 0
      %p267 = por %p265, %p266
      %s269 = sadd.s32 %s268, 1
      %p272 = scmp.eq.s32.totalorder %s82, 1
      %p273 = scmp.ne.s32.totalorder %s268, %s270
      %p274 = scmp.eq.s32.totalorder %s82, 0
      %p275 = por %p273, %p274
      %p276 = scmp.ne.s32.totalorder %s268, %s270
      %p277 = scmp.eq.s32.totalorder %s87, 1
      %p278 = por %p276, %p277
      %p279 = scmp.ne.s32.totalorder %s270, %s271
      %p280 = scmp.eq.s32.totalorder %s87, 0
      %p281 = por %p279, %p280
      %p282 = scmp.ne.s32.totalorder %s270, %s271
      %p283 = scmp.eq.s32.totalorder %s88, 1
      %p284 = por %p282, %p283
      %p286 = scmp.ne.s32.totalorder %s271, %s285
      %p287 = scmp.eq.s32.totalorder %s88, 0
      %p288 = por %p286, %p287
      %s290 = sadd.s32 %s289, 1
      %p293 = scmp.eq.s32.totalorder %s82, 1
      %p294 = scmp.ne.s32.totalorder %s289, %s291
      %p295 = scmp.eq.s32.totalorder %s82, 0
      %p296 = por %p294, %p295
      %p297 = scmp.ne.s32.totalorder %s289, %s291
      %p298 = scmp.eq.s32.totalorder %s87, 1
      %p299 = por %p297, %p298
      %p300 = scmp.ne.s32.totalorder %s291, %s292
      %p301 = scmp.eq.s32.totalorder %s87, 0
      %p302 = por %p300, %p301
      %p303 = scmp.ne.s32.totalorder %s291, %s292
      %p304 = scmp.eq.s32.totalorder %s88, 1
      %p305 = por %p303, %p304
      %p307 = scmp.ne.s32.totalorder %s292, %s306
      %p308 = scmp.eq.s32.totalorder %s88, 0
      %p309 = por %p307, %p308
      %s311 = sadd.s32 %s310, 1
      %p314 = scmp.eq.s32.totalorder %s82, 1
      %p315 = scmp.ne.s32.totalorder %s310, %s312
      %p316 = scmp.eq.s32.totalorder %s82, 0
      %p317 = por %p315, %p316
      %p318 = scmp.ne.s32.totalorder %s310, %s312
      %p319 = scmp.eq.s32.totalorder %s87, 1
      %p320 = por %p318, %p319
      %p321 = scmp.ne.s32.totalorder %s312, %s313
      %p322 = scmp.eq.s32.totalorder %s87, 0
      %p323 = por %p321, %p322
      %p324 = scmp.ne.s32.totalorder %s312, %s313
      %p325 = scmp.eq.s32.totalorder %s88, 1
      %p326 = por %p324, %p325
      %p328 = scmp.ne.s32.totalorder %s313, %s327
      %p329 = scmp.eq.s32.totalorder %s88, 0
      %p330 = por %p328, %p329
      %s332 = sadd.s32 %s331, 1
      %p335 = scmp.eq.s32.totalorder %s82, 1
      %p336 = scmp.ne.s32.totalorder %s331, %s333
      %p337 = scmp.eq.s32.totalorder %s82, 0
      %p338 = por %p336, %p337
      %p339 = scmp.ne.s32.totalorder %s331, %s333
      %p340 = scmp.eq.s32.totalorder %s87, 1
      %p341 = por %p339, %p340
      %p342 = scmp.ne.s32.totalorder %s333, %s334
      %p343 = scmp.eq.s32.totalorder %s87, 0
      %p344 = por %p342, %p343
      %p345 = scmp.ne.s32.totalorder %s333, %s334
      %p346 = scmp.eq.s32.totalorder %s88, 1
      %p347 = por %p345, %p346
      %p349 = scmp.ne.s32.totalorder %s334, %s348
      %p350 = scmp.eq.s32.totalorder %s88, 0
      %p351 = por %p349, %p350
      %s353 = sadd.s32 %s352, 1
      %p356 = scmp.eq.s32.totalorder %s82, 1
      %p357 = scmp.ne.s32.totalorder %s352, %s354
      %p358 = scmp.eq.s32.totalorder %s82, 0
      %p359 = por %p357, %p358
      %p360 = scmp.ne.s32.totalorder %s352, %s354
      %p361 = scmp.eq.s32.totalorder %s87, 1
      %p362 = por %p360, %p361
      %p363 = scmp.ne.s32.totalorder %s354, %s355
      %p364 = scmp.eq.s32.totalorder %s87, 0
      %p365 = por %p363, %p364
      %p366 = scmp.ne.s32.totalorder %s354, %s355
      %p367 = scmp.eq.s32.totalorder %s88, 1
      %p368 = por %p366, %p367
      %p370 = scmp.ne.s32.totalorder %s355, %s369
      %p371 = scmp.eq.s32.totalorder %s88, 0
      %p372 = por %p370, %p371
      %s374 = sadd.s32 %s373, 1
      %p377 = scmp.eq.s32.totalorder %s82, 1
      %p378 = scmp.ne.s32.totalorder %s373, %s375
      %p379 = scmp.eq.s32.totalorder %s82, 0
      %p380 = por %p378, %p379
      %p381 = scmp.ne.s32.totalorder %s373, %s375
      %p382 = scmp.eq.s32.totalorder %s87, 1
      %p383 = por %p381, %p382
      %p384 = scmp.ne.s32.totalorder %s375, %s376
      %p385 = scmp.eq.s32.totalorder %s87, 0
      %p386 = por %p384, %p385
      %p387 = scmp.ne.s32.totalorder %s375, %s376
      %p388 = scmp.eq.s32.totalorder %s88, 1
      %p389 = por %p387, %p388
      %p391 = scmp.ne.s32.totalorder %s376, %s390
      %p392 = scmp.eq.s32.totalorder %s88, 0
      %p393 = por %p391, %p392
      %s395 = sadd.s32 %s394, 1
      %p398 = scmp.eq.s32.totalorder %s82, 1
      %p399 = scmp.ne.s32.totalorder %s394, %s396
      %p400 = scmp.eq.s32.totalorder %s82, 0
      %p401 = por %p399, %p400
      %p402 = scmp.ne.s32.totalorder %s394, %s396
      %p403 = scmp.eq.s32.totalorder %s87, 1
      %p404 = por %p402, %p403
      %p405 = scmp.ne.s32.totalorder %s396, %s397
      %p406 = scmp.eq.s32.totalorder %s87, 0
      %p407 = por %p405, %p406
      %p408 = scmp.ne.s32.totalorder %s396, %s397
      %p409 = scmp.eq.s32.totalorder %s88, 1
      %p410 = por %p408, %p409
      %p412 = scmp.ne.s32.totalorder %s397, %s411
      %p413 = scmp.eq.s32.totalorder %s88, 0
      %p414 = por %p412, %p413
      %s416 = sadd.s32 %s415, 1
      %p419 = scmp.eq.s32.totalorder %s82, 1
      %p420 = scmp.ne.s32.totalorder %s415, %s417
      %p421 = scmp.eq.s32.totalorder %s82, 0
      %p422 = por %p420, %p421
      %p423 = scmp.ne.s32.totalorder %s415, %s417
      %p424 = scmp.eq.s32.totalorder %s87, 1
      %p425 = por %p423, %p424
      %p426 = scmp.ne.s32.totalorder %s417, %s418
      %p427 = scmp.eq.s32.totalorder %s87, 0
      %p428 = por %p426, %p427
      %p429 = scmp.ne.s32.totalorder %s417, %s418
      %p430 = scmp.eq.s32.totalorder %s88, 1
      %p431 = por %p429, %p430
      %p433 = scmp.ne.s32.totalorder %s418, %s432
      %p434 = scmp.eq.s32.totalorder %s88, 0
      %p435 = por %p433, %p434
      %s437 = sadd.s32 %s436, 1
      %p440 = scmp.eq.s32.totalorder %s82, 1
      %p441 = scmp.ne.s32.totalorder %s436, %s438
      %p442 = scmp.eq.s32.totalorder %s82, 0
      %p443 = por %p441, %p442
      %p444 = scmp.ne.s32.totalorder %s436, %s438
      %p445 = scmp.eq.s32.totalorder %s87, 1
      %p446 = por %p444, %p445
      %p447 = scmp.ne.s32.totalorder %s438, %s439
      %p448 = scmp.eq.s32.totalorder %s87, 0
      %p449 = por %p447, %p448
      %p450 = scmp.ne.s32.totalorder %s438, %s439
      %p451 = scmp.eq.s32.totalorder %s88, 1
      %p452 = por %p450, %p451
      %p454 = scmp.ne.s32.totalorder %s439, %s453
      %p455 = scmp.eq.s32.totalorder %s88, 0
      %p456 = por %p454, %p455
      %s458 = sadd.s32 %s457, 1
      %p461 = scmp.eq.s32.totalorder %s82, 1
      %p462 = scmp.ne.s32.totalorder %s457, %s459
      %p463 = scmp.eq.s32.totalorder %s82, 0
      %p464 = por %p462, %p463
      %p465 = scmp.ne.s32.totalorder %s457, %s459
      %p466 = scmp.eq.s32.totalorder %s87, 1
      %p467 = por %p465, %p466
      %p468 = scmp.ne.s32.totalorder %s459, %s460
      %p469 = scmp.eq.s32.totalorder %s87, 0
      %p470 = por %p468, %p469
      %p471 = scmp.ne.s32.totalorder %s459, %s460
      %p472 = scmp.eq.s32.totalorder %s88, 1
      %p473 = por %p471, %p472
      %p475 = scmp.ne.s32.totalorder %s460, %s474
      %p476 = scmp.eq.s32.totalorder %s88, 0
      %p477 = por %p475, %p476
      %s479 = sadd.s32 %s478, 1
      %p482 = scmp.eq.s32.totalorder %s82, 1
      %p483 = scmp.ne.s32.totalorder %s478, %s480
      %p484 = scmp.eq.s32.totalorder %s82, 0
      %p485 = por %p483, %p484
      %p486 = scmp.ne.s32.totalorder %s478, %s480
      %p487 = scmp.eq.s32.totalorder %s87, 1
      %p488 = por %p486, %p487
      %p489 = scmp.ne.s32.totalorder %s480, %s481
      %p490 = scmp.eq.s32.totalorder %s87, 0
      %p491 = por %p489, %p490
      %p492 = scmp.ne.s32.totalorder %s480, %s481
      %p493 = scmp.eq.s32.totalorder %s88, 1
      %p494 = por %p492, %p493
      %p496 = scmp.ne.s32.totalorder %s481, %s495
      %p497 = scmp.eq.s32.totalorder %s88, 0
      %p498 = por %p496, %p497
      %s500 = sadd.s32 %s499, 1
      %p503 = scmp.eq.s32.totalorder %s82, 1
      %p504 = scmp.ne.s32.totalorder %s499, %s501
      %p505 = scmp.eq.s32.totalorder %s82, 0
      %p506 = por %p504, %p505
      %p507 = scmp.ne.s32.totalorder %s499, %s501
      %p508 = scmp.eq.s32.totalorder %s87, 1
      %p509 = por %p507, %p508
      %p510 = scmp.ne.s32.totalorder %s501, %s502
      %p511 = scmp.eq.s32.totalorder %s87, 0
      %p512 = por %p510, %p511
      %p513 = scmp.ne.s32.totalorder %s501, %s502
      %p514 = scmp.eq.s32.totalorder %s88, 1
      %p515 = por %p513, %p514
      %p517 = scmp.ne.s32.totalorder %s502, %s516
      %p518 = scmp.eq.s32.totalorder %s88, 0
      %p519 = por %p517, %p518
      %s521 = sadd.s32 %s520, 1
      %p524 = scmp.eq.s32.totalorder %s82, 1
      %p525 = scmp.ne.s32.totalorder %s520, %s522
      %p526 = scmp.eq.s32.totalorder %s82, 0
      %p527 = por %p525, %p526
      %p528 = scmp.ne.s32.totalorder %s520, %s522
      %p529 = scmp.eq.s32.totalorder %s87, 1
      %p530 = por %p528, %p529
      %p531 = scmp.ne.s32.totalorder %s522, %s523
      %p532 = scmp.eq.s32.totalorder %s87, 0
      %p533 = por %p531, %p532
      %p534 = scmp.ne.s32.totalorder %s522, %s523
      %p535 = scmp.eq.s32.totalorder %s88, 1
      %p536 = por %p534, %p535
      %p538 = scmp.ne.s32.totalorder %s523, %s537
      %p539 = scmp.eq.s32.totalorder %s88, 0
      %p540 = por %p538, %p539
      %s542 = sadd.s32 %s541, 1
      %p545 = scmp.eq.s32.totalorder %s82, 1
      %p546 = scmp.ne.s32.totalorder %s541, %s543
      %p547 = scmp.eq.s32.totalorder %s82, 0
      %p548 = por %p546, %p547
      %p549 = scmp.ne.s32.totalorder %s541, %s543
      %p550 = scmp.eq.s32.totalorder %s87, 1
      %p551 = por %p549, %p550
      %p552 = scmp.ne.s32.totalorder %s543, %s544
      %p553 = scmp.eq.s32.totalorder %s87, 0
      %p554 = por %p552, %p553
      %p555 = scmp.ne.s32.totalorder %s543, %s544
      %p556 = scmp.eq.s32.totalorder %s88, 1
      %p557 = por %p555, %p556
      %p559 = scmp.ne.s32.totalorder %s544, %s558
      %p560 = scmp.eq.s32.totalorder %s88, 0
      %p561 = por %p559, %p560
      %s563 = sadd.s32 %s562, 1
      %p566 = scmp.eq.s32.totalorder %s82, 1
      %p567 = scmp.ne.s32.totalorder %s562, %s564
      %p568 = scmp.eq.s32.totalorder %s82, 0
      %p569 = por %p567, %p568
      %p570 = scmp.ne.s32.totalorder %s562, %s564
      %p571 = scmp.eq.s32.totalorder %s87, 1
      %p572 = por %p570, %p571
      %p573 = scmp.ne.s32.totalorder %s564, %s565
      %p574 = scmp.eq.s32.totalorder %s87, 0
      %p575 = por %p573, %p574
      %p576 = scmp.ne.s32.totalorder %s564, %s565
      %p577 = scmp.eq.s32.totalorder %s88, 1
      %p578 = por %p576, %p577
      %p580 = scmp.ne.s32.totalorder %s565, %s579
      %p581 = scmp.eq.s32.totalorder %s88, 0
      %p582 = por %p580, %p581
      %s584 = sadd.s32 %s583, 1
      %p587 = scmp.eq.s32.totalorder %s82, 1
      %p588 = scmp.ne.s32.totalorder %s583, %s585
      %p589 = scmp.eq.s32.totalorder %s82, 0
      %p590 = por %p588, %p589
      %p591 = scmp.ne.s32.totalorder %s583, %s585
      %p592 = scmp.eq.s32.totalorder %s87, 1
      %p593 = por %p591, %p592
      %p594 = scmp.ne.s32.totalorder %s585, %s586
      %p595 = scmp.eq.s32.totalorder %s87, 0
      %p596 = por %p594, %p595
      %p597 = scmp.ne.s32.totalorder %s585, %s586
      %p598 = scmp.eq.s32.totalorder %s88, 1
      %p599 = por %p597, %p598
      %p601 = scmp.ne.s32.totalorder %s586, %s600
      %p602 = scmp.eq.s32.totalorder %s88, 0
      %p603 = por %p601, %p602
      %s605 = sadd.s32 %s604, 1
      %p608 = scmp.eq.s32.totalorder %s82, 1
      %p609 = scmp.ne.s32.totalorder %s604, %s606
      %p610 = scmp.eq.s32.totalorder %s82, 0
      %p611 = por %p609, %p610
      %p612 = scmp.ne.s32.totalorder %s604, %s606
      %p613 = scmp.eq.s32.totalorder %s87, 1
      %p614 = por %p612, %p613
      %p615 = scmp.ne.s32.totalorder %s606, %s607
      %p616 = scmp.eq.s32.totalorder %s87, 0
      %p617 = por %p615, %p616
      %p618 = scmp.ne.s32.totalorder %s606, %s607
      %p619 = scmp.eq.s32.totalorder %s88, 1
      %p620 = por %p618, %p619
      %p622 = scmp.ne.s32.totalorder %s607, %s621
      %p623 = scmp.eq.s32.totalorder %s88, 0
      %p624 = por %p622, %p623
      %s626 = sadd.s32 %s625, 1
      %p629 = scmp.eq.s32.totalorder %s82, 1
      %p630 = scmp.ne.s32.totalorder %s625, %s627
      %p631 = scmp.eq.s32.totalorder %s82, 0
      %p632 = por %p630, %p631
      %p633 = scmp.ne.s32.totalorder %s625, %s627
      %p634 = scmp.eq.s32.totalorder %s87, 1
      %p635 = por %p633, %p634
      %p636 = scmp.ne.s32.totalorder %s627, %s628
      %p637 = scmp.eq.s32.totalorder %s87, 0
      %p638 = por %p636, %p637
      %p639 = scmp.ne.s32.totalorder %s627, %s628
      %p640 = scmp.eq.s32.totalorder %s88, 1
      %p641 = por %p639, %p640
      %p643 = scmp.ne.s32.totalorder %s628, %s642
      %p644 = scmp.eq.s32.totalorder %s88, 0
      %p645 = por %p643, %p644
      %s647 = sadd.s32 %s646, 1
      %p650 = scmp.eq.s32.totalorder %s82, 1
      %p651 = scmp.ne.s32.totalorder %s646, %s648
      %p652 = scmp.eq.s32.totalorder %s82, 0
      %p653 = por %p651, %p652
      %p654 = scmp.ne.s32.totalorder %s646, %s648
      %p655 = scmp.eq.s32.totalorder %s87, 1
      %p656 = por %p654, %p655
      %p657 = scmp.ne.s32.totalorder %s648, %s649
      %p658 = scmp.eq.s32.totalorder %s87, 0
      %p659 = por %p657, %p658
      %p660 = scmp.ne.s32.totalorder %s648, %s649
      %p661 = scmp.eq.s32.totalorder %s88, 1
      %p662 = por %p660, %p661
      %p664 = scmp.ne.s32.totalorder %s649, %s663
      %p665 = scmp.eq.s32.totalorder %s88, 0
      %p666 = por %p664, %p665
      %s668 = sadd.s32 %s667, 1
      %p671 = scmp.eq.s32.totalorder %s82, 1
      %p672 = scmp.ne.s32.totalorder %s667, %s669
      %p673 = scmp.eq.s32.totalorder %s82, 0
      %p674 = por %p672, %p673
      %p675 = scmp.ne.s32.totalorder %s667, %s669
      %p676 = scmp.eq.s32.totalorder %s87, 1
      %p677 = por %p675, %p676
      %p678 = scmp.ne.s32.totalorder %s669, %s670
      %p679 = scmp.eq.s32.totalorder %s87, 0
      %p680 = por %p678, %p679
      %p681 = scmp.ne.s32.totalorder %s669, %s670
      %p682 = scmp.eq.s32.totalorder %s88, 1
      %p683 = por %p681, %p682
      %p685 = scmp.ne.s32.totalorder %s670, %s684
      %p686 = scmp.eq.s32.totalorder %s88, 0
      %p687 = por %p685, %p686
      %s689 = sadd.s32 %s688, 1
      %p692 = scmp.eq.s32.totalorder %s82, 1
      %p693 = scmp.ne.s32.totalorder %s688, %s690
      %p694 = scmp.eq.s32.totalorder %s82, 0
      %p695 = por %p693, %p694
      %p696 = scmp.ne.s32.totalorder %s688, %s690
      %p697 = scmp.eq.s32.totalorder %s87, 1
      %p698 = por %p696, %p697
      %p699 = scmp.ne.s32.totalorder %s690, %s691
      %p700 = scmp.eq.s32.totalorder %s87, 0
      %p701 = por %p699, %p700
      %p702 = scmp.ne.s32.totalorder %s690, %s691
      %p703 = scmp.eq.s32.totalorder %s88, 1
      %p704 = por %p702, %p703
      %p706 = scmp.ne.s32.totalorder %s691, %s705
      %p707 = scmp.eq.s32.totalorder %s88, 0
      %p708 = por %p706, %p707
      %s710 = sadd.s32 %s709, 1
      %p713 = scmp.eq.s32.totalorder %s82, 1
      %p714 = scmp.ne.s32.totalorder %s709, %s711
      %p715 = scmp.eq.s32.totalorder %s82, 0
      %p716 = por %p714, %p715
      %p717 = scmp.ne.s32.totalorder %s709, %s711
      %p718 = scmp.eq.s32.totalorder %s87, 1
      %p719 = por %p717, %p718
      %p720 = scmp.ne.s32.totalorder %s711, %s712
      %p721 = scmp.eq.s32.totalorder %s87, 0
      %p722 = por %p720, %p721
      %p723 = scmp.ne.s32.totalorder %s711, %s712
      %p724 = scmp.eq.s32.totalorder %s88, 1
      %p725 = por %p723, %p724
      %p727 = scmp.ne.s32.totalorder %s712, %s726
      %p728 = scmp.eq.s32.totalorder %s88, 0
      %p729 = por %p727, %p728
      %s731 = sadd.s32 %s730, 1
      %p734 = scmp.eq.s32.totalorder %s82, 1
      %p735 = scmp.ne.s32.totalorder %s730, %s732
      %p736 = scmp.eq.s32.totalorder %s82, 0
      %p737 = por %p735, %p736
      %p738 = scmp.ne.s32.totalorder %s730, %s732
      %p739 = scmp.eq.s32.totalorder %s87, 1
      %p740 = por %p738, %p739
      %p741 = scmp.ne.s32.totalorder %s732, %s733
      %p742 = scmp.eq.s32.totalorder %s87, 0
      %p743 = por %p741, %p742
      %p744 = scmp.ne.s32.totalorder %s732, %s733
      %p745 = scmp.eq.s32.totalorder %s88, 1
      %p746 = por %p744, %p745
      %p748 = scmp.ne.s32.totalorder %s733, %s747
      %p749 = scmp.eq.s32.totalorder %s88, 0
      %p750 = por %p748, %p749
      %s752 = sadd.s32 %s751, 1
      %p755 = scmp.eq.s32.totalorder %s82, 1
      %p756 = scmp.ne.s32.totalorder %s751, %s753
      %p757 = scmp.eq.s32.totalorder %s82, 0
      %p758 = por %p756, %p757
      %p759 = scmp.ne.s32.totalorder %s751, %s753
      %p760 = scmp.eq.s32.totalorder %s87, 1
      %p761 = por %p759, %p760
      %p762 = scmp.ne.s32.totalorder %s753, %s754
      %p763 = scmp.eq.s32.totalorder %s87, 0
      %p764 = por %p762, %p763
      %p765 = scmp.ne.s32.totalorder %s753, %s754
      %p766 = scmp.eq.s32.totalorder %s88, 1
      %p767 = por %p765, %p766
      %p769 = scmp.ne.s32.totalorder %s754, %s768
      %p770 = scmp.eq.s32.totalorder %s88, 0
      %p771 = por %p769, %p770
      %s773 = sadd.s32 %s772, 1
      %p776 = scmp.eq.s32.totalorder %s82, 1
      %p777 = scmp.ne.s32.totalorder %s772, %s774
      %p778 = scmp.eq.s32.totalorder %s82, 0
      %p779 = por %p777, %p778
      %p780 = scmp.ne.s32.totalorder %s772, %s774
      %p781 = scmp.eq.s32.totalorder %s87, 1
      %p782 = por %p780, %p781
      %p783 = scmp.ne.s32.totalorder %s774, %s775
      %p784 = scmp.eq.s32.totalorder %s87, 0
      %p785 = por %p783, %p784
      %p786 = scmp.ne.s32.totalorder %s774, %s775
      %p787 = scmp.eq.s32.totalorder %s88, 1
      %p788 = por %p786, %p787
      %p790 = scmp.ne.s32.totalorder %s775, %s789
      %p791 = scmp.eq.s32.totalorder %s88, 0
      %p792 = por %p790, %p791
      %s794 = sadd.s32 %s793, 1
      %p797 = scmp.eq.s32.totalorder %s82, 1
      %p798 = scmp.ne.s32.totalorder %s793, %s795
      %p799 = scmp.eq.s32.totalorder %s82, 0
      %p800 = por %p798, %p799
      %p801 = scmp.ne.s32.totalorder %s793, %s795
      %p802 = scmp.eq.s32.totalorder %s87, 1
      %p803 = por %p801, %p802
      %p804 = scmp.ne.s32.totalorder %s795, %s796
      %p805 = scmp.eq.s32.totalorder %s87, 0
      %p806 = por %p804, %p805
      %p807 = scmp.ne.s32.totalorder %s795, %s796
      %p808 = scmp.eq.s32.totalorder %s88, 1
      %p809 = por %p807, %p808
      %p811 = scmp.ne.s32.totalorder %s796, %s810
      %p812 = scmp.eq.s32.totalorder %s88, 0
      %p813 = por %p811, %p812
      %s815 = sadd.s32 %s814, 1
      %p818 = scmp.eq.s32.totalorder %s82, 1
      %p819 = scmp.ne.s32.totalorder %s814, %s816
      %p820 = scmp.eq.s32.totalorder %s82, 0
      %p821 = por %p819, %p820
      %p822 = scmp.ne.s32.totalorder %s814, %s816
      %p823 = scmp.eq.s32.totalorder %s87, 1
      %p824 = por %p822, %p823
      %p825 = scmp.ne.s32.totalorder %s816, %s817
      %p826 = scmp.eq.s32.totalorder %s87, 0
      %p827 = por %p825, %p826
      %p828 = scmp.ne.s32.totalorder %s816, %s817
      %p829 = scmp.eq.s32.totalorder %s88, 1
      %p830 = por %p828, %p829
      %p832 = scmp.ne.s32.totalorder %s817, %s831
      %p833 = scmp.eq.s32.totalorder %s88, 0
      %p834 = por %p832, %p833
      %s836 = sadd.s32 %s835, 1
      %p839 = scmp.eq.s32.totalorder %s82, 1
      %p840 = scmp.ne.s32.totalorder %s835, %s837
      %p841 = scmp.eq.s32.totalorder %s82, 0
      %p842 = por %p840, %p841
      %p843 = scmp.ne.s32.totalorder %s835, %s837
      %p844 = scmp.eq.s32.totalorder %s87, 1
      %p845 = por %p843, %p844
      %p846 = scmp.ne.s32.totalorder %s837, %s838
      %p847 = scmp.eq.s32.totalorder %s87, 0
      %p848 = por %p846, %p847
      %p849 = scmp.ne.s32.totalorder %s837, %s838
      %p850 = scmp.eq.s32.totalorder %s88, 1
      %p851 = por %p849, %p850
      %p853 = scmp.ne.s32.totalorder %s838, %s852
      %p854 = scmp.eq.s32.totalorder %s88, 0
      %p855 = por %p853, %p854
      %s856 = ssub.s32 %s82, %s89
      %p857 = scmp.eq.s32.totalorder %s856, 0
      %s859 = sadd.s32 %s858, 1
      %s860 = scalar_select %p857, %s858, %s859
      %p863 = pneg %p857
      %p864 = scmp.eq.s32.totalorder %s82, 1
      %p865 = por %p863, %p864
      %p866 = scmp.ne.s32.totalorder %s858, %s861
      %p867 = scmp.eq.s32.totalorder %s82, 0
      %p868 = por %p866, %p867
      %p869 = scmp.ne.s32.totalorder %s858, %s861
      %p870 = scmp.eq.s32.totalorder %s87, 1
      %p871 = por %p869, %p870
      %p872 = scmp.ne.s32.totalorder %s861, %s862
      %p873 = scmp.eq.s32.totalorder %s87, 0
      %p874 = por %p872, %p873
      %p875 = scmp.ne.s32.totalorder %s861, %s862
      %p876 = scmp.eq.s32.totalorder %s88, 1
      %p877 = por %p875, %p876
      %p879 = scmp.ne.s32.totalorder %s862, %s878
      %p880 = scmp.eq.s32.totalorder %s88, 0
      %p881 = por %p879, %p880
      %p882 = scmp.le.s32.totalorder 1, %s82
      %p883 = scmp.lt.s32.totalorder %s82, 3
      %p884 = pnand %p882, %p883
      %p885 = pneg %p884
      // Predicated region
      $region9: #{tpu_custom_call.1} parent=5 // pred_check
        _
      $region10: #{tpu_custom_call.1} parent=5 // pred_check_branch
        %887 = sbr.rel (%p884) target = $region12
      $region11: #{tpu_custom_call.1} parent=5 // pred_region
        %s888 = ssub.s32 %s82, 1
        // Predicated region
        $region13: #{tpu_custom_call.1} parent=11 // pred_check
          %p889 = pneg %p155
        $region14: #{tpu_custom_call.1} parent=11 // pred_check_branch
          %891 = sbr.rel (%p889) target = $region16
        $region15: #{tpu_custom_call.1} parent=11 // pred_region
          _
        $region16: #{tpu_custom_call.1} parent=11 // pred_fallthru
          _
        // Predicated region
        $region17: #{tpu_custom_call.1} parent=11 // pred_check
          %p892 = pneg %p176
        $region18: #{tpu_custom_call.1} parent=11 // pred_check_branch
          %894 = sbr.rel (%p892) target = $region20
        $region19: #{tpu_custom_call.1} parent=11 // pred_region
          _
        $region20: #{tpu_custom_call.1} parent=11 // pred_fallthru
          _
        // Predicated region
        $region21: #{tpu_custom_call.1} parent=11 // pred_check
          %p895 = pneg %p197
        $region22: #{tpu_custom_call.1} parent=11 // pred_check_branch
          %897 = sbr.rel (%p895) target = $region24
        $region23: #{tpu_custom_call.1} parent=11 // pred_region
          _
        $region24: #{tpu_custom_call.1} parent=11 // pred_fallthru
          _
        // Predicated region
        $region25: #{tpu_custom_call.1} parent=11 // pred_check
          %p898 = pneg %p218
        $region26: #{tpu_custom_call.1} parent=11 // pred_check_branch
          %900 = sbr.rel (%p898) target = $region28
        $region27: #{tpu_custom_call.1} parent=11 // pred_region
          _
        $region28: #{tpu_custom_call.1} parent=11 // pred_fallthru
          _
        // Predicated region
        $region29: #{tpu_custom_call.1} parent=11 // pred_check
          %p901 = pneg %p239
        $region30: #{tpu_custom_call.1} parent=11 // pred_check_branch
          %903 = sbr.rel (%p901) target = $region32
        $region31: #{tpu_custom_call.1} parent=11 // pred_region
          _
        $region32: #{tpu_custom_call.1} parent=11 // pred_fallthru
          _
        // Predicated region
        $region33: #{tpu_custom_call.1} parent=11 // pred_check
          %p904 = pneg %p260
        $region34: #{tpu_custom_call.1} parent=11 // pred_check_branch
          %906 = sbr.rel (%p904) target = $region36
        $region35: #{tpu_custom_call.1} parent=11 // pred_region
          _
        $region36: #{tpu_custom_call.1} parent=11 // pred_fallthru
          _
        // Predicated region
        $region37: #{tpu_custom_call.1} parent=11 // pred_check
          %p907 = pneg %p281
        $region38: #{tpu_custom_call.1} parent=11 // pred_check_branch
          %909 = sbr.rel (%p907) target = $region40
        $region39: #{tpu_custom_call.1} parent=11 // pred_region
          _
        $region40: #{tpu_custom_call.1} parent=11 // pred_fallthru
          _
        // Predicated region
        $region41: #{tpu_custom_call.1} parent=11 // pred_check
          %p910 = pneg %p302
        $region42: #{tpu_custom_call.1} parent=11 // pred_check_branch
          %912 = sbr.rel (%p910) target = $region44
        $region43: #{tpu_custom_call.1} parent=11 // pred_region
          _
        $region44: #{tpu_custom_call.1} parent=11 // pred_fallthru
          _
        // Predicated region
        $region45: #{tpu_custom_call.1} parent=11 // pred_check
          %p913 = pneg %p323
        $region46: #{tpu_custom_call.1} parent=11 // pred_check_branch
          %915 = sbr.rel (%p913) target = $region48
        $region47: #{tpu_custom_call.1} parent=11 // pred_region
          _
        $region48: #{tpu_custom_call.1} parent=11 // pred_fallthru
          _
        // Predicated region
        $region49: #{tpu_custom_call.1} parent=11 // pred_check
          %p916 = pneg %p344
        $region50: #{tpu_custom_call.1} parent=11 // pred_check_branch
          %918 = sbr.rel (%p916) target = $region52
        $region51: #{tpu_custom_call.1} parent=11 // pred_region
          _
        $region52: #{tpu_custom_call.1} parent=11 // pred_fallthru
          _
        // Predicated region
        $region53: #{tpu_custom_call.1} parent=11 // pred_check
          %p919 = pneg %p365
        $region54: #{tpu_custom_call.1} parent=11 // pred_check_branch
          %921 = sbr.rel (%p919) target = $region56
        $region55: #{tpu_custom_call.1} parent=11 // pred_region
          _
        $region56: #{tpu_custom_call.1} parent=11 // pred_fallthru
          _
        // Predicated region
        $region57: #{tpu_custom_call.1} parent=11 // pred_check
          %p922 = pneg %p386
        $region58: #{tpu_custom_call.1} parent=11 // pred_check_branch
          %924 = sbr.rel (%p922) target = $region60
        $region59: #{tpu_custom_call.1} parent=11 // pred_region
          _
        $region60: #{tpu_custom_call.1} parent=11 // pred_fallthru
          _
        // Predicated region
        $region61: #{tpu_custom_call.1} parent=11 // pred_check
          %p925 = pneg %p407
        $region62: #{tpu_custom_call.1} parent=11 // pred_check_branch
          %927 = sbr.rel (%p925) target = $region64
        $region63: #{tpu_custom_call.1} parent=11 // pred_region
          _
        $region64: #{tpu_custom_call.1} parent=11 // pred_fallthru
          _
        // Predicated region
        $region65: #{tpu_custom_call.1} parent=11 // pred_check
          %p928 = pneg %p428
        $region66: #{tpu_custom_call.1} parent=11 // pred_check_branch
          %930 = sbr.rel (%p928) target = $region68
        $region67: #{tpu_custom_call.1} parent=11 // pred_region
          _
        $region68: #{tpu_custom_call.1} parent=11 // pred_fallthru
          _
        // Predicated region
        $region69: #{tpu_custom_call.1} parent=11 // pred_check
          %p931 = pneg %p449
        $region70: #{tpu_custom_call.1} parent=11 // pred_check_branch
          %933 = sbr.rel (%p931) target = $region72
        $region71: #{tpu_custom_call.1} parent=11 // pred_region
          _
        $region72: #{tpu_custom_call.1} parent=11 // pred_fallthru
          _
        // Predicated region
        $region73: #{tpu_custom_call.1} parent=11 // pred_check
          %p934 = pneg %p470
        $region74: #{tpu_custom_call.1} parent=11 // pred_check_branch
          %936 = sbr.rel (%p934) target = $region76
        $region75: #{tpu_custom_call.1} parent=11 // pred_region
          _
        $region76: #{tpu_custom_call.1} parent=11 // pred_fallthru
          _
        // Predicated region
        $region77: #{tpu_custom_call.1} parent=11 // pred_check
          %p937 = pneg %p491
        $region78: #{tpu_custom_call.1} parent=11 // pred_check_branch
          %939 = sbr.rel (%p937) target = $region80
        $region79: #{tpu_custom_call.1} parent=11 // pred_region
          _
        $region80: #{tpu_custom_call.1} parent=11 // pred_fallthru
          _
        // Predicated region
        $region81: #{tpu_custom_call.1} parent=11 // pred_check
          %p940 = pneg %p512
        $region82: #{tpu_custom_call.1} parent=11 // pred_check_branch
          %942 = sbr.rel (%p940) target = $region84
        $region83: #{tpu_custom_call.1} parent=11 // pred_region
          _
        $region84: #{tpu_custom_call.1} parent=11 // pred_fallthru
          _
        // Predicated region
        $region85: #{tpu_custom_call.1} parent=11 // pred_check
          %p943 = pneg %p533
        $region86: #{tpu_custom_call.1} parent=11 // pred_check_branch
          %945 = sbr.rel (%p943) target = $region88
        $region87: #{tpu_custom_call.1} parent=11 // pred_region
          _
        $region88: #{tpu_custom_call.1} parent=11 // pred_fallthru
          _
        // Predicated region
        $region89: #{tpu_custom_call.1} parent=11 // pred_check
          %p946 = pneg %p554
        $region90: #{tpu_custom_call.1} parent=11 // pred_check_branch
          %948 = sbr.rel (%p946) target = $region92
        $region91: #{tpu_custom_call.1} parent=11 // pred_region
          _
        $region92: #{tpu_custom_call.1} parent=11 // pred_fallthru
          _
        // Predicated region
        $region93: #{tpu_custom_call.1} parent=11 // pred_check
          %p949 = pneg %p575
        $region94: #{tpu_custom_call.1} parent=11 // pred_check_branch
          %951 = sbr.rel (%p949) target = $region96
        $region95: #{tpu_custom_call.1} parent=11 // pred_region
          _
        $region96: #{tpu_custom_call.1} parent=11 // pred_fallthru
          _
        // Predicated region
        $region97: #{tpu_custom_call.1} parent=11 // pred_check
          %p952 = pneg %p596
        $region98: #{tpu_custom_call.1} parent=11 // pred_check_branch
          %954 = sbr.rel (%p952) target = $region100
        $region99: #{tpu_custom_call.1} parent=11 // pred_region
          _
        $region100: #{tpu_custom_call.1} parent=11 // pred_fallthru
          _
        // Predicated region
        $region101: #{tpu_custom_call.1} parent=11 // pred_check
          %p955 = pneg %p617
        $region102: #{tpu_custom_call.1} parent=11 // pred_check_branch
          %957 = sbr.rel (%p955) target = $region104
        $region103: #{tpu_custom_call.1} parent=11 // pred_region
          _
        $region104: #{tpu_custom_call.1} parent=11 // pred_fallthru
          _
        // Predicated region
        $region105: #{tpu_custom_call.1} parent=11 // pred_check
          %p958 = pneg %p638
        $region106: #{tpu_custom_call.1} parent=11 // pred_check_branch
          %960 = sbr.rel (%p958) target = $region108
        $region107: #{tpu_custom_call.1} parent=11 // pred_region
          _
        $region108: #{tpu_custom_call.1} parent=11 // pred_fallthru
          _
        // Predicated region
        $region109: #{tpu_custom_call.1} parent=11 // pred_check
          %p961 = pneg %p659
        $region110: #{tpu_custom_call.1} parent=11 // pred_check_branch
          %963 = sbr.rel (%p961) target = $region112
        $region111: #{tpu_custom_call.1} parent=11 // pred_region
          _
        $region112: #{tpu_custom_call.1} parent=11 // pred_fallthru
          _
        // Predicated region
        $region113: #{tpu_custom_call.1} parent=11 // pred_check
          %p964 = pneg %p680
        $region114: #{tpu_custom_call.1} parent=11 // pred_check_branch
          %966 = sbr.rel (%p964) target = $region116
        $region115: #{tpu_custom_call.1} parent=11 // pred_region
          _
        $region116: #{tpu_custom_call.1} parent=11 // pred_fallthru
          _
        // Predicated region
        $region117: #{tpu_custom_call.1} parent=11 // pred_check
          %p967 = pneg %p701
        $region118: #{tpu_custom_call.1} parent=11 // pred_check_branch
          %969 = sbr.rel (%p967) target = $region120
        $region119: #{tpu_custom_call.1} parent=11 // pred_region
          _
        $region120: #{tpu_custom_call.1} parent=11 // pred_fallthru
          _
        // Predicated region
        $region121: #{tpu_custom_call.1} parent=11 // pred_check
          %p970 = pneg %p722
        $region122: #{tpu_custom_call.1} parent=11 // pred_check_branch
          %972 = sbr.rel (%p970) target = $region124
        $region123: #{tpu_custom_call.1} parent=11 // pred_region
          _
        $region124: #{tpu_custom_call.1} parent=11 // pred_fallthru
          _
        // Predicated region
        $region125: #{tpu_custom_call.1} parent=11 // pred_check
          %p973 = pneg %p743
        $region126: #{tpu_custom_call.1} parent=11 // pred_check_branch
          %975 = sbr.rel (%p973) target = $region128
        $region127: #{tpu_custom_call.1} parent=11 // pred_region
          _
        $region128: #{tpu_custom_call.1} parent=11 // pred_fallthru
          _
        // Predicated region
        $region129: #{tpu_custom_call.1} parent=11 // pred_check
          %p976 = pneg %p764
        $region130: #{tpu_custom_call.1} parent=11 // pred_check_branch
          %978 = sbr.rel (%p976) target = $region132
        $region131: #{tpu_custom_call.1} parent=11 // pred_region
          _
        $region132: #{tpu_custom_call.1} parent=11 // pred_fallthru
          _
        // Predicated region
        $region133: #{tpu_custom_call.1} parent=11 // pred_check
          %p979 = pneg %p785
        $region134: #{tpu_custom_call.1} parent=11 // pred_check_branch
          %981 = sbr.rel (%p979) target = $region136
        $region135: #{tpu_custom_call.1} parent=11 // pred_region
          _
        $region136: #{tpu_custom_call.1} parent=11 // pred_fallthru
          _
        // Predicated region
        $region137: #{tpu_custom_call.1} parent=11 // pred_check
          %p982 = pneg %p806
        $region138: #{tpu_custom_call.1} parent=11 // pred_check_branch
          %984 = sbr.rel (%p982) target = $region140
        $region139: #{tpu_custom_call.1} parent=11 // pred_region
          _
        $region140: #{tpu_custom_call.1} parent=11 // pred_fallthru
          _
        // Predicated region
        $region141: #{tpu_custom_call.1} parent=11 // pred_check
          %p985 = pneg %p827
        $region142: #{tpu_custom_call.1} parent=11 // pred_check_branch
          %987 = sbr.rel (%p985) target = $region144
        $region143: #{tpu_custom_call.1} parent=11 // pred_region
          _
        $region144: #{tpu_custom_call.1} parent=11 // pred_fallthru
          _
        // Predicated region
        $region145: #{tpu_custom_call.1} parent=11 // pred_check
          %p988 = pneg %p848
        $region146: #{tpu_custom_call.1} parent=11 // pred_check_branch
          %990 = sbr.rel (%p988) target = $region148
        $region147: #{tpu_custom_call.1} parent=11 // pred_region
          _
        $region148: #{tpu_custom_call.1} parent=11 // pred_fallthru
          _
      $region12: #{tpu_custom_call.1} parent=5 // pred_fallthru
        _
      %p991 = scmp.lt.s32.totalorder %s82, 2
      // Predicated region
      $region149: #{tpu_custom_call.1} parent=5 // pred_check
        %p992 = pneg %p991
      $region150: #{tpu_custom_call.1} parent=5 // pred_check_branch
        %994 = sbr.rel (%p992) target = $region152
      $region151: #{tpu_custom_call.1} parent=5 // pred_region
        // Predicated region
        $region153: #{tpu_custom_call.1} parent=151 // pred_check
          %p995 = pneg %p102
        $region154: #{tpu_custom_call.1} parent=151 // pred_check_branch
          %997 = sbr.rel (%p995) target = $region156
        $region155: #{tpu_custom_call.1} parent=151 // pred_region
          %p998 = scmp.lt.s32.totalorder %s82, 1
          %s999 = scalar_select %p998, %s82, 1
          %s1000 = smul.addr %s999, 8
          %s1001 = scalar_lea.vmem %s1, %s1000
        $region156: #{tpu_custom_call.1} parent=151 // pred_fallthru
          _
        // Predicated region
        $region157: #{tpu_custom_call.1} parent=151 // pred_check
          %p1002 = pneg %p128
        $region158: #{tpu_custom_call.1} parent=151 // pred_check_branch
          %1004 = sbr.rel (%p1002) target = $region160
        $region159: #{tpu_custom_call.1} parent=151 // pred_region
          %p1005 = scmp.lt.s32.totalorder %s82, 1
          %s1006 = scalar_select %p1005, %s82, 1
          %s1007 = smul.addr %s1006, 8
          %s1008 = scalar_lea.vmem %s3, %s1007
        $region160: #{tpu_custom_call.1} parent=151 // pred_fallthru
          _
      $region152: #{tpu_custom_call.1} parent=5 // pred_fallthru
        _
      %p1009 = scmp.le.s32.totalorder 1, %s82
      %p1010 = scmp.lt.s32.totalorder %s82, 3
      %p1011 = pnand %p1009, %p1010
      %p1012 = pneg %p1011
      // Predicated region
      $region161: #{tpu_custom_call.1} parent=5 // pred_check
        _
      $region162: #{tpu_custom_call.1} parent=5 // pred_check_branch
        %1014 = sbr.rel (%p1011) target = $region164
      $region163: #{tpu_custom_call.1} parent=5 // pred_region
        %s1015 = ssub.s32 %s82, 1
        %p1016 = scmp.lt.s32.totalorder %s87, 1
        %s1017 = scalar_select %p1016, %s87, 1
        %s1018 = smul.addr %s1017, 8
        %s1019 = scalar_lea.vmem %s1, %s1018
        %p1020 = pneg %p108
        %p1021 = pneg %p105
        %p1022 = scmp.lt.s32.totalorder %s87, 1
        %s1023 = scalar_select %p1022, %s87, 1
        %s1024 = smul.addr %s1023, 8
        %s1025 = scalar_lea.vmem %s3, %s1024
        %p1026 = pneg %p134
        %p1027 = pneg %p131
        %p1028 = pneg %p155
        %p1029 = pneg %p152
        %p1030 = pneg %p176
        %p1031 = pneg %p173
        %p1032 = pneg %p197
        %p1033 = pneg %p194
        %p1034 = pneg %p218
        %p1035 = pneg %p215
        %p1036 = pneg %p239
        %p1037 = pneg %p236
        %p1038 = pneg %p260
        %p1039 = pneg %p257
        %p1040 = pneg %p281
        %p1041 = pneg %p278
        %p1042 = pneg %p302
        %p1043 = pneg %p299
        %p1044 = pneg %p323
        %p1045 = pneg %p320
        %p1046 = pneg %p344
        %p1047 = pneg %p341
        %p1048 = pneg %p365
        %p1049 = pneg %p362
        %p1050 = pneg %p386
        %p1051 = pneg %p383
        %p1052 = pneg %p407
        %p1053 = pneg %p404
        %p1054 = pneg %p428
        %p1055 = pneg %p425
        %p1056 = pneg %p449
        %p1057 = pneg %p446
        %p1058 = pneg %p470
        %p1059 = pneg %p467
        %p1060 = pneg %p491
        %p1061 = pneg %p488
        %p1062 = pneg %p512
        %p1063 = pneg %p509
        %p1064 = pneg %p533
        %p1065 = pneg %p530
        %p1066 = pneg %p554
        %p1067 = pneg %p551
        %p1068 = pneg %p575
        %p1069 = pneg %p572
        %p1070 = pneg %p596
        %p1071 = pneg %p593
        %p1072 = pneg %p617
        %p1073 = pneg %p614
        %p1074 = pneg %p638
        %p1075 = pneg %p635
        %p1076 = pneg %p659
        %p1077 = pneg %p656
        %p1078 = pneg %p680
        %p1079 = pneg %p677
        %p1080 = pneg %p701
        %p1081 = pneg %p698
        %p1082 = pneg %p722
        %p1083 = pneg %p719
        %p1084 = pneg %p743
        %p1085 = pneg %p740
        %p1086 = pneg %p764
        %p1087 = pneg %p761
        %p1088 = pneg %p785
        %p1089 = pneg %p782
        %p1090 = pneg %p806
        %p1091 = pneg %p803
        %p1092 = pneg %p827
        %p1093 = pneg %p824
        %p1094 = pneg %p848
        %p1095 = pneg %p845
        %p1096 = pneg %p874
        %p1097 = pneg %p871
        %s1098 = sand.u32 %s861, 1
        %s1099 = scalar_lea.sflag [#allocation3], %s1098
        %s1100 = sand.u32 %s861, 1
        %s1101 = smul.addr %s1100, 8
        %s1102 = scalar_lea.vmem [#allocation2], %s1101
        %p1103 = scmp.lt.s32.totalorder %s87, 1
        %s1104 = scalar_select %p1103, %s87, 1
        %s1105 = smul.addr %s1104, 8
        %s1106 = scalar_lea.vmem %s1, %s1105
        %p1107 = scmp.lt.s32.totalorder %s87, 1
        %s1108 = scalar_select %p1107, %s87, 1
        %s1109 = smul.addr %s1108, 8
        %s1110 = scalar_lea.vmem %s3, %s1109
        %v1111 = vld [vmem:[%s1106] sm:$0xff]
        %v1112 = vld [vmem:[%s1110] sm:$0xff]
        %v1113 = vld [vmem:[%s5] sm:$0xff]
        %v1114 = vld [vmem:[%s5 + $0x8] sm:$0xff]
        %v1115 = vld [vmem:[%s7] sm:$0x1]
        %v1117 = vlaneseq
        %v1118 = vshrl.u32 %v1117, 7
        %v1119 = vsub.s32 0, %v1118
        %v1120 = vrot.slane %v1115, %v1119
        %vm1122 = vcmask 130048
        %v1124 = vsel %vm1122, %v1111, 0
        %1126 = vmatprep.subr.mxu0 0.0
        %1127 = vmatpush1.msra.mxu0 %v1113
        %1128 = vmatprep.subr.mxu0 0.0
        %1129 = vmatpush1.msra.mxu0 %v1114
        %1130 = vmatprep.subr.mxu0 0.0
        %1131 = vmatpush1.msra.mxu0 0.0
        %1132 = vmatprep.subr.mxu0 0.0
        %1133 = vmatpush1.msra.mxu0 0.0
        %1134 = vmatprep.subr.mxu0 0.0
        %1135 = vmatpush1.msra.mxu0 0.0
        %1136 = vmatprep.subr.mxu0 0.0
        %1137 = vmatpush1.msra.mxu0 0.0
        %1138 = vmatprep.subr.mxu0 0.0
        %1139 = vmatpush1.msra.mxu0 0.0
        %1140 = vmatprep.subr.mxu0 0.0
        %1141 = vmatpush1.msra.mxu0 0.0
        %1142 = vmatprep.subr.mxu0 0.0
        %1143 = vmatpush1.msra.mxu0 0.0
        %1144 = vmatprep.subr.mxu0 0.0
        %1145 = vmatpush1.msra.mxu0 0.0
        %1146 = vmatprep.subr.mxu0 0.0
        %1147 = vmatpush1.msra.mxu0 0.0
        %1148 = vmatprep.subr.mxu0 0.0
        %1149 = vmatpush1.msra.mxu0 0.0
        %1150 = vmatprep.subr.mxu0 0.0
        %1151 = vmatpush1.msra.mxu0 0.0
        %1152 = vmatprep.subr.mxu0 0.0
        %1153 = vmatpush1.msra.mxu0 0.0
        %1154 = vmatprep.subr.mxu0 0.0
        %1155 = vmatpush1.msra.mxu0 0.0
        %1156 = vmatprep.subr.mxu0 0.0
        %1157 = vmatpush1.msra.mxu0 0.0
        %1158 = vmatprep.subr.mxu0 0.0
        %1159 = vmatpush1.msra.mxu0 0.0
        %1160 = vmatprep.subr.mxu0 0.0
        %1161 = vmatpush1.msra.mxu0 0.0
        %1162 = vmatprep.subr.mxu0 0.0
        %1163 = vmatpush1.msra.mxu0 0.0
        %1164 = vmatprep.subr.mxu0 0.0
        %1165 = vmatpush1.msra.mxu0 0.0
        %1166 = vmatprep.subr.mxu0 0.0
        %1167 = vmatpush1.msra.mxu0 0.0
        %1168 = vmatprep.subr.mxu0 0.0
        %1169 = vmatpush1.msra.mxu0 0.0
        %1170 = vmatprep.subr.mxu0 0.0
        %1171 = vmatpush1.msra.mxu0 0.0
        %1172 = vmatprep.subr.mxu0 0.0
        %1173 = vmatpush1.msra.mxu0 0.0
        %1174 = vmatprep.subr.mxu0 0.0
        %1175 = vmatpush1.msra.mxu0 0.0
        %1176 = vmatprep.subr.mxu0 0.0
        %1177 = vmatpush1.msra.mxu0 0.0
        %1178 = vmatprep.subr.mxu0 0.0
        %1179 = vmatpush1.msra.mxu0 0.0
        %1180 = vmatprep.subr.mxu0 0.0
        %1181 = vmatpush1.msra.mxu0 0.0
        %1182 = vmatprep.subr.mxu0 0.0
        %1183 = vmatpush1.msra.mxu0 0.0
        %1184 = vmatprep.subr.mxu0 0.0
        %1185 = vmatpush1.msra.mxu0 0.0
        %1186 = vmatprep.subr.mxu0 0.0
        %1187 = vmatpush1.msra.mxu0 0.0
        %1188 = vmatprep.subr.mxu0 0.0
        %1189 = vmatpush1.msra.mxu0 0.0
        %1190 = vmatprep.mubr.f32.mxu0 0.0
        %1191 = vmatmul.mubr.f32.gmra.mrb[0].mxu0 %v1124
        %v1192 = vpop.f32.mrb[0].mxu0
        %v1193 = vadd.f32 %v1120, %v1192
        %v1194 = vpop.f32.mrb[0].mxu0
        %1195 = vdwg.mxu0
        %v1196 = vtanh.pop %v1193
        %v1197 = vld [vmem:[%s9] sm:$0x1]
        %v1198 = vld [vmem:[%s11] sm:$0x1]
        %vm1199 = vcmask 523264
        %v1200 = vsel %vm1199, %v1196, 0.0
        %1201 = vadd.xlane.f32.xlu0 %v1200
        %v1202 = vpop.xlane.xlu0 %1201
        %v1203 = vrcp.pop 64.0
        %v1204 = vmul.f32 %v1202, %v1203
        %v1205 = vsub.f32 %v1196, %v1204
        %v1206 = vmul.f32 %v1205, %v1205
        %v1207 = vsel %vm1199, %v1206, 0.0
        %1208 = vadd.xlane.f32.xlu0 %v1207
        %v1209 = vpop.xlane.xlu0 %1208
        %v1210 = vmul.f32 %v1209, %v1203
        %v1211 = vadd.f32 %v1210, 1e-05
        %v1212 = vrsqrt.pop %v1211
        %v1213 = vmul.f32 %v1205, %v1212
        %v1215 = vlaneseq
        %v1216 = vshrl.u32 %v1215, 7
        %v1217 = vsub.s32 0, %v1216
        %v1218 = vrot.slane %v1197, %v1217
        %v1220 = vmul.f32 %v1213, %v1218
        %v1222 = vlaneseq
        %v1223 = vshrl.u32 %v1222, 7
        %v1224 = vsub.s32 0, %v1223
        %v1225 = vrot.slane %v1198, %v1224
        %v1227 = vadd.f32 %v1220, %v1225
        %v1228 = vld [vmem:[%s13] sm:$0xff]
        %v1229 = vld [vmem:[%s13 + $0x8] sm:$0xff]
        %v1230 = vld [vmem:[%s13 + $0x10] sm:$0xff]
        %v1231 = vld [vmem:[%s13 + $0x18] sm:$0xff]
        %v1232 = vld [vmem:[%s13 + $0x20] sm:$0xff]
        %v1233 = vld [vmem:[%s13 + $0x28] sm:$0xff]
        %v1234 = vld [vmem:[%s13 + $0x30] sm:$0xff]
        %v1235 = vld [vmem:[%s13 + $0x38] sm:$0xff]
        %v1236 = vld [vmem:[%s15] sm:$0x1]
        %v1238 = vlaneseq
        %v1239 = vshrl.u32 %v1238, 7
        %v1240 = vsub.s32 0, %v1239
        %v1241 = vrot.slane %v1236, %v1240
        %v1244 = vsel %vm1199, %v1227, 0
        %1246 = vmatprep.subr.mxu0 0.0
        %1247 = vmatpush1.msra.mxu0 %v1228
        %1248 = vmatprep.subr.mxu0 0.0
        %1249 = vmatpush1.msra.mxu0 %v1229
        %1250 = vmatprep.subr.mxu0 0.0
        %1251 = vmatpush1.msra.mxu0 %v1230
        %1252 = vmatprep.subr.mxu0 0.0
        %1253 = vmatpush1.msra.mxu0 %v1231
        %1254 = vmatprep.subr.mxu0 0.0
        %1255 = vmatpush1.msra.mxu0 %v1232
        %1256 = vmatprep.subr.mxu0 0.0
        %1257 = vmatpush1.msra.mxu0 %v1233
        %1258 = vmatprep.subr.mxu0 0.0
        %1259 = vmatpush1.msra.mxu0 %v1234
        %1260 = vmatprep.subr.mxu0 0.0
        %1261 = vmatpush1.msra.mxu0 %v1235
        %1262 = vmatprep.subr.mxu0 0.0
        %1263 = vmatpush1.msra.mxu0 0.0
        %1264 = vmatprep.subr.mxu0 0.0
        %1265 = vmatpush1.msra.mxu0 0.0
        %1266 = vmatprep.subr.mxu0 0.0
        %1267 = vmatpush1.msra.mxu0 0.0
        %1268 = vmatprep.subr.mxu0 0.0
        %1269 = vmatpush1.msra.mxu0 0.0
        %1270 = vmatprep.subr.mxu0 0.0
        %1271 = vmatpush1.msra.mxu0 0.0
        %1272 = vmatprep.subr.mxu0 0.0
        %1273 = vmatpush1.msra.mxu0 0.0
        %1274 = vmatprep.subr.mxu0 0.0
        %1275 = vmatpush1.msra.mxu0 0.0
        %1276 = vmatprep.subr.mxu0 0.0
        %1277 = vmatpush1.msra.mxu0 0.0
        %1278 = vmatprep.subr.mxu0 0.0
        %1279 = vmatpush1.msra.mxu0 0.0
        %1280 = vmatprep.subr.mxu0 0.0
        %1281 = vmatpush1.msra.mxu0 0.0
        %1282 = vmatprep.subr.mxu0 0.0
        %1283 = vmatpush1.msra.mxu0 0.0
        %1284 = vmatprep.subr.mxu0 0.0
        %1285 = vmatpush1.msra.mxu0 0.0
        %1286 = vmatprep.subr.mxu0 0.0
        %1287 = vmatpush1.msra.mxu0 0.0
        %1288 = vmatprep.subr.mxu0 0.0
        %1289 = vmatpush1.msra.mxu0 0.0
        %1290 = vmatprep.subr.mxu0 0.0
        %1291 = vmatpush1.msra.mxu0 0.0
        %1292 = vmatprep.subr.mxu0 0.0
        %1293 = vmatpush1.msra.mxu0 0.0
        %1294 = vmatprep.subr.mxu0 0.0
        %1295 = vmatpush1.msra.mxu0 0.0
        %1296 = vmatprep.subr.mxu0 0.0
        %1297 = vmatpush1.msra.mxu0 0.0
        %1298 = vmatprep.subr.mxu0 0.0
        %1299 = vmatpush1.msra.mxu0 0.0
        %1300 = vmatprep.subr.mxu0 0.0
        %1301 = vmatpush1.msra.mxu0 0.0
        %1302 = vmatprep.subr.mxu0 0.0
        %1303 = vmatpush1.msra.mxu0 0.0
        %1304 = vmatprep.subr.mxu0 0.0
        %1305 = vmatpush1.msra.mxu0 0.0
        %1306 = vmatprep.subr.mxu0 0.0
        %1307 = vmatpush1.msra.mxu0 0.0
        %1308 = vmatprep.subr.mxu0 0.0
        %1309 = vmatpush1.msra.mxu0 0.0
        %1310 = vmatprep.mubr.f32.mxu0 0.0
        %1311 = vmatmul.mubr.f32.gmra.mrb[0].mxu0 %v1244
        %v1312 = vpop.f32.mrb[0].mxu0
        %v1313 = vadd.f32 %v1241, %v1312
        %v1314 = vpop.f32.mrb[0].mxu0
        %1315 = vdwg.mxu0
        %v1316 = vtanh.pop %v1313
        %v1317 = vld [vmem:[%s17] sm:$0x1]
        %v1318 = vld [vmem:[%s19] sm:$0x1]
        %1319 = vadd.xlane.f32.xlu0 %v1316
        %v1320 = vpop.xlane.xlu0 %1319
        %v1321 = vrcp.pop 128.0
        %v1322 = vmul.f32 %v1320, %v1321
        %v1323 = vsub.f32 %v1316, %v1322
        %v1324 = vmul.f32 %v1323, %v1323
        %1325 = vadd.xlane.f32.xlu0 %v1324
        %v1326 = vpop.xlane.xlu0 %1325
        %v1327 = vmul.f32 %v1326, %v1321
        %v1328 = vadd.f32 %v1327, 1e-05
        %v1329 = vrsqrt.pop %v1328
        %v1330 = vmul.f32 %v1323, %v1329
        %v1332 = vlaneseq
        %v1333 = vshrl.u32 %v1332, 7
        %v1334 = vsub.s32 0, %v1333
        %v1335 = vrot.slane %v1317, %v1334
        %v1337 = vmul.f32 %v1330, %v1335
        %v1339 = vlaneseq
        %v1340 = vshrl.u32 %v1339, 7
        %v1341 = vsub.s32 0, %v1340
        %v1342 = vrot.slane %v1318, %v1341
        %v1344 = vadd.f32 %v1337, %v1342
        %v1345 = vld [vmem:[%s21] sm:$0xff]
        %v1346 = vld [vmem:[%s21 + $0x8] sm:$0xff]
        %v1347 = vld [vmem:[%s21 + $0x10] sm:$0xff]
        %v1348 = vld [vmem:[%s21 + $0x18] sm:$0xff]
        %v1349 = vld [vmem:[%s21 + $0x20] sm:$0xff]
        %v1350 = vld [vmem:[%s21 + $0x28] sm:$0xff]
        %v1351 = vld [vmem:[%s21 + $0x30] sm:$0xff]
        %v1352 = vld [vmem:[%s21 + $0x38] sm:$0xff]
        %v1353 = vld [vmem:[%s21 + $0x40] sm:$0xff]
        %v1354 = vld [vmem:[%s21 + $0x48] sm:$0xff]
        %v1355 = vld [vmem:[%s21 + $0x50] sm:$0xff]
        %v1356 = vld [vmem:[%s21 + $0x58] sm:$0xff]
        %v1357 = vld [vmem:[%s21 + $0x60] sm:$0xff]
        %v1358 = vld [vmem:[%s21 + $0x68] sm:$0xff]
        %v1359 = vld [vmem:[%s21 + $0x70] sm:$0xff]
        %v1360 = vld [vmem:[%s21 + $0x78] sm:$0xff]
        %v1361 = vld [vmem:[%s23] sm:$0x1]
        %v1363 = vlaneseq
        %v1364 = vshrl.u32 %v1363, 7
        %v1365 = vsub.s32 0, %v1364
        %v1366 = vrot.slane %v1361, %v1365
        %1368 = vmatprep.subr.mxu0 0.0
        %1369 = vmatpush1.msra.mxu0 %v1345
        %1370 = vmatprep.subr.mxu0 0.0
        %1371 = vmatpush1.msra.mxu0 %v1346
        %1372 = vmatprep.subr.mxu0 0.0
        %1373 = vmatpush1.msra.mxu0 %v1347
        %1374 = vmatprep.subr.mxu0 0.0
        %1375 = vmatpush1.msra.mxu0 %v1348
        %1376 = vmatprep.subr.mxu0 0.0
        %1377 = vmatpush1.msra.mxu0 %v1349
        %1378 = vmatprep.subr.mxu0 0.0
        %1379 = vmatpush1.msra.mxu0 %v1350
        %1380 = vmatprep.subr.mxu0 0.0
        %1381 = vmatpush1.msra.mxu0 %v1351
        %1382 = vmatprep.subr.mxu0 0.0
        %1383 = vmatpush1.msra.mxu0 %v1352
        %1384 = vmatprep.subr.mxu0 0.0
        %1385 = vmatpush1.msra.mxu0 %v1353
        %1386 = vmatprep.subr.mxu0 0.0
        %1387 = vmatpush1.msra.mxu0 %v1354
        %1388 = vmatprep.subr.mxu0 0.0
        %1389 = vmatpush1.msra.mxu0 %v1355
        %1390 = vmatprep.subr.mxu0 0.0
        %1391 = vmatpush1.msra.mxu0 %v1356
        %1392 = vmatprep.subr.mxu0 0.0
        %1393 = vmatpush1.msra.mxu0 %v1357
        %1394 = vmatprep.subr.mxu0 0.0
        %1395 = vmatpush1.msra.mxu0 %v1358
        %1396 = vmatprep.subr.mxu0 0.0
        %1397 = vmatpush1.msra.mxu0 %v1359
        %1398 = vmatprep.subr.mxu0 0.0
        %1399 = vmatpush1.msra.mxu0 %v1360
        %1400 = vmatprep.subr.mxu0 0.0
        %1401 = vmatpush1.msra.mxu0 0.0
        %1402 = vmatprep.subr.mxu0 0.0
        %1403 = vmatpush1.msra.mxu0 0.0
        %1404 = vmatprep.subr.mxu0 0.0
        %1405 = vmatpush1.msra.mxu0 0.0
        %1406 = vmatprep.subr.mxu0 0.0
        %1407 = vmatpush1.msra.mxu0 0.0
        %1408 = vmatprep.subr.mxu0 0.0
        %1409 = vmatpush1.msra.mxu0 0.0
        %1410 = vmatprep.subr.mxu0 0.0
        %1411 = vmatpush1.msra.mxu0 0.0
        %1412 = vmatprep.subr.mxu0 0.0
        %1413 = vmatpush1.msra.mxu0 0.0
        %1414 = vmatprep.subr.mxu0 0.0
        %1415 = vmatpush1.msra.mxu0 0.0
        %1416 = vmatprep.subr.mxu0 0.0
        %1417 = vmatpush1.msra.mxu0 0.0
        %1418 = vmatprep.subr.mxu0 0.0
        %1419 = vmatpush1.msra.mxu0 0.0
        %1420 = vmatprep.subr.mxu0 0.0
        %1421 = vmatpush1.msra.mxu0 0.0
        %1422 = vmatprep.subr.mxu0 0.0
        %1423 = vmatpush1.msra.mxu0 0.0
        %1424 = vmatprep.subr.mxu0 0.0
        %1425 = vmatpush1.msra.mxu0 0.0
        %1426 = vmatprep.subr.mxu0 0.0
        %1427 = vmatpush1.msra.mxu0 0.0
        %1428 = vmatprep.subr.mxu0 0.0
        %1429 = vmatpush1.msra.mxu0 0.0
        %1430 = vmatprep.subr.mxu0 0.0
        %1431 = vmatpush1.msra.mxu0 0.0
        %1432 = vmatprep.mubr.f32.mxu0 0.0
        %1433 = vmatmul.mubr.f32.gmra.mrb[0].mxu0 %v1344
        %v1434 = vpop.f32.mrb[0].mxu0
        %v1435 = vadd.f32 %v1366, %v1434
        %v1436 = vpop.f32.mrb[0].mxu0
        %1437 = vdwg.mxu0
        %v1438 = vtanh.pop %v1435
        %v1439 = vld [vmem:[%s25] sm:$0x1]
        %v1440 = vld [vmem:[%s27] sm:$0x1]
        %v1441 = vsel %vm1199, %v1438, 0.0
        %1442 = vadd.xlane.f32.xlu0 %v1441
        %v1443 = vpop.xlane.xlu0 %1442
        %v1444 = vmul.f32 %v1443, %v1203
        %v1445 = vsub.f32 %v1438, %v1444
        %v1446 = vmul.f32 %v1445, %v1445
        %v1447 = vsel %vm1199, %v1446, 0.0
        %1448 = vadd.xlane.f32.xlu0 %v1447
        %v1449 = vpop.xlane.xlu0 %1448
        %v1450 = vmul.f32 %v1449, %v1203
        %v1451 = vadd.f32 %v1450, 1e-05
        %v1452 = vrsqrt.pop %v1451
        %v1453 = vmul.f32 %v1445, %v1452
        %v1455 = vlaneseq
        %v1456 = vshrl.u32 %v1455, 7
        %v1457 = vsub.s32 0, %v1456
        %v1458 = vrot.slane %v1439, %v1457
        %v1460 = vmul.f32 %v1453, %v1458
        %v1462 = vlaneseq
        %v1463 = vshrl.u32 %v1462, 7
        %v1464 = vsub.s32 0, %v1463
        %v1465 = vrot.slane %v1440, %v1464
        %v1467 = vadd.f32 %v1460, %v1465
        %v1468 = vld [vmem:[%s29] sm:$0xff]
        %v1469 = vld [vmem:[%s29 + $0x8] sm:$0xff]
        %v1470 = vld [vmem:[%s29 + $0x10] sm:$0xff]
        %v1471 = vld [vmem:[%s29 + $0x18] sm:$0xff]
        %v1472 = vld [vmem:[%s29 + $0x20] sm:$0xff]
        %v1473 = vld [vmem:[%s29 + $0x28] sm:$0xff]
        %v1474 = vld [vmem:[%s29 + $0x30] sm:$0xff]
        %v1475 = vld [vmem:[%s29 + $0x38] sm:$0xff]
        %v1476 = vld [vmem:[%s31] sm:$0x1]
        %v1478 = vlaneseq
        %v1479 = vshrl.u32 %v1478, 7
        %v1480 = vsub.s32 0, %v1479
        %v1481 = vrot.slane %v1476, %v1480
        %v1484 = vsel %vm1199, %v1467, 0
        %1486 = vmatprep.subr.mxu0 0.0
        %1487 = vmatpush1.msra.mxu0 %v1468
        %1488 = vmatprep.subr.mxu0 0.0
        %1489 = vmatpush1.msra.mxu0 %v1469
        %1490 = vmatprep.subr.mxu0 0.0
        %1491 = vmatpush1.msra.mxu0 %v1470
        %1492 = vmatprep.subr.mxu0 0.0
        %1493 = vmatpush1.msra.mxu0 %v1471
        %1494 = vmatprep.subr.mxu0 0.0
        %1495 = vmatpush1.msra.mxu0 %v1472
        %1496 = vmatprep.subr.mxu0 0.0
        %1497 = vmatpush1.msra.mxu0 %v1473
        %1498 = vmatprep.subr.mxu0 0.0
        %1499 = vmatpush1.msra.mxu0 %v1474
        %1500 = vmatprep.subr.mxu0 0.0
        %1501 = vmatpush1.msra.mxu0 %v1475
        %1502 = vmatprep.subr.mxu0 0.0
        %1503 = vmatpush1.msra.mxu0 0.0
        %1504 = vmatprep.subr.mxu0 0.0
        %1505 = vmatpush1.msra.mxu0 0.0
        %1506 = vmatprep.subr.mxu0 0.0
        %1507 = vmatpush1.msra.mxu0 0.0
        %1508 = vmatprep.subr.mxu0 0.0
        %1509 = vmatpush1.msra.mxu0 0.0
        %1510 = vmatprep.subr.mxu0 0.0
        %1511 = vmatpush1.msra.mxu0 0.0
        %1512 = vmatprep.subr.mxu0 0.0
        %1513 = vmatpush1.msra.mxu0 0.0
        %1514 = vmatprep.subr.mxu0 0.0
        %1515 = vmatpush1.msra.mxu0 0.0
        %1516 = vmatprep.subr.mxu0 0.0
        %1517 = vmatpush1.msra.mxu0 0.0
        %1518 = vmatprep.subr.mxu0 0.0
        %1519 = vmatpush1.msra.mxu0 0.0
        %1520 = vmatprep.subr.mxu0 0.0
        %1521 = vmatpush1.msra.mxu0 0.0
        %1522 = vmatprep.subr.mxu0 0.0
        %1523 = vmatpush1.msra.mxu0 0.0
        %1524 = vmatprep.subr.mxu0 0.0
        %1525 = vmatpush1.msra.mxu0 0.0
        %1526 = vmatprep.subr.mxu0 0.0
        %1527 = vmatpush1.msra.mxu0 0.0
        %1528 = vmatprep.subr.mxu0 0.0
        %1529 = vmatpush1.msra.mxu0 0.0
        %1530 = vmatprep.subr.mxu0 0.0
        %1531 = vmatpush1.msra.mxu0 0.0
        %1532 = vmatprep.subr.mxu0 0.0
        %1533 = vmatpush1.msra.mxu0 0.0
        %1534 = vmatprep.subr.mxu0 0.0
        %1535 = vmatpush1.msra.mxu0 0.0
        %1536 = vmatprep.subr.mxu0 0.0
        %1537 = vmatpush1.msra.mxu0 0.0
        %1538 = vmatprep.subr.mxu0 0.0
        %1539 = vmatpush1.msra.mxu0 0.0
        %1540 = vmatprep.subr.mxu0 0.0
        %1541 = vmatpush1.msra.mxu0 0.0
        %1542 = vmatprep.subr.mxu0 0.0
        %1543 = vmatpush1.msra.mxu0 0.0
        %1544 = vmatprep.subr.mxu0 0.0
        %1545 = vmatpush1.msra.mxu0 0.0
        %1546 = vmatprep.subr.mxu0 0.0
        %1547 = vmatpush1.msra.mxu0 0.0
        %1548 = vmatprep.subr.mxu0 0.0
        %1549 = vmatpush1.msra.mxu0 0.0
        %1550 = vmatprep.mubr.f32.mxu0 0.0
        %1551 = vmatmul.mubr.f32.gmra.mrb[0].mxu0 %v1484
        %v1552 = vpop.f32.mrb[0].mxu0
        %v1553 = vadd.f32 %v1481, %v1552
        %v1554 = vpop.f32.mrb[0].mxu0
        %1555 = vdwg.mxu0
        %v1556 = vtanh.pop %v1553
        %v1557 = vld [vmem:[%s33] sm:$0x1]
        %v1558 = vld [vmem:[%s35] sm:$0x1]
        %v1559 = vsel %vm1199, %v1556, 0.0
        %1560 = vadd.xlane.f32.xlu0 %v1559
        %v1561 = vpop.xlane.xlu0 %1560
        %v1562 = vmul.f32 %v1561, %v1203
        %v1563 = vsub.f32 %v1556, %v1562
        %v1564 = vmul.f32 %v1563, %v1563
        %v1565 = vsel %vm1199, %v1564, 0.0
        %1566 = vadd.xlane.f32.xlu0 %v1565
        %v1567 = vpop.xlane.xlu0 %1566
        %v1568 = vmul.f32 %v1567, %v1203
        %v1569 = vadd.f32 %v1568, 1e-05
        %v1570 = vrsqrt.pop %v1569
        %v1571 = vmul.f32 %v1563, %v1570
        %v1573 = vlaneseq
        %v1574 = vshrl.u32 %v1573, 7
        %v1575 = vsub.s32 0, %v1574
        %v1576 = vrot.slane %v1557, %v1575
        %v1578 = vmul.f32 %v1571, %v1576
        %v1580 = vlaneseq
        %v1581 = vshrl.u32 %v1580, 7
        %v1582 = vsub.s32 0, %v1581
        %v1583 = vrot.slane %v1558, %v1582
        %v1585 = vadd.f32 %v1578, %v1583
        %v1586 = vld [vmem:[%s37] sm:$0xff]
        %v1587 = vld [vmem:[%s37 + $0x8] sm:$0xff]
        %v1588 = vld [vmem:[%s37 + $0x10] sm:$0xff]
        %v1589 = vld [vmem:[%s37 + $0x18] sm:$0xff]
        %v1590 = vld [vmem:[%s37 + $0x20] sm:$0xff]
        %v1591 = vld [vmem:[%s37 + $0x28] sm:$0xff]
        %v1592 = vld [vmem:[%s37 + $0x30] sm:$0xff]
        %v1593 = vld [vmem:[%s37 + $0x38] sm:$0xff]
        %v1594 = vld [vmem:[%s39] sm:$0x1]
        %v1596 = vlaneseq
        %v1597 = vshrl.u32 %v1596, 7
        %v1598 = vsub.s32 0, %v1597
        %v1599 = vrot.slane %v1594, %v1598
        %v1602 = vsel %vm1199, %v1585, 0
        %1604 = vmatprep.subr.mxu0 0.0
        %1605 = vmatpush1.msra.mxu0 %v1586
        %1606 = vmatprep.subr.mxu0 0.0
        %1607 = vmatpush1.msra.mxu0 %v1587
        %1608 = vmatprep.subr.mxu0 0.0
        %1609 = vmatpush1.msra.mxu0 %v1588
        %1610 = vmatprep.subr.mxu0 0.0
        %1611 = vmatpush1.msra.mxu0 %v1589
        %1612 = vmatprep.subr.mxu0 0.0
        %1613 = vmatpush1.msra.mxu0 %v1590
        %1614 = vmatprep.subr.mxu0 0.0
        %1615 = vmatpush1.msra.mxu0 %v1591
        %1616 = vmatprep.subr.mxu0 0.0
        %1617 = vmatpush1.msra.mxu0 %v1592
        %1618 = vmatprep.subr.mxu0 0.0
        %1619 = vmatpush1.msra.mxu0 %v1593
        %1620 = vmatprep.subr.mxu0 0.0
        %1621 = vmatpush1.msra.mxu0 0.0
        %1622 = vmatprep.subr.mxu0 0.0
        %1623 = vmatpush1.msra.mxu0 0.0
        %1624 = vmatprep.subr.mxu0 0.0
        %1625 = vmatpush1.msra.mxu0 0.0
        %1626 = vmatprep.subr.mxu0 0.0
        %1627 = vmatpush1.msra.mxu0 0.0
        %1628 = vmatprep.subr.mxu0 0.0
        %1629 = vmatpush1.msra.mxu0 0.0
        %1630 = vmatprep.subr.mxu0 0.0
        %1631 = vmatpush1.msra.mxu0 0.0
        %1632 = vmatprep.subr.mxu0 0.0
        %1633 = vmatpush1.msra.mxu0 0.0
        %1634 = vmatprep.subr.mxu0 0.0
        %1635 = vmatpush1.msra.mxu0 0.0
        %1636 = vmatprep.subr.mxu0 0.0
        %1637 = vmatpush1.msra.mxu0 0.0
        %1638 = vmatprep.subr.mxu0 0.0
        %1639 = vmatpush1.msra.mxu0 0.0
        %1640 = vmatprep.subr.mxu0 0.0
        %1641 = vmatpush1.msra.mxu0 0.0
        %1642 = vmatprep.subr.mxu0 0.0
        %1643 = vmatpush1.msra.mxu0 0.0
        %1644 = vmatprep.subr.mxu0 0.0
        %1645 = vmatpush1.msra.mxu0 0.0
        %1646 = vmatprep.subr.mxu0 0.0
        %1647 = vmatpush1.msra.mxu0 0.0
        %1648 = vmatprep.subr.mxu0 0.0
        %1649 = vmatpush1.msra.mxu0 0.0
        %1650 = vmatprep.subr.mxu0 0.0
        %1651 = vmatpush1.msra.mxu0 0.0
        %1652 = vmatprep.subr.mxu0 0.0
        %1653 = vmatpush1.msra.mxu0 0.0
        %1654 = vmatprep.subr.mxu0 0.0
        %1655 = vmatpush1.msra.mxu0 0.0
        %1656 = vmatprep.subr.mxu0 0.0
        %1657 = vmatpush1.msra.mxu0 0.0
        %1658 = vmatprep.subr.mxu0 0.0
        %1659 = vmatpush1.msra.mxu0 0.0
        %1660 = vmatprep.subr.mxu0 0.0
        %1661 = vmatpush1.msra.mxu0 0.0
        %1662 = vmatprep.subr.mxu0 0.0
        %1663 = vmatpush1.msra.mxu0 0.0
        %1664 = vmatprep.subr.mxu0 0.0
        %1665 = vmatpush1.msra.mxu0 0.0
        %1666 = vmatprep.subr.mxu0 0.0
        %1667 = vmatpush1.msra.mxu0 0.0
        %1668 = vmatprep.mubr.f32.mxu0 0.0
        %1669 = vmatmul.mubr.f32.gmra.mrb[0].mxu0 %v1602
        %v1670 = vpop.f32.mrb[0].mxu0
        %v1671 = vadd.f32 %v1599, %v1670
        %v1672 = vpop.f32.mrb[0].mxu0
        %1673 = vdwg.mxu0
        %v1674 = vtanh.pop %v1671
        %v1675 = vld [vmem:[%s41] sm:$0x1]
        %v1676 = vld [vmem:[%s43] sm:$0x1]
        %vm1677 = vcmask 261120
        %v1678 = vsel %vm1677, %v1674, 0.0
        %1679 = vadd.xlane.f32.xlu0 %v1678
        %v1680 = vpop.xlane.xlu0 %1679
        %v1681 = vrcp.pop 32.0
        %v1682 = vmul.f32 %v1680, %v1681
        %v1683 = vsub.f32 %v1674, %v1682
        %v1684 = vmul.f32 %v1683, %v1683
        %v1685 = vsel %vm1677, %v1684, 0.0
        %1686 = vadd.xlane.f32.xlu0 %v1685
        %v1687 = vpop.xlane.xlu0 %1686
        %v1688 = vmul.f32 %v1687, %v1681
        %v1689 = vadd.f32 %v1688, 1e-05
        %v1690 = vrsqrt.pop %v1689
        %v1691 = vmul.f32 %v1683, %v1690
        %v1693 = vlaneseq
        %v1694 = vshrl.u32 %v1693, 7
        %v1695 = vsub.s32 0, %v1694
        %v1696 = vrot.slane %v1675, %v1695
        %v1698 = vmul.f32 %v1691, %v1696
        %v1700 = vlaneseq
        %v1701 = vshrl.u32 %v1700, 7
        %v1702 = vsub.s32 0, %v1701
        %v1703 = vrot.slane %v1676, %v1702
        %v1705 = vadd.f32 %v1698, %v1703
        %v1706 = vld [vmem:[%s45] sm:$0xff]
        %v1707 = vld [vmem:[%s45 + $0x8] sm:$0xff]
        %v1708 = vld [vmem:[%s45 + $0x10] sm:$0xff]
        %v1709 = vld [vmem:[%s45 + $0x18] sm:$0xff]
        %v1710 = vld [vmem:[%s47] sm:$0x1]
        %v1712 = vlaneseq
        %v1713 = vshrl.u32 %v1712, 7
        %v1714 = vsub.s32 0, %v1713
        %v1715 = vrot.slane %v1710, %v1714
        %v1718 = vsel %vm1677, %v1705, 0
        %1720 = vmatprep.subr.mxu0 0.0
        %1721 = vmatpush1.msra.mxu0 %v1706
        %1722 = vmatprep.subr.mxu0 0.0
        %1723 = vmatpush1.msra.mxu0 %v1707
        %1724 = vmatprep.subr.mxu0 0.0
        %1725 = vmatpush1.msra.mxu0 %v1708
        %1726 = vmatprep.subr.mxu0 0.0
        %1727 = vmatpush1.msra.mxu0 %v1709
        %1728 = vmatprep.subr.mxu0 0.0
        %1729 = vmatpush1.msra.mxu0 0.0
        %1730 = vmatprep.subr.mxu0 0.0
        %1731 = vmatpush1.msra.mxu0 0.0
        %1732 = vmatprep.subr.mxu0 0.0
        %1733 = vmatpush1.msra.mxu0 0.0
        %1734 = vmatprep.subr.mxu0 0.0
        %1735 = vmatpush1.msra.mxu0 0.0
        %1736 = vmatprep.subr.mxu0 0.0
        %1737 = vmatpush1.msra.mxu0 0.0
        %1738 = vmatprep.subr.mxu0 0.0
        %1739 = vmatpush1.msra.mxu0 0.0
        %1740 = vmatprep.subr.mxu0 0.0
        %1741 = vmatpush1.msra.mxu0 0.0
        %1742 = vmatprep.subr.mxu0 0.0
        %1743 = vmatpush1.msra.mxu0 0.0
        %1744 = vmatprep.subr.mxu0 0.0
        %1745 = vmatpush1.msra.mxu0 0.0
        %1746 = vmatprep.subr.mxu0 0.0
        %1747 = vmatpush1.msra.mxu0 0.0
        %1748 = vmatprep.subr.mxu0 0.0
        %1749 = vmatpush1.msra.mxu0 0.0
        %1750 = vmatprep.subr.mxu0 0.0
        %1751 = vmatpush1.msra.mxu0 0.0
        %1752 = vmatprep.subr.mxu0 0.0
        %1753 = vmatpush1.msra.mxu0 0.0
        %1754 = vmatprep.subr.mxu0 0.0
        %1755 = vmatpush1.msra.mxu0 0.0
        %1756 = vmatprep.subr.mxu0 0.0
        %1757 = vmatpush1.msra.mxu0 0.0
        %1758 = vmatprep.subr.mxu0 0.0
        %1759 = vmatpush1.msra.mxu0 0.0
        %1760 = vmatprep.subr.mxu0 0.0
        %1761 = vmatpush1.msra.mxu0 0.0
        %1762 = vmatprep.subr.mxu0 0.0
        %1763 = vmatpush1.msra.mxu0 0.0
        %1764 = vmatprep.subr.mxu0 0.0
        %1765 = vmatpush1.msra.mxu0 0.0
        %1766 = vmatprep.subr.mxu0 0.0
        %1767 = vmatpush1.msra.mxu0 0.0
        %1768 = vmatprep.subr.mxu0 0.0
        %1769 = vmatpush1.msra.mxu0 0.0
        %1770 = vmatprep.subr.mxu0 0.0
        %1771 = vmatpush1.msra.mxu0 0.0
        %1772 = vmatprep.subr.mxu0 0.0
        %1773 = vmatpush1.msra.mxu0 0.0
        %1774 = vmatprep.subr.mxu0 0.0
        %1775 = vmatpush1.msra.mxu0 0.0
        %1776 = vmatprep.subr.mxu0 0.0
        %1777 = vmatpush1.msra.mxu0 0.0
        %1778 = vmatprep.subr.mxu0 0.0
        %1779 = vmatpush1.msra.mxu0 0.0
        %1780 = vmatprep.subr.mxu0 0.0
        %1781 = vmatpush1.msra.mxu0 0.0
        %1782 = vmatprep.subr.mxu0 0.0
        %1783 = vmatpush1.msra.mxu0 0.0
        %1784 = vmatprep.mubr.f32.mxu0 0.0
        %1785 = vmatmul.mubr.f32.gmra.mrb[0].mxu0 %v1718
        %v1786 = vpop.f32.mrb[0].mxu0
        %v1787 = vadd.f32 %v1715, %v1786
        %v1788 = vpop.f32.mrb[0].mxu0
        %1789 = vdwg.mxu0
        %v1790 = vmul.f32 %v1787, 0.25
        %1792 = vrot.lane.b32.xlu0 %v1787, 96
        %v1793 = vpop.permute.xlu0 %1792
        %v1795 = vsel %vm1122, %v1790, 0
        %v1797 = vsel %vm1122, %v1793, 0
        %1799 = vmatprep.subr.mxu0 0.0
        %1800 = vmatpush1.xpose.msra.mxu0 %v1797
        %1801 = vmatprep.subr.mxu0 0.0
        %1802 = vmatpush1.xpose.msra.mxu0 0.0
        %1803 = vmatprep.subr.mxu0 0.0
        %1804 = vmatpush1.xpose.msra.mxu0 0.0
        %1805 = vmatprep.subr.mxu0 0.0
        %1806 = vmatpush1.xpose.msra.mxu0 0.0
        %1807 = vmatprep.subr.mxu0 0.0
        %1808 = vmatpush1.xpose.msra.mxu0 0.0
        %1809 = vmatprep.subr.mxu0 0.0
        %1810 = vmatpush1.xpose.msra.mxu0 0.0
        %1811 = vmatprep.subr.mxu0 0.0
        %1812 = vmatpush1.xpose.msra.mxu0 0.0
        %1813 = vmatprep.subr.mxu0 0.0
        %1814 = vmatpush1.xpose.msra.mxu0 0.0
        %1815 = vmatprep.subr.mxu0 0.0
        %1816 = vmatpush1.xpose.msra.mxu0 0.0
        %1817 = vmatprep.subr.mxu0 0.0
        %1818 = vmatpush1.xpose.msra.mxu0 0.0
        %1819 = vmatprep.subr.mxu0 0.0
        %1820 = vmatpush1.xpose.msra.mxu0 0.0
        %1821 = vmatprep.subr.mxu0 0.0
        %1822 = vmatpush1.xpose.msra.mxu0 0.0
        %1823 = vmatprep.subr.mxu0 0.0
        %1824 = vmatpush1.xpose.msra.mxu0 0.0
        %1825 = vmatprep.subr.mxu0 0.0
        %1826 = vmatpush1.xpose.msra.mxu0 0.0
        %1827 = vmatprep.subr.mxu0 0.0
        %1828 = vmatpush1.xpose.msra.mxu0 0.0
        %1829 = vmatprep.subr.mxu0 0.0
        %1830 = vmatpush1.xpose.msra.mxu0 0.0
        %1831 = vmatprep.subr.mxu0 0.0
        %1832 = vmatpush1.xpose.msra.mxu0 0.0
        %1833 = vmatprep.subr.mxu0 0.0
        %1834 = vmatpush1.xpose.msra.mxu0 0.0
        %1835 = vmatprep.subr.mxu0 0.0
        %1836 = vmatpush1.xpose.msra.mxu0 0.0
        %1837 = vmatprep.subr.mxu0 0.0
        %1838 = vmatpush1.xpose.msra.mxu0 0.0
        %1839 = vmatprep.subr.mxu0 0.0
        %1840 = vmatpush1.xpose.msra.mxu0 0.0
        %1841 = vmatprep.subr.mxu0 0.0
        %1842 = vmatpush1.xpose.msra.mxu0 0.0
        %1843 = vmatprep.subr.mxu0 0.0
        %1844 = vmatpush1.xpose.msra.mxu0 0.0
        %1845 = vmatprep.subr.mxu0 0.0
        %1846 = vmatpush1.xpose.msra.mxu0 0.0
        %1847 = vmatprep.subr.mxu0 0.0
        %1848 = vmatpush1.xpose.msra.mxu0 0.0
        %1849 = vmatprep.subr.mxu0 0.0
        %1850 = vmatpush1.xpose.msra.mxu0 0.0
        %1851 = vmatprep.subr.mxu0 0.0
        %1852 = vmatpush1.xpose.msra.mxu0 0.0
        %1853 = vmatprep.subr.mxu0 0.0
        %1854 = vmatpush1.xpose.msra.mxu0 0.0
        %1855 = vmatprep.subr.mxu0 0.0
        %1856 = vmatpush1.xpose.msra.mxu0 0.0
        %1857 = vmatprep.subr.mxu0 0.0
        %1858 = vmatpush1.xpose.msra.mxu0 0.0
        %1859 = vmatprep.subr.mxu0 0.0
        %1860 = vmatpush1.xpose.msra.mxu0 0.0
        %1861 = vmatprep.subr.mxu0 0.0
        %1862 = vmatpush1.xpose.msra.mxu0 0.0
        %1863 = vmatprep.mubr.f32.mxu0 0.0
        %1864 = vmatmul.mubr.f32.gmra.mrb[0].mxu0 %v1795
        %v1865 = vpop.f32.mrb[0].mxu0
        %v1866 = vadd.f32 0.0, %v1865
        %v1867 = vpop.f32.mrb[0].mxu0
        %1868 = vdwg.mxu0
        %vm1869 = vcmask 64512
        %v1870 = vsel %vm1869, %v1866, -inf
        %1871 = vmax.xlane.f32.xlu0 %v1870
        %v1872 = vpop.xlane.xlu0 %1871
        %v1873 = vsub.f32 %v1866, %v1872
        %v1874 = vmul.f32 %v1873, 1.442695
        %v1875 = vpow.pop %v1874
        %v1876 = vsel %vm1869, %v1875, 0.0
        %1877 = vadd.xlane.f32.xlu0 %v1876
        %v1878 = vpop.xlane.xlu0 %1877
        %v1879 = vrcp.pop %v1878
        %v1880 = vmul.f32 %v1875, %v1879
        %1881 = vrot.lane.b32.xlu0 %v1787, 64
        %v1882 = vpop.permute.xlu0 %1881
        %v1885 = vsel %vm1869, %v1880, 0
        %1887 = vmatprep.subr.mxu0 0.0
        %1888 = vmatpush1.msra.mxu0 %v1882
        %1889 = vmatprep.subr.mxu0 0.0
        %1890 = vmatpush1.msra.mxu0 0.0
        %1891 = vmatprep.subr.mxu0 0.0
        %1892 = vmatpush1.msra.mxu0 0.0
        %1893 = vmatprep.subr.mxu0 0.0
        %1894 = vmatpush1.msra.mxu0 0.0
        %1895 = vmatprep.subr.mxu0 0.0
        %1896 = vmatpush1.msra.mxu0 0.0
        %1897 = vmatprep.subr.mxu0 0.0
        %1898 = vmatpush1.msra.mxu0 0.0
        %1899 = vmatprep.subr.mxu0 0.0
        %1900 = vmatpush1.msra.mxu0 0.0
        %1901 = vmatprep.subr.mxu0 0.0
        %1902 = vmatpush1.msra.mxu0 0.0
        %1903 = vmatprep.subr.mxu0 0.0
        %1904 = vmatpush1.msra.mxu0 0.0
        %1905 = vmatprep.subr.mxu0 0.0
        %1906 = vmatpush1.msra.mxu0 0.0
        %1907 = vmatprep.subr.mxu0 0.0
        %1908 = vmatpush1.msra.mxu0 0.0
        %1909 = vmatprep.subr.mxu0 0.0
        %1910 = vmatpush1.msra.mxu0 0.0
        %1911 = vmatprep.subr.mxu0 0.0
        %1912 = vmatpush1.msra.mxu0 0.0
        %1913 = vmatprep.subr.mxu0 0.0
        %1914 = vmatpush1.msra.mxu0 0.0
        %1915 = vmatprep.subr.mxu0 0.0
        %1916 = vmatpush1.msra.mxu0 0.0
        %1917 = vmatprep.subr.mxu0 0.0
        %1918 = vmatpush1.msra.mxu0 0.0
        %1919 = vmatprep.subr.mxu0 0.0
        %1920 = vmatpush1.msra.mxu0 0.0
        %1921 = vmatprep.subr.mxu0 0.0
        %1922 = vmatpush1.msra.mxu0 0.0
        %1923 = vmatprep.subr.mxu0 0.0
        %1924 = vmatpush1.msra.mxu0 0.0
        %1925 = vmatprep.subr.mxu0 0.0
        %1926 = vmatpush1.msra.mxu0 0.0
        %1927 = vmatprep.subr.mxu0 0.0
        %1928 = vmatpush1.msra.mxu0 0.0
        %1929 = vmatprep.subr.mxu0 0.0
        %1930 = vmatpush1.msra.mxu0 0.0
        %1931 = vmatprep.subr.mxu0 0.0
        %1932 = vmatpush1.msra.mxu0 0.0
        %1933 = vmatprep.subr.mxu0 0.0
        %1934 = vmatpush1.msra.mxu0 0.0
        %1935 = vmatprep.subr.mxu0 0.0
        %1936 = vmatpush1.msra.mxu0 0.0
        %1937 = vmatprep.subr.mxu0 0.0
        %1938 = vmatpush1.msra.mxu0 0.0
        %1939 = vmatprep.subr.mxu0 0.0
        %1940 = vmatpush1.msra.mxu0 0.0
        %1941 = vmatprep.subr.mxu0 0.0
        %1942 = vmatpush1.msra.mxu0 0.0
        %1943 = vmatprep.subr.mxu0 0.0
        %1944 = vmatpush1.msra.mxu0 0.0
        %1945 = vmatprep.subr.mxu0 0.0
        %1946 = vmatpush1.msra.mxu0 0.0
        %1947 = vmatprep.subr.mxu0 0.0
        %1948 = vmatpush1.msra.mxu0 0.0
        %1949 = vmatprep.subr.mxu0 0.0
        %1950 = vmatpush1.msra.mxu0 0.0
        %1951 = vmatprep.mubr.f32.mxu0 0.0
        %1952 = vmatmul.mubr.f32.gmra.mrb[0].mxu0 %v1885
        %v1953 = vpop.f32.mrb[0].mxu0
        %v1954 = vadd.f32 0.0, %v1953
        %v1955 = vpop.f32.mrb[0].mxu0
        %1956 = vdwg.mxu0
        %1957 = vrot.lane.b32.xlu0 %v1790, 112
        %v1958 = vpop.permute.xlu0 %1957
        %1959 = vrot.lane.b32.xlu0 %v1787, 80
        %v1960 = vpop.permute.xlu0 %1959
        %v1961 = vsel %vm1122, %v1958, 0
        %v1963 = vsel %vm1122, %v1960, 0
        %1965 = vmatprep.subr.mxu0 0.0
        %1966 = vmatpush1.xpose.msra.mxu0 %v1963
        %1967 = vmatprep.subr.mxu0 0.0
        %1968 = vmatpush1.xpose.msra.mxu0 0.0
        %1969 = vmatprep.subr.mxu0 0.0
        %1970 = vmatpush1.xpose.msra.mxu0 0.0
        %1971 = vmatprep.subr.mxu0 0.0
        %1972 = vmatpush1.xpose.msra.mxu0 0.0
        %1973 = vmatprep.subr.mxu0 0.0
        %1974 = vmatpush1.xpose.msra.mxu0 0.0
        %1975 = vmatprep.subr.mxu0 0.0
        %1976 = vmatpush1.xpose.msra.mxu0 0.0
        %1977 = vmatprep.subr.mxu0 0.0
        %1978 = vmatpush1.xpose.msra.mxu0 0.0
        %1979 = vmatprep.subr.mxu0 0.0
        %1980 = vmatpush1.xpose.msra.mxu0 0.0
        %1981 = vmatprep.subr.mxu0 0.0
        %1982 = vmatpush1.xpose.msra.mxu0 0.0
        %1983 = vmatprep.subr.mxu0 0.0
        %1984 = vmatpush1.xpose.msra.mxu0 0.0
        %1985 = vmatprep.subr.mxu0 0.0
        %1986 = vmatpush1.xpose.msra.mxu0 0.0
        %1987 = vmatprep.subr.mxu0 0.0
        %1988 = vmatpush1.xpose.msra.mxu0 0.0
        %1989 = vmatprep.subr.mxu0 0.0
        %1990 = vmatpush1.xpose.msra.mxu0 0.0
        %1991 = vmatprep.subr.mxu0 0.0
        %1992 = vmatpush1.xpose.msra.mxu0 0.0
        %1993 = vmatprep.subr.mxu0 0.0
        %1994 = vmatpush1.xpose.msra.mxu0 0.0
        %1995 = vmatprep.subr.mxu0 0.0
        %1996 = vmatpush1.xpose.msra.mxu0 0.0
        %1997 = vmatprep.subr.mxu0 0.0
        %1998 = vmatpush1.xpose.msra.mxu0 0.0
        %1999 = vmatprep.subr.mxu0 0.0
        %2000 = vmatpush1.xpose.msra.mxu0 0.0
        %2001 = vmatprep.subr.mxu0 0.0
        %2002 = vmatpush1.xpose.msra.mxu0 0.0
        %2003 = vmatprep.subr.mxu0 0.0
        %2004 = vmatpush1.xpose.msra.mxu0 0.0
        %2005 = vmatprep.subr.mxu0 0.0
        %2006 = vmatpush1.xpose.msra.mxu0 0.0
        %2007 = vmatprep.subr.mxu0 0.0
        %2008 = vmatpush1.xpose.msra.mxu0 0.0
        %2009 = vmatprep.subr.mxu0 0.0
        %2010 = vmatpush1.xpose.msra.mxu0 0.0
        %2011 = vmatprep.subr.mxu0 0.0
        %2012 = vmatpush1.xpose.msra.mxu0 0.0
        %2013 = vmatprep.subr.mxu0 0.0
        %2014 = vmatpush1.xpose.msra.mxu0 0.0
        %2015 = vmatprep.subr.mxu0 0.0
        %2016 = vmatpush1.xpose.msra.mxu0 0.0
        %2017 = vmatprep.subr.mxu0 0.0
        %2018 = vmatpush1.xpose.msra.mxu0 0.0
        %2019 = vmatprep.subr.mxu0 0.0
        %2020 = vmatpush1.xpose.msra.mxu0 0.0
        %2021 = vmatprep.subr.mxu0 0.0
        %2022 = vmatpush1.xpose.msra.mxu0 0.0
        %2023 = vmatprep.subr.mxu0 0.0
        %2024 = vmatpush1.xpose.msra.mxu0 0.0
        %2025 = vmatprep.subr.mxu0 0.0
        %2026 = vmatpush1.xpose.msra.mxu0 0.0
        %2027 = vmatprep.subr.mxu0 0.0
        %2028 = vmatpush1.xpose.msra.mxu0 0.0
        %2029 = vmatprep.mubr.f32.mxu0 0.0
        %2030 = vmatmul.mubr.f32.gmra.mrb[0].mxu0 %v1961
        %v2031 = vpop.f32.mrb[0].mxu0
        %v2032 = vadd.f32 0.0, %v2031
        %v2033 = vpop.f32.mrb[0].mxu0
        %2034 = vdwg.mxu0
        %v2035 = vsel %vm1869, %v2032, -inf
        %2036 = vmax.xlane.f32.xlu0 %v2035
        %v2037 = vpop.xlane.xlu0 %2036
        %v2038 = vsub.f32 %v2032, %v2037
        %v2039 = vmul.f32 %v2038, 1.442695
        %v2040 = vpow.pop %v2039
        %v2041 = vsel %vm1869, %v2040, 0.0
        %2042 = vadd.xlane.f32.xlu0 %v2041
        %v2043 = vpop.xlane.xlu0 %2042
        %v2044 = vrcp.pop %v2043
        %v2045 = vmul.f32 %v2040, %v2044
        %2046 = vrot.lane.b32.xlu0 %v1787, 48
        %v2047 = vpop.permute.xlu0 %2046
        %v2050 = vsel %vm1869, %v2045, 0
        %2052 = vmatprep.subr.mxu0 0.0
        %2053 = vmatpush1.msra.mxu0 %v2047
        %2054 = vmatprep.subr.mxu0 0.0
        %2055 = vmatpush1.msra.mxu0 0.0
        %2056 = vmatprep.subr.mxu0 0.0
        %2057 = vmatpush1.msra.mxu0 0.0
        %2058 = vmatprep.subr.mxu0 0.0
        %2059 = vmatpush1.msra.mxu0 0.0
        %2060 = vmatprep.subr.mxu0 0.0
        %2061 = vmatpush1.msra.mxu0 0.0
        %2062 = vmatprep.subr.mxu0 0.0
        %2063 = vmatpush1.msra.mxu0 0.0
        %2064 = vmatprep.subr.mxu0 0.0
        %2065 = vmatpush1.msra.mxu0 0.0
        %2066 = vmatprep.subr.mxu0 0.0
        %2067 = vmatpush1.msra.mxu0 0.0
        %2068 = vmatprep.subr.mxu0 0.0
        %2069 = vmatpush1.msra.mxu0 0.0
        %2070 = vmatprep.subr.mxu0 0.0
        %2071 = vmatpush1.msra.mxu0 0.0
        %2072 = vmatprep.subr.mxu0 0.0
        %2073 = vmatpush1.msra.mxu0 0.0
        %2074 = vmatprep.subr.mxu0 0.0
        %2075 = vmatpush1.msra.mxu0 0.0
        %2076 = vmatprep.subr.mxu0 0.0
        %2077 = vmatpush1.msra.mxu0 0.0
        %2078 = vmatprep.subr.mxu0 0.0
        %2079 = vmatpush1.msra.mxu0 0.0
        %2080 = vmatprep.subr.mxu0 0.0
        %2081 = vmatpush1.msra.mxu0 0.0
        %2082 = vmatprep.subr.mxu0 0.0
        %2083 = vmatpush1.msra.mxu0 0.0
        %2084 = vmatprep.subr.mxu0 0.0
        %2085 = vmatpush1.msra.mxu0 0.0
        %2086 = vmatprep.subr.mxu0 0.0
        %2087 = vmatpush1.msra.mxu0 0.0
        %2088 = vmatprep.subr.mxu0 0.0
        %2089 = vmatpush1.msra.mxu0 0.0
        %2090 = vmatprep.subr.mxu0 0.0
        %2091 = vmatpush1.msra.mxu0 0.0
        %2092 = vmatprep.subr.mxu0 0.0
        %2093 = vmatpush1.msra.mxu0 0.0
        %2094 = vmatprep.subr.mxu0 0.0
        %2095 = vmatpush1.msra.mxu0 0.0
        %2096 = vmatprep.subr.mxu0 0.0
        %2097 = vmatpush1.msra.mxu0 0.0
        %2098 = vmatprep.subr.mxu0 0.0
        %2099 = vmatpush1.msra.mxu0 0.0
        %2100 = vmatprep.subr.mxu0 0.0
        %2101 = vmatpush1.msra.mxu0 0.0
        %2102 = vmatprep.subr.mxu0 0.0
        %2103 = vmatpush1.msra.mxu0 0.0
        %2104 = vmatprep.subr.mxu0 0.0
        %2105 = vmatpush1.msra.mxu0 0.0
        %2106 = vmatprep.subr.mxu0 0.0
        %2107 = vmatpush1.msra.mxu0 0.0
        %2108 = vmatprep.subr.mxu0 0.0
        %2109 = vmatpush1.msra.mxu0 0.0
        %2110 = vmatprep.subr.mxu0 0.0
        %2111 = vmatpush1.msra.mxu0 0.0
        %2112 = vmatprep.subr.mxu0 0.0
        %2113 = vmatpush1.msra.mxu0 0.0
        %2114 = vmatprep.subr.mxu0 0.0
        %2115 = vmatpush1.msra.mxu0 0.0
        %2116 = vmatprep.mubr.f32.mxu0 0.0
        %2117 = vmatmul.mubr.f32.gmra.mrb[0].mxu0 %v2050
        %v2118 = vpop.f32.mrb[0].mxu0
        %v2119 = vadd.f32 0.0, %v2118
        %v2120 = vpop.f32.mrb[0].mxu0
        %2121 = vdwg.mxu0
        %2123 = vrot.lane.b32.xlu0 %v2119, 16
        %v2124 = vpop.permute.xlu0 %2123
        %v2126 = vsel %vm1122, %v1954, %v2124
        %v2127 = vld [vmem:[%s49] sm:$0xff]
        %v2128 = vld [vmem:[%s49 + $0x8] sm:$0xff]
        %v2129 = vld [vmem:[%s49 + $0x10] sm:$0xff]
        %v2130 = vld [vmem:[%s49 + $0x18] sm:$0xff]
        %v2131 = vld [vmem:[%s51] sm:$0x1]
        %v2133 = vlaneseq
        %v2134 = vshrl.u32 %v2133, 7
        %v2135 = vsub.s32 0, %v2134
        %v2136 = vrot.slane %v2131, %v2135
        %v2139 = vsel %vm1677, %v2126, 0
        %2141 = vmatprep.subr.mxu0 0.0
        %2142 = vmatpush1.msra.mxu0 %v2127
        %2143 = vmatprep.subr.mxu0 0.0
        %2144 = vmatpush1.msra.mxu0 %v2128
        %2145 = vmatprep.subr.mxu0 0.0
        %2146 = vmatpush1.msra.mxu0 %v2129
        %2147 = vmatprep.subr.mxu0 0.0
        %2148 = vmatpush1.msra.mxu0 %v2130
        %2149 = vmatprep.subr.mxu0 0.0
        %2150 = vmatpush1.msra.mxu0 0.0
        %2151 = vmatprep.subr.mxu0 0.0
        %2152 = vmatpush1.msra.mxu0 0.0
        %2153 = vmatprep.subr.mxu0 0.0
        %2154 = vmatpush1.msra.mxu0 0.0
        %2155 = vmatprep.subr.mxu0 0.0
        %2156 = vmatpush1.msra.mxu0 0.0
        %2157 = vmatprep.subr.mxu0 0.0
        %2158 = vmatpush1.msra.mxu0 0.0
        %2159 = vmatprep.subr.mxu0 0.0
        %2160 = vmatpush1.msra.mxu0 0.0
        %2161 = vmatprep.subr.mxu0 0.0
        %2162 = vmatpush1.msra.mxu0 0.0
        %2163 = vmatprep.subr.mxu0 0.0
        %2164 = vmatpush1.msra.mxu0 0.0
        %2165 = vmatprep.subr.mxu0 0.0
        %2166 = vmatpush1.msra.mxu0 0.0
        %2167 = vmatprep.subr.mxu0 0.0
        %2168 = vmatpush1.msra.mxu0 0.0
        %2169 = vmatprep.subr.mxu0 0.0
        %2170 = vmatpush1.msra.mxu0 0.0
        %2171 = vmatprep.subr.mxu0 0.0
        %2172 = vmatpush1.msra.mxu0 0.0
        %2173 = vmatprep.subr.mxu0 0.0
        %2174 = vmatpush1.msra.mxu0 0.0
        %2175 = vmatprep.subr.mxu0 0.0
        %2176 = vmatpush1.msra.mxu0 0.0
        %2177 = vmatprep.subr.mxu0 0.0
        %2178 = vmatpush1.msra.mxu0 0.0
        %2179 = vmatprep.subr.mxu0 0.0
        %2180 = vmatpush1.msra.mxu0 0.0
        %2181 = vmatprep.subr.mxu0 0.0
        %2182 = vmatpush1.msra.mxu0 0.0
        %2183 = vmatprep.subr.mxu0 0.0
        %2184 = vmatpush1.msra.mxu0 0.0
        %2185 = vmatprep.subr.mxu0 0.0
        %2186 = vmatpush1.msra.mxu0 0.0
        %2187 = vmatprep.subr.mxu0 0.0
        %2188 = vmatpush1.msra.mxu0 0.0
        %2189 = vmatprep.subr.mxu0 0.0
        %2190 = vmatpush1.msra.mxu0 0.0
        %2191 = vmatprep.subr.mxu0 0.0
        %2192 = vmatpush1.msra.mxu0 0.0
        %2193 = vmatprep.subr.mxu0 0.0
        %2194 = vmatpush1.msra.mxu0 0.0
        %2195 = vmatprep.subr.mxu0 0.0
        %2196 = vmatpush1.msra.mxu0 0.0
        %2197 = vmatprep.subr.mxu0 0.0
        %2198 = vmatpush1.msra.mxu0 0.0
        %2199 = vmatprep.subr.mxu0 0.0
        %2200 = vmatpush1.msra.mxu0 0.0
        %2201 = vmatprep.subr.mxu0 0.0
        %2202 = vmatpush1.msra.mxu0 0.0
        %2203 = vmatprep.subr.mxu0 0.0
        %2204 = vmatpush1.msra.mxu0 0.0
        %2205 = vmatprep.mubr.f32.mxu0 0.0
        %2206 = vmatmul.mubr.f32.gmra.mrb[0].mxu0 %v2139
        %v2207 = vpop.f32.mrb[0].mxu0
        %v2208 = vadd.f32 %v2136, %v2207
        %v2209 = vpop.f32.mrb[0].mxu0
        %2210 = vdwg.mxu0
        %v2211 = vadd.f32 %v1705, %v2208
        %v2212 = vld [vmem:[%s53] sm:$0x1]
        %v2213 = vld [vmem:[%s55] sm:$0x1]
        %v2214 = vsel %vm1677, %v2211, 0.0
        %2215 = vadd.xlane.f32.xlu0 %v2214
        %v2216 = vpop.xlane.xlu0 %2215
        %v2217 = vmul.f32 %v2216, %v1681
        %v2218 = vsub.f32 %v2211, %v2217
        %v2219 = vmul.f32 %v2218, %v2218
        %v2220 = vsel %vm1677, %v2219, 0.0
        %2221 = vadd.xlane.f32.xlu0 %v2220
        %v2222 = vpop.xlane.xlu0 %2221
        %v2223 = vmul.f32 %v2222, %v1681
        %v2224 = vadd.f32 %v2223, 1e-05
        %v2225 = vrsqrt.pop %v2224
        %v2226 = vmul.f32 %v2218, %v2225
        %v2228 = vlaneseq
        %v2229 = vshrl.u32 %v2228, 7
        %v2230 = vsub.s32 0, %v2229
        %v2231 = vrot.slane %v2212, %v2230
        %v2233 = vmul.f32 %v2226, %v2231
        %v2235 = vlaneseq
        %v2236 = vshrl.u32 %v2235, 7
        %v2237 = vsub.s32 0, %v2236
        %v2238 = vrot.slane %v2213, %v2237
        %v2240 = vadd.f32 %v2233, %v2238
        %v2241 = vld [vmem:[%s57] sm:$0xff]
        %v2242 = vld [vmem:[%s57 + $0x8] sm:$0xff]
        %v2243 = vld [vmem:[%s57 + $0x10] sm:$0xff]
        %v2244 = vld [vmem:[%s57 + $0x18] sm:$0xff]
        %v2245 = vld [vmem:[%s57 + $0x20] sm:$0xff]
        %v2246 = vld [vmem:[%s57 + $0x28] sm:$0xff]
        %v2247 = vld [vmem:[%s57 + $0x30] sm:$0xff]
        %v2248 = vld [vmem:[%s57 + $0x38] sm:$0xff]
        %v2249 = vld [vmem:[%s57 + $0x40] sm:$0xff]
        %v2250 = vld [vmem:[%s57 + $0x48] sm:$0xff]
        %v2251 = vld [vmem:[%s57 + $0x50] sm:$0xff]
        %v2252 = vld [vmem:[%s57 + $0x58] sm:$0xff]
        %v2253 = vld [vmem:[%s57 + $0x60] sm:$0xff]
        %v2254 = vld [vmem:[%s57 + $0x68] sm:$0xff]
        %v2255 = vld [vmem:[%s57 + $0x70] sm:$0xff]
        %v2256 = vld [vmem:[%s57 + $0x78] sm:$0xff]
        %v2257 = vld [vmem:[%s57 + $0x80] sm:$0xff]
        %v2258 = vld [vmem:[%s57 + $0x88] sm:$0xff]
        %v2259 = vld [vmem:[%s57 + $0x90] sm:$0xff]
        %v2260 = vld [vmem:[%s57 + $0x98] sm:$0xff]
        %v2261 = vld [vmem:[%s57 + $0xa0] sm:$0xff]
        %v2262 = vld [vmem:[%s57 + $0xa8] sm:$0xff]
        %v2263 = vld [vmem:[%s57 + $0xb0] sm:$0xff]
        %v2264 = vld [vmem:[%s57 + $0xb8] sm:$0xff]
        %v2265 = vld [vmem:[%s57 + $0xc0] sm:$0xff]
        %v2266 = vld [vmem:[%s57 + $0xc8] sm:$0xff]
        %v2267 = vld [vmem:[%s57 + $0xd0] sm:$0xff]
        %v2268 = vld [vmem:[%s57 + $0xd8] sm:$0xff]
        %v2269 = vld [vmem:[%s57 + $0xe0] sm:$0xff]
        %v2270 = vld [vmem:[%s57 + $0xe8] sm:$0xff]
        %v2271 = vld [vmem:[%s57 + $0xf0] sm:$0xff]
        %v2272 = vld [vmem:[%s57 + $0xf8] sm:$0xff]
        %v2273 = vld [vmem:[%s57 + $0x100] sm:$0xff]
        %v2274 = vld [vmem:[%s57 + $0x108] sm:$0xff]
        %v2275 = vld [vmem:[%s57 + $0x110] sm:$0xff]
        %v2276 = vld [vmem:[%s57 + $0x118] sm:$0xff]
        %v2277 = vld [vmem:[%s57 + $0x120] sm:$0xff]
        %v2278 = vld [vmem:[%s57 + $0x128] sm:$0xff]
        %v2279 = vld [vmem:[%s57 + $0x130] sm:$0xff]
        %v2280 = vld [vmem:[%s57 + $0x138] sm:$0xff]
        %v2281 = vld [vmem:[%s57 + $0x140] sm:$0xff]
        %v2282 = vld [vmem:[%s57 + $0x148] sm:$0xff]
        %v2283 = vld [vmem:[%s57 + $0x150] sm:$0xff]
        %v2284 = vld [vmem:[%s57 + $0x158] sm:$0xff]
        %v2285 = vld [vmem:[%s57 + $0x160] sm:$0xff]
        %v2286 = vld [vmem:[%s57 + $0x168] sm:$0xff]
        %v2287 = vld [vmem:[%s57 + $0x170] sm:$0xff]
        %v2288 = vld [vmem:[%s57 + $0x178] sm:$0xff]
        %v2289 = vld [vmem:[%s57 + $0x180] sm:$0xff]
        %v2290 = vld [vmem:[%s57 + $0x188] sm:$0xff]
        %v2291 = vld [vmem:[%s57 + $0x190] sm:$0xff]
        %v2292 = vld [vmem:[%s57 + $0x198] sm:$0xff]
        %v2293 = vld [vmem:[%s57 + $0x1a0] sm:$0xff]
        %v2294 = vld [vmem:[%s57 + $0x1a8] sm:$0xff]
        %v2295 = vld [vmem:[%s57 + $0x1b0] sm:$0xff]
        %v2296 = vld [vmem:[%s57 + $0x1b8] sm:$0xff]
        %v2297 = vld [vmem:[%s57 + $0x1c0] sm:$0xff]
        %v2298 = vld [vmem:[%s57 + $0x1c8] sm:$0xff]
        %v2299 = vld [vmem:[%s57 + $0x1d0] sm:$0xff]
        %v2300 = vld [vmem:[%s57 + $0x1d8] sm:$0xff]
        %v2301 = vld [vmem:[%s57 + $0x1e0] sm:$0xff]
        %v2302 = vld [vmem:[%s57 + $0x1e8] sm:$0xff]
        %v2303 = vld [vmem:[%s57 + $0x1f0] sm:$0xff]
        %v2304 = vld [vmem:[%s57 + $0x1f8] sm:$0xff]
        %v2305 = vld [vmem:[%s59] sm:$0xff]
        %v2306 = vld [vmem:[%s59 + $0x8] sm:$0xff]
        %v2309 = vlaneseq
        %v2310 = vshrl.u32 %v2309, 7
        %v2311 = vsub.s32 0, %v2310
        %v2312 = vrot.slane %v2305, %v2311
        %v2313 = vlaneseq
        %v2314 = vshrl.u32 %v2313, 7
        %v2315 = vsub.s32 1, %v2314
        %v2316 = vrot.slane %v2305, %v2315
        %v2317 = vlaneseq
        %v2318 = vshrl.u32 %v2317, 7
        %v2319 = vsub.s32 2, %v2318
        %v2320 = vrot.slane %v2305, %v2319
        %v2321 = vlaneseq
        %v2322 = vshrl.u32 %v2321, 7
        %v2323 = vsub.s32 3, %v2322
        %v2324 = vrot.slane %v2305, %v2323
        %v2325 = vlaneseq
        %v2326 = vshrl.u32 %v2325, 7
        %v2327 = vsub.s32 4, %v2326
        %v2328 = vrot.slane %v2305, %v2327
        %v2329 = vlaneseq
        %v2330 = vshrl.u32 %v2329, 7
        %v2331 = vsub.s32 5, %v2330
        %v2332 = vrot.slane %v2305, %v2331
        %v2333 = vlaneseq
        %v2334 = vshrl.u32 %v2333, 7
        %v2335 = vsub.s32 6, %v2334
        %v2336 = vrot.slane %v2305, %v2335
        %v2337 = vlaneseq
        %v2338 = vshrl.u32 %v2337, 7
        %v2339 = vsub.s32 7, %v2338
        %v2340 = vrot.slane %v2305, %v2339
        %v2341 = vlaneseq
        %v2342 = vshrl.u32 %v2341, 7
        %v2343 = vsub.s32 0, %v2342
        %v2344 = vrot.slane %v2306, %v2343
        %v2345 = vlaneseq
        %v2346 = vshrl.u32 %v2345, 7
        %v2347 = vsub.s32 1, %v2346
        %v2348 = vrot.slane %v2306, %v2347
        %v2349 = vlaneseq
        %v2350 = vshrl.u32 %v2349, 7
        %v2351 = vsub.s32 2, %v2350
        %v2352 = vrot.slane %v2306, %v2351
        %v2353 = vlaneseq
        %v2354 = vshrl.u32 %v2353, 7
        %v2355 = vsub.s32 3, %v2354
        %v2356 = vrot.slane %v2306, %v2355
        %v2357 = vlaneseq
        %v2358 = vshrl.u32 %v2357, 7
        %v2359 = vsub.s32 4, %v2358
        %v2360 = vrot.slane %v2306, %v2359
        %v2361 = vlaneseq
        %v2362 = vshrl.u32 %v2361, 7
        %v2363 = vsub.s32 5, %v2362
        %v2364 = vrot.slane %v2306, %v2363
        %v2365 = vlaneseq
        %v2366 = vshrl.u32 %v2365, 7
        %v2367 = vsub.s32 6, %v2366
        %v2368 = vrot.slane %v2306, %v2367
        %v2369 = vlaneseq
        %v2370 = vshrl.u32 %v2369, 7
        %v2371 = vsub.s32 7, %v2370
        %v2372 = vrot.slane %v2306, %v2371
        %v2390 = vsel %vm1677, %v2240, 0
        %2392 = vmatprep.subr.mxu0 %v2242
        %2393 = vmatpush1.msra.mxu0 %v2241
        %2394 = vmatprep.subr.mxu0 %v2258
        %2395 = vmatpush1.msra.mxu0 %v2257
        %2396 = vmatprep.subr.mxu0 %v2274
        %2397 = vmatpush1.msra.mxu0 %v2273
        %2398 = vmatprep.subr.mxu0 %v2290
        %2399 = vmatpush1.msra.mxu0 %v2289
        %2400 = vmatprep.subr.mxu0 0.0
        %2401 = vmatpush1.msra.mxu0 0.0
        %2402 = vmatprep.subr.mxu0 0.0
        %2403 = vmatpush1.msra.mxu0 0.0
        %2404 = vmatprep.subr.mxu0 0.0
        %2405 = vmatpush1.msra.mxu0 0.0
        %2406 = vmatprep.subr.mxu0 0.0
        %2407 = vmatpush1.msra.mxu0 0.0
        %2408 = vmatprep.subr.mxu0 0.0
        %2409 = vmatpush1.msra.mxu0 0.0
        %2410 = vmatprep.subr.mxu0 0.0
        %2411 = vmatpush1.msra.mxu0 0.0
        %2412 = vmatprep.subr.mxu0 0.0
        %2413 = vmatpush1.msra.mxu0 0.0
        %2414 = vmatprep.subr.mxu0 0.0
        %2415 = vmatpush1.msra.mxu0 0.0
        %2416 = vmatprep.subr.mxu0 0.0
        %2417 = vmatpush1.msra.mxu0 0.0
        %2418 = vmatprep.subr.mxu0 0.0
        %2419 = vmatpush1.msra.mxu0 0.0
        %2420 = vmatprep.subr.mxu0 0.0
        %2421 = vmatpush1.msra.mxu0 0.0
        %2422 = vmatprep.subr.mxu0 0.0
        %2423 = vmatpush1.msra.mxu0 0.0
        %2424 = vmatprep.subr.mxu0 0.0
        %2425 = vmatpush1.msra.mxu0 0.0
        %2426 = vmatprep.subr.mxu0 0.0
        %2427 = vmatpush1.msra.mxu0 0.0
        %2428 = vmatprep.subr.mxu0 0.0
        %2429 = vmatpush1.msra.mxu0 0.0
        %2430 = vmatprep.subr.mxu0 0.0
        %2431 = vmatpush1.msra.mxu0 0.0
        %2432 = vmatprep.subr.mxu0 0.0
        %2433 = vmatpush1.msra.mxu0 0.0
        %2434 = vmatprep.subr.mxu0 0.0
        %2435 = vmatpush1.msra.mxu0 0.0
        %2436 = vmatprep.subr.mxu0 0.0
        %2437 = vmatpush1.msra.mxu0 0.0
        %2438 = vmatprep.subr.mxu0 0.0
        %2439 = vmatpush1.msra.mxu0 0.0
        %2440 = vmatprep.subr.mxu0 0.0
        %2441 = vmatpush1.msra.mxu0 0.0
        %2442 = vmatprep.subr.mxu0 0.0
        %2443 = vmatpush1.msra.mxu0 0.0
        %2444 = vmatprep.subr.mxu0 0.0
        %2445 = vmatpush1.msra.mxu0 0.0
        %2446 = vmatprep.subr.mxu0 0.0
        %2447 = vmatpush1.msra.mxu0 0.0
        %2448 = vmatprep.subr.mxu0 0.0
        %2449 = vmatpush1.msra.mxu0 0.0
        %2450 = vmatprep.subr.mxu0 0.0
        %2451 = vmatpush1.msra.mxu0 0.0
        %2452 = vmatprep.subr.mxu0 0.0
        %2453 = vmatpush1.msra.mxu0 0.0
        %2454 = vmatprep.subr.mxu0 0.0
        %2455 = vmatpush1.msra.mxu0 0.0
        %2456 = vmatprep.mubr.f32.mxu0 0.0
        %2457 = vmatmul.mubr.f32.gmra.mrb[0].mxu0 %v2390
        %v2458 = vpop.f32.mrb[0].mxu0
        %v2459 = vadd.f32 %v2312, %v2458
        %v2460 = vpop.f32.mrb[0].mxu0
        %v2461 = vadd.f32 %v2316, %v2460
        %2462 = vdwg.mxu0
        %2463 = vmatprep.subr.mxu0 %v2244
        %2464 = vmatpush1.msra.mxu0 %v2243
        %2465 = vmatprep.subr.mxu0 %v2260
        %2466 = vmatpush1.msra.mxu0 %v2259
        %2467 = vmatprep.subr.mxu0 %v2276
        %2468 = vmatpush1.msra.mxu0 %v2275
        %2469 = vmatprep.subr.mxu0 %v2292
        %2470 = vmatpush1.msra.mxu0 %v2291
        %2471 = vmatprep.subr.mxu0 0.0
        %2472 = vmatpush1.msra.mxu0 0.0
        %2473 = vmatprep.subr.mxu0 0.0
        %2474 = vmatpush1.msra.mxu0 0.0
        %2475 = vmatprep.subr.mxu0 0.0
        %2476 = vmatpush1.msra.mxu0 0.0
        %2477 = vmatprep.subr.mxu0 0.0
        %2478 = vmatpush1.msra.mxu0 0.0
        %2479 = vmatprep.subr.mxu0 0.0
        %2480 = vmatpush1.msra.mxu0 0.0
        %2481 = vmatprep.subr.mxu0 0.0
        %2482 = vmatpush1.msra.mxu0 0.0
        %2483 = vmatprep.subr.mxu0 0.0
        %2484 = vmatpush1.msra.mxu0 0.0
        %2485 = vmatprep.subr.mxu0 0.0
        %2486 = vmatpush1.msra.mxu0 0.0
        %2487 = vmatprep.subr.mxu0 0.0
        %2488 = vmatpush1.msra.mxu0 0.0
        %2489 = vmatprep.subr.mxu0 0.0
        %2490 = vmatpush1.msra.mxu0 0.0
        %2491 = vmatprep.subr.mxu0 0.0
        %2492 = vmatpush1.msra.mxu0 0.0
        %2493 = vmatprep.subr.mxu0 0.0
        %2494 = vmatpush1.msra.mxu0 0.0
        %2495 = vmatprep.subr.mxu0 0.0
        %2496 = vmatpush1.msra.mxu0 0.0
        %2497 = vmatprep.subr.mxu0 0.0
        %2498 = vmatpush1.msra.mxu0 0.0
        %2499 = vmatprep.subr.mxu0 0.0
        %2500 = vmatpush1.msra.mxu0 0.0
        %2501 = vmatprep.subr.mxu0 0.0
        %2502 = vmatpush1.msra.mxu0 0.0
        %2503 = vmatprep.subr.mxu0 0.0
        %2504 = vmatpush1.msra.mxu0 0.0
        %2505 = vmatprep.subr.mxu0 0.0
        %2506 = vmatpush1.msra.mxu0 0.0
        %2507 = vmatprep.subr.mxu0 0.0
        %2508 = vmatpush1.msra.mxu0 0.0
        %2509 = vmatprep.subr.mxu0 0.0
        %2510 = vmatpush1.msra.mxu0 0.0
        %2511 = vmatprep.subr.mxu0 0.0
        %2512 = vmatpush1.msra.mxu0 0.0
        %2513 = vmatprep.subr.mxu0 0.0
        %2514 = vmatpush1.msra.mxu0 0.0
        %2515 = vmatprep.subr.mxu0 0.0
        %2516 = vmatpush1.msra.mxu0 0.0
        %2517 = vmatprep.subr.mxu0 0.0
        %2518 = vmatpush1.msra.mxu0 0.0
        %2519 = vmatprep.subr.mxu0 0.0
        %2520 = vmatpush1.msra.mxu0 0.0
        %2521 = vmatprep.subr.mxu0 0.0
        %2522 = vmatpush1.msra.mxu0 0.0
        %2523 = vmatprep.subr.mxu0 0.0
        %2524 = vmatpush1.msra.mxu0 0.0
        %2525 = vmatprep.subr.mxu0 0.0
        %2526 = vmatpush1.msra.mxu0 0.0
        %2527 = vmatprep.mubr.f32.mxu0 0.0
        %2528 = vmatmul.mubr.f32.gmra.mrb[0].mxu0 %v2390
        %v2529 = vpop.f32.mrb[0].mxu0
        %v2530 = vadd.f32 %v2320, %v2529
        %v2531 = vpop.f32.mrb[0].mxu0
        %v2532 = vadd.f32 %v2324, %v2531
        %2533 = vdwg.mxu0
        %2534 = vmatprep.subr.mxu0 %v2246
        %2535 = vmatpush1.msra.mxu0 %v2245
        %2536 = vmatprep.subr.mxu0 %v2262
        %2537 = vmatpush1.msra.mxu0 %v2261
        %2538 = vmatprep.subr.mxu0 %v2278
        %2539 = vmatpush1.msra.mxu0 %v2277
        %2540 = vmatprep.subr.mxu0 %v2294
        %2541 = vmatpush1.msra.mxu0 %v2293
        %2542 = vmatprep.subr.mxu0 0.0
        %2543 = vmatpush1.msra.mxu0 0.0
        %2544 = vmatprep.subr.mxu0 0.0
        %2545 = vmatpush1.msra.mxu0 0.0
        %2546 = vmatprep.subr.mxu0 0.0
        %2547 = vmatpush1.msra.mxu0 0.0
        %2548 = vmatprep.subr.mxu0 0.0
        %2549 = vmatpush1.msra.mxu0 0.0
        %2550 = vmatprep.subr.mxu0 0.0
        %2551 = vmatpush1.msra.mxu0 0.0
        %2552 = vmatprep.subr.mxu0 0.0
        %2553 = vmatpush1.msra.mxu0 0.0
        %2554 = vmatprep.subr.mxu0 0.0
        %2555 = vmatpush1.msra.mxu0 0.0
        %2556 = vmatprep.subr.mxu0 0.0
        %2557 = vmatpush1.msra.mxu0 0.0
        %2558 = vmatprep.subr.mxu0 0.0
        %2559 = vmatpush1.msra.mxu0 0.0
        %2560 = vmatprep.subr.mxu0 0.0
        %2561 = vmatpush1.msra.mxu0 0.0
        %2562 = vmatprep.subr.mxu0 0.0
        %2563 = vmatpush1.msra.mxu0 0.0
        %2564 = vmatprep.subr.mxu0 0.0
        %2565 = vmatpush1.msra.mxu0 0.0
        %2566 = vmatprep.subr.mxu0 0.0
        %2567 = vmatpush1.msra.mxu0 0.0
        %2568 = vmatprep.subr.mxu0 0.0
        %2569 = vmatpush1.msra.mxu0 0.0
        %2570 = vmatprep.subr.mxu0 0.0
        %2571 = vmatpush1.msra.mxu0 0.0
        %2572 = vmatprep.subr.mxu0 0.0
        %2573 = vmatpush1.msra.mxu0 0.0
        %2574 = vmatprep.subr.mxu0 0.0
        %2575 = vmatpush1.msra.mxu0 0.0
        %2576 = vmatprep.subr.mxu0 0.0
        %2577 = vmatpush1.msra.mxu0 0.0
        %2578 = vmatprep.subr.mxu0 0.0
        %2579 = vmatpush1.msra.mxu0 0.0
        %2580 = vmatprep.subr.mxu0 0.0
        %2581 = vmatpush1.msra.mxu0 0.0
        %2582 = vmatprep.subr.mxu0 0.0
        %2583 = vmatpush1.msra.mxu0 0.0
        %2584 = vmatprep.subr.mxu0 0.0
        %2585 = vmatpush1.msra.mxu0 0.0
        %2586 = vmatprep.subr.mxu0 0.0
        %2587 = vmatpush1.msra.mxu0 0.0
        %2588 = vmatprep.subr.mxu0 0.0
        %2589 = vmatpush1.msra.mxu0 0.0
        %2590 = vmatprep.subr.mxu0 0.0
        %2591 = vmatpush1.msra.mxu0 0.0
        %2592 = vmatprep.subr.mxu0 0.0
        %2593 = vmatpush1.msra.mxu0 0.0
        %2594 = vmatprep.subr.mxu0 0.0
        %2595 = vmatpush1.msra.mxu0 0.0
        %2596 = vmatprep.subr.mxu0 0.0
        %2597 = vmatpush1.msra.mxu0 0.0
        %2598 = vmatprep.mubr.f32.mxu0 0.0
        %2599 = vmatmul.mubr.f32.gmra.mrb[0].mxu0 %v2390
        %v2600 = vpop.f32.mrb[0].mxu0
        %v2601 = vadd.f32 %v2328, %v2600
        %v2602 = vpop.f32.mrb[0].mxu0
        %v2603 = vadd.f32 %v2332, %v2602
        %2604 = vdwg.mxu0
        %2605 = vmatprep.subr.mxu0 %v2248
        %2606 = vmatpush1.msra.mxu0 %v2247
        %2607 = vmatprep.subr.mxu0 %v2264
        %2608 = vmatpush1.msra.mxu0 %v2263
        %2609 = vmatprep.subr.mxu0 %v2280
        %2610 = vmatpush1.msra.mxu0 %v2279
        %2611 = vmatprep.subr.mxu0 %v2296
        %2612 = vmatpush1.msra.mxu0 %v2295
        %2613 = vmatprep.subr.mxu0 0.0
        %2614 = vmatpush1.msra.mxu0 0.0
        %2615 = vmatprep.subr.mxu0 0.0
        %2616 = vmatpush1.msra.mxu0 0.0
        %2617 = vmatprep.subr.mxu0 0.0
        %2618 = vmatpush1.msra.mxu0 0.0
        %2619 = vmatprep.subr.mxu0 0.0
        %2620 = vmatpush1.msra.mxu0 0.0
        %2621 = vmatprep.subr.mxu0 0.0
        %2622 = vmatpush1.msra.mxu0 0.0
        %2623 = vmatprep.subr.mxu0 0.0
        %2624 = vmatpush1.msra.mxu0 0.0
        %2625 = vmatprep.subr.mxu0 0.0
        %2626 = vmatpush1.msra.mxu0 0.0
        %2627 = vmatprep.subr.mxu0 0.0
        %2628 = vmatpush1.msra.mxu0 0.0
        %2629 = vmatprep.subr.mxu0 0.0
        %2630 = vmatpush1.msra.mxu0 0.0
        %2631 = vmatprep.subr.mxu0 0.0
        %2632 = vmatpush1.msra.mxu0 0.0
        %2633 = vmatprep.subr.mxu0 0.0
        %2634 = vmatpush1.msra.mxu0 0.0
        %2635 = vmatprep.subr.mxu0 0.0
        %2636 = vmatpush1.msra.mxu0 0.0
        %2637 = vmatprep.subr.mxu0 0.0
        %2638 = vmatpush1.msra.mxu0 0.0
        %2639 = vmatprep.subr.mxu0 0.0
        %2640 = vmatpush1.msra.mxu0 0.0
        %2641 = vmatprep.subr.mxu0 0.0
        %2642 = vmatpush1.msra.mxu0 0.0
        %2643 = vmatprep.subr.mxu0 0.0
        %2644 = vmatpush1.msra.mxu0 0.0
        %2645 = vmatprep.subr.mxu0 0.0
        %2646 = vmatpush1.msra.mxu0 0.0
        %2647 = vmatprep.subr.mxu0 0.0
        %2648 = vmatpush1.msra.mxu0 0.0
        %2649 = vmatprep.subr.mxu0 0.0
        %2650 = vmatpush1.msra.mxu0 0.0
        %2651 = vmatprep.subr.mxu0 0.0
        %2652 = vmatpush1.msra.mxu0 0.0
        %2653 = vmatprep.subr.mxu0 0.0
        %2654 = vmatpush1.msra.mxu0 0.0
        %2655 = vmatprep.subr.mxu0 0.0
        %2656 = vmatpush1.msra.mxu0 0.0
        %2657 = vmatprep.subr.mxu0 0.0
        %2658 = vmatpush1.msra.mxu0 0.0
        %2659 = vmatprep.subr.mxu0 0.0
        %2660 = vmatpush1.msra.mxu0 0.0
        %2661 = vmatprep.subr.mxu0 0.0
        %2662 = vmatpush1.msra.mxu0 0.0
        %2663 = vmatprep.subr.mxu0 0.0
        %2664 = vmatpush1.msra.mxu0 0.0
        %2665 = vmatprep.subr.mxu0 0.0
        %2666 = vmatpush1.msra.mxu0 0.0
        %2667 = vmatprep.subr.mxu0 0.0
        %2668 = vmatpush1.msra.mxu0 0.0
        %2669 = vmatprep.mubr.f32.mxu0 0.0
        %2670 = vmatmul.mubr.f32.gmra.mrb[0].mxu0 %v2390
        %v2671 = vpop.f32.mrb[0].mxu0
        %v2672 = vadd.f32 %v2336, %v2671
        %v2673 = vpop.f32.mrb[0].mxu0
        %v2674 = vadd.f32 %v2340, %v2673
        %2675 = vdwg.mxu0
        %2676 = vmatprep.subr.mxu0 %v2250
        %2677 = vmatpush1.msra.mxu0 %v2249
        %2678 = vmatprep.subr.mxu0 %v2266
        %2679 = vmatpush1.msra.mxu0 %v2265
        %2680 = vmatprep.subr.mxu0 %v2282
        %2681 = vmatpush1.msra.mxu0 %v2281
        %2682 = vmatprep.subr.mxu0 %v2298
        %2683 = vmatpush1.msra.mxu0 %v2297
        %2684 = vmatprep.subr.mxu0 0.0
        %2685 = vmatpush1.msra.mxu0 0.0
        %2686 = vmatprep.subr.mxu0 0.0
        %2687 = vmatpush1.msra.mxu0 0.0
        %2688 = vmatprep.subr.mxu0 0.0
        %2689 = vmatpush1.msra.mxu0 0.0
        %2690 = vmatprep.subr.mxu0 0.0
        %2691 = vmatpush1.msra.mxu0 0.0
        %2692 = vmatprep.subr.mxu0 0.0
        %2693 = vmatpush1.msra.mxu0 0.0
        %2694 = vmatprep.subr.mxu0 0.0
        %2695 = vmatpush1.msra.mxu0 0.0
        %2696 = vmatprep.subr.mxu0 0.0
        %2697 = vmatpush1.msra.mxu0 0.0
        %2698 = vmatprep.subr.mxu0 0.0
        %2699 = vmatpush1.msra.mxu0 0.0
        %2700 = vmatprep.subr.mxu0 0.0
        %2701 = vmatpush1.msra.mxu0 0.0
        %2702 = vmatprep.subr.mxu0 0.0
        %2703 = vmatpush1.msra.mxu0 0.0
        %2704 = vmatprep.subr.mxu0 0.0
        %2705 = vmatpush1.msra.mxu0 0.0
        %2706 = vmatprep.subr.mxu0 0.0
        %2707 = vmatpush1.msra.mxu0 0.0
        %2708 = vmatprep.subr.mxu0 0.0
        %2709 = vmatpush1.msra.mxu0 0.0
        %2710 = vmatprep.subr.mxu0 0.0
        %2711 = vmatpush1.msra.mxu0 0.0
        %2712 = vmatprep.subr.mxu0 0.0
        %2713 = vmatpush1.msra.mxu0 0.0
        %2714 = vmatprep.subr.mxu0 0.0
        %2715 = vmatpush1.msra.mxu0 0.0
        %2716 = vmatprep.subr.mxu0 0.0
        %2717 = vmatpush1.msra.mxu0 0.0
        %2718 = vmatprep.subr.mxu0 0.0
        %2719 = vmatpush1.msra.mxu0 0.0
        %2720 = vmatprep.subr.mxu0 0.0
        %2721 = vmatpush1.msra.mxu0 0.0
        %2722 = vmatprep.subr.mxu0 0.0
        %2723 = vmatpush1.msra.mxu0 0.0
        %2724 = vmatprep.subr.mxu0 0.0
        %2725 = vmatpush1.msra.mxu0 0.0
        %2726 = vmatprep.subr.mxu0 0.0
        %2727 = vmatpush1.msra.mxu0 0.0
        %2728 = vmatprep.subr.mxu0 0.0
        %2729 = vmatpush1.msra.mxu0 0.0
        %2730 = vmatprep.subr.mxu0 0.0
        %2731 = vmatpush1.msra.mxu0 0.0
        %2732 = vmatprep.subr.mxu0 0.0
        %2733 = vmatpush1.msra.mxu0 0.0
        %2734 = vmatprep.subr.mxu0 0.0
        %2735 = vmatpush1.msra.mxu0 0.0
        %2736 = vmatprep.subr.mxu0 0.0
        %2737 = vmatpush1.msra.mxu0 0.0
        %2738 = vmatprep.subr.mxu0 0.0
        %2739 = vmatpush1.msra.mxu0 0.0
        %2740 = vmatprep.mubr.f32.mxu0 0.0
        %2741 = vmatmul.mubr.f32.gmra.mrb[0].mxu0 %v2390
        %v2742 = vpop.f32.mrb[0].mxu0
        %v2743 = vadd.f32 %v2344, %v2742
        %v2744 = vpop.f32.mrb[0].mxu0
        %v2745 = vadd.f32 %v2348, %v2744
        %2746 = vdwg.mxu0
        %2747 = vmatprep.subr.mxu0 %v2252
        %2748 = vmatpush1.msra.mxu0 %v2251
        %2749 = vmatprep.subr.mxu0 %v2268
        %2750 = vmatpush1.msra.mxu0 %v2267
        %2751 = vmatprep.subr.mxu0 %v2284
        %2752 = vmatpush1.msra.mxu0 %v2283
        %2753 = vmatprep.subr.mxu0 %v2300
        %2754 = vmatpush1.msra.mxu0 %v2299
        %2755 = vmatprep.subr.mxu0 0.0
        %2756 = vmatpush1.msra.mxu0 0.0
        %2757 = vmatprep.subr.mxu0 0.0
        %2758 = vmatpush1.msra.mxu0 0.0
        %2759 = vmatprep.subr.mxu0 0.0
        %2760 = vmatpush1.msra.mxu0 0.0
        %2761 = vmatprep.subr.mxu0 0.0
        %2762 = vmatpush1.msra.mxu0 0.0
        %2763 = vmatprep.subr.mxu0 0.0
        %2764 = vmatpush1.msra.mxu0 0.0
        %2765 = vmatprep.subr.mxu0 0.0
        %2766 = vmatpush1.msra.mxu0 0.0
        %2767 = vmatprep.subr.mxu0 0.0
        %2768 = vmatpush1.msra.mxu0 0.0
        %2769 = vmatprep.subr.mxu0 0.0
        %2770 = vmatpush1.msra.mxu0 0.0
        %2771 = vmatprep.subr.mxu0 0.0
        %2772 = vmatpush1.msra.mxu0 0.0
        %2773 = vmatprep.subr.mxu0 0.0
        %2774 = vmatpush1.msra.mxu0 0.0
        %2775 = vmatprep.subr.mxu0 0.0
        %2776 = vmatpush1.msra.mxu0 0.0
        %2777 = vmatprep.subr.mxu0 0.0
        %2778 = vmatpush1.msra.mxu0 0.0
        %2779 = vmatprep.subr.mxu0 0.0
        %2780 = vmatpush1.msra.mxu0 0.0
        %2781 = vmatprep.subr.mxu0 0.0
        %2782 = vmatpush1.msra.mxu0 0.0
        %2783 = vmatprep.subr.mxu0 0.0
        %2784 = vmatpush1.msra.mxu0 0.0
        %2785 = vmatprep.subr.mxu0 0.0
        %2786 = vmatpush1.msra.mxu0 0.0
        %2787 = vmatprep.subr.mxu0 0.0
        %2788 = vmatpush1.msra.mxu0 0.0
        %2789 = vmatprep.subr.mxu0 0.0
        %2790 = vmatpush1.msra.mxu0 0.0
        %2791 = vmatprep.subr.mxu0 0.0
        %2792 = vmatpush1.msra.mxu0 0.0
        %2793 = vmatprep.subr.mxu0 0.0
        %2794 = vmatpush1.msra.mxu0 0.0
        %2795 = vmatprep.subr.mxu0 0.0
        %2796 = vmatpush1.msra.mxu0 0.0
        %2797 = vmatprep.subr.mxu0 0.0
        %2798 = vmatpush1.msra.mxu0 0.0
        %2799 = vmatprep.subr.mxu0 0.0
        %2800 = vmatpush1.msra.mxu0 0.0
        %2801 = vmatprep.subr.mxu0 0.0
        %2802 = vmatpush1.msra.mxu0 0.0
        %2803 = vmatprep.subr.mxu0 0.0
        %2804 = vmatpush1.msra.mxu0 0.0
        %2805 = vmatprep.subr.mxu0 0.0
        %2806 = vmatpush1.msra.mxu0 0.0
        %2807 = vmatprep.subr.mxu0 0.0
        %2808 = vmatpush1.msra.mxu0 0.0
        %2809 = vmatprep.subr.mxu0 0.0
        %2810 = vmatpush1.msra.mxu0 0.0
        %2811 = vmatprep.mubr.f32.mxu0 0.0
        %2812 = vmatmul.mubr.f32.gmra.mrb[0].mxu0 %v2390
        %v2813 = vpop.f32.mrb[0].mxu0
        %v2814 = vadd.f32 %v2352, %v2813
        %v2815 = vpop.f32.mrb[0].mxu0
        %v2816 = vadd.f32 %v2356, %v2815
        %2817 = vdwg.mxu0
        %2818 = vmatprep.subr.mxu0 %v2254
        %2819 = vmatpush1.msra.mxu0 %v2253
        %2820 = vmatprep.subr.mxu0 %v2270
        %2821 = vmatpush1.msra.mxu0 %v2269
        %2822 = vmatprep.subr.mxu0 %v2286
        %2823 = vmatpush1.msra.mxu0 %v2285
        %2824 = vmatprep.subr.mxu0 %v2302
        %2825 = vmatpush1.msra.mxu0 %v2301
        %2826 = vmatprep.subr.mxu0 0.0
        %2827 = vmatpush1.msra.mxu0 0.0
        %2828 = vmatprep.subr.mxu0 0.0
        %2829 = vmatpush1.msra.mxu0 0.0
        %2830 = vmatprep.subr.mxu0 0.0
        %2831 = vmatpush1.msra.mxu0 0.0
        %2832 = vmatprep.subr.mxu0 0.0
        %2833 = vmatpush1.msra.mxu0 0.0
        %2834 = vmatprep.subr.mxu0 0.0
        %2835 = vmatpush1.msra.mxu0 0.0
        %2836 = vmatprep.subr.mxu0 0.0
        %2837 = vmatpush1.msra.mxu0 0.0
        %2838 = vmatprep.subr.mxu0 0.0
        %2839 = vmatpush1.msra.mxu0 0.0
        %2840 = vmatprep.subr.mxu0 0.0
        %2841 = vmatpush1.msra.mxu0 0.0
        %2842 = vmatprep.subr.mxu0 0.0
        %2843 = vmatpush1.msra.mxu0 0.0
        %2844 = vmatprep.subr.mxu0 0.0
        %2845 = vmatpush1.msra.mxu0 0.0
        %2846 = vmatprep.subr.mxu0 0.0
        %2847 = vmatpush1.msra.mxu0 0.0
        %2848 = vmatprep.subr.mxu0 0.0
        %2849 = vmatpush1.msra.mxu0 0.0
        %2850 = vmatprep.subr.mxu0 0.0
        %2851 = vmatpush1.msra.mxu0 0.0
        %2852 = vmatprep.subr.mxu0 0.0
        %2853 = vmatpush1.msra.mxu0 0.0
        %2854 = vmatprep.subr.mxu0 0.0
        %2855 = vmatpush1.msra.mxu0 0.0
        %2856 = vmatprep.subr.mxu0 0.0
        %2857 = vmatpush1.msra.mxu0 0.0
        %2858 = vmatprep.subr.mxu0 0.0
        %2859 = vmatpush1.msra.mxu0 0.0
        %2860 = vmatprep.subr.mxu0 0.0
        %2861 = vmatpush1.msra.mxu0 0.0
        %2862 = vmatprep.subr.mxu0 0.0
        %2863 = vmatpush1.msra.mxu0 0.0
        %2864 = vmatprep.subr.mxu0 0.0
        %2865 = vmatpush1.msra.mxu0 0.0
        %2866 = vmatprep.subr.mxu0 0.0
        %2867 = vmatpush1.msra.mxu0 0.0
        %2868 = vmatprep.subr.mxu0 0.0
        %2869 = vmatpush1.msra.mxu0 0.0
        %2870 = vmatprep.subr.mxu0 0.0
        %2871 = vmatpush1.msra.mxu0 0.0
        %2872 = vmatprep.subr.mxu0 0.0
        %2873 = vmatpush1.msra.mxu0 0.0
        %2874 = vmatprep.subr.mxu0 0.0
        %2875 = vmatpush1.msra.mxu0 0.0
        %2876 = vmatprep.subr.mxu0 0.0
        %2877 = vmatpush1.msra.mxu0 0.0
        %2878 = vmatprep.subr.mxu0 0.0
        %2879 = vmatpush1.msra.mxu0 0.0
        %2880 = vmatprep.subr.mxu0 0.0
        %2881 = vmatpush1.msra.mxu0 0.0
        %2882 = vmatprep.mubr.f32.mxu0 0.0
        %2883 = vmatmul.mubr.f32.gmra.mrb[0].mxu0 %v2390
        %v2884 = vpop.f32.mrb[0].mxu0
        %v2885 = vadd.f32 %v2360, %v2884
        %v2886 = vpop.f32.mrb[0].mxu0
        %v2887 = vadd.f32 %v2364, %v2886
        %2888 = vdwg.mxu0
        %2889 = vmatprep.subr.mxu0 %v2256
        %2890 = vmatpush1.msra.mxu0 %v2255
        %2891 = vmatprep.subr.mxu0 %v2272
        %2892 = vmatpush1.msra.mxu0 %v2271
        %2893 = vmatprep.subr.mxu0 %v2288
        %2894 = vmatpush1.msra.mxu0 %v2287
        %2895 = vmatprep.subr.mxu0 %v2304
        %2896 = vmatpush1.msra.mxu0 %v2303
        %2897 = vmatprep.subr.mxu0 0.0
        %2898 = vmatpush1.msra.mxu0 0.0
        %2899 = vmatprep.subr.mxu0 0.0
        %2900 = vmatpush1.msra.mxu0 0.0
        %2901 = vmatprep.subr.mxu0 0.0
        %2902 = vmatpush1.msra.mxu0 0.0
        %2903 = vmatprep.subr.mxu0 0.0
        %2904 = vmatpush1.msra.mxu0 0.0
        %2905 = vmatprep.subr.mxu0 0.0
        %2906 = vmatpush1.msra.mxu0 0.0
        %2907 = vmatprep.subr.mxu0 0.0
        %2908 = vmatpush1.msra.mxu0 0.0
        %2909 = vmatprep.subr.mxu0 0.0
        %2910 = vmatpush1.msra.mxu0 0.0
        %2911 = vmatprep.subr.mxu0 0.0
        %2912 = vmatpush1.msra.mxu0 0.0
        %2913 = vmatprep.subr.mxu0 0.0
        %2914 = vmatpush1.msra.mxu0 0.0
        %2915 = vmatprep.subr.mxu0 0.0
        %2916 = vmatpush1.msra.mxu0 0.0
        %2917 = vmatprep.subr.mxu0 0.0
        %2918 = vmatpush1.msra.mxu0 0.0
        %2919 = vmatprep.subr.mxu0 0.0
        %2920 = vmatpush1.msra.mxu0 0.0
        %2921 = vmatprep.subr.mxu0 0.0
        %2922 = vmatpush1.msra.mxu0 0.0
        %2923 = vmatprep.subr.mxu0 0.0
        %2924 = vmatpush1.msra.mxu0 0.0
        %2925 = vmatprep.subr.mxu0 0.0
        %2926 = vmatpush1.msra.mxu0 0.0
        %2927 = vmatprep.subr.mxu0 0.0
        %2928 = vmatpush1.msra.mxu0 0.0
        %2929 = vmatprep.subr.mxu0 0.0
        %2930 = vmatpush1.msra.mxu0 0.0
        %2931 = vmatprep.subr.mxu0 0.0
        %2932 = vmatpush1.msra.mxu0 0.0
        %2933 = vmatprep.subr.mxu0 0.0
        %2934 = vmatpush1.msra.mxu0 0.0
        %2935 = vmatprep.subr.mxu0 0.0
        %2936 = vmatpush1.msra.mxu0 0.0
        %2937 = vmatprep.subr.mxu0 0.0
        %2938 = vmatpush1.msra.mxu0 0.0
        %2939 = vmatprep.subr.mxu0 0.0
        %2940 = vmatpush1.msra.mxu0 0.0
        %2941 = vmatprep.subr.mxu0 0.0
        %2942 = vmatpush1.msra.mxu0 0.0
        %2943 = vmatprep.subr.mxu0 0.0
        %2944 = vmatpush1.msra.mxu0 0.0
        %2945 = vmatprep.subr.mxu0 0.0
        %2946 = vmatpush1.msra.mxu0 0.0
        %2947 = vmatprep.subr.mxu0 0.0
        %2948 = vmatpush1.msra.mxu0 0.0
        %2949 = vmatprep.subr.mxu0 0.0
        %2950 = vmatpush1.msra.mxu0 0.0
        %2951 = vmatprep.subr.mxu0 0.0
        %2952 = vmatpush1.msra.mxu0 0.0
        %2953 = vmatprep.mubr.f32.mxu0 0.0
        %2954 = vmatmul.mubr.f32.gmra.mrb[0].mxu0 %v2390
        %v2955 = vpop.f32.mrb[0].mxu0
        %v2956 = vadd.f32 %v2368, %v2955
        %v2957 = vpop.f32.mrb[0].mxu0
        %v2958 = vadd.f32 %v2372, %v2957
        %2959 = vdwg.mxu0
        %v2960 = vmax.f32 %v2459, 0.0
        %v2961 = vmax.f32 %v2461, 0.0
        %v2962 = vmax.f32 %v2530, 0.0
        %v2963 = vmax.f32 %v2532, 0.0
        %v2964 = vmax.f32 %v2601, 0.0
        %v2965 = vmax.f32 %v2603, 0.0
        %v2966 = vmax.f32 %v2672, 0.0
        %v2967 = vmax.f32 %v2674, 0.0
        %v2968 = vmax.f32 %v2743, 0.0
        %v2969 = vmax.f32 %v2745, 0.0
        %v2970 = vmax.f32 %v2814, 0.0
        %v2971 = vmax.f32 %v2816, 0.0
        %v2972 = vmax.f32 %v2885, 0.0
        %v2973 = vmax.f32 %v2887, 0.0
        %v2974 = vmax.f32 %v2956, 0.0
        %v2975 = vmax.f32 %v2958, 0.0
        %v2976 = vld [vmem:[%s61] sm:$0xff]
        %v2977 = vld [vmem:[%s61 + $0x8] sm:$0xff]
        %v2978 = vld [vmem:[%s61 + $0x10] sm:$0xff]
        %v2979 = vld [vmem:[%s61 + $0x18] sm:$0xff]
        %v2980 = vld [vmem:[%s61 + $0x20] sm:$0xff]
        %v2981 = vld [vmem:[%s61 + $0x28] sm:$0xff]
        %v2982 = vld [vmem:[%s61 + $0x30] sm:$0xff]
        %v2983 = vld [vmem:[%s61 + $0x38] sm:$0xff]
        %v2984 = vld [vmem:[%s61 + $0x40] sm:$0xff]
        %v2985 = vld [vmem:[%s61 + $0x48] sm:$0xff]
        %v2986 = vld [vmem:[%s61 + $0x50] sm:$0xff]
        %v2987 = vld [vmem:[%s61 + $0x58] sm:$0xff]
        %v2988 = vld [vmem:[%s61 + $0x60] sm:$0xff]
        %v2989 = vld [vmem:[%s61 + $0x68] sm:$0xff]
        %v2990 = vld [vmem:[%s61 + $0x70] sm:$0xff]
        %v2991 = vld [vmem:[%s61 + $0x78] sm:$0xff]
        %v2992 = vld [vmem:[%s61 + $0x80] sm:$0xff]
        %v2993 = vld [vmem:[%s61 + $0x88] sm:$0xff]
        %v2994 = vld [vmem:[%s61 + $0x90] sm:$0xff]
        %v2995 = vld [vmem:[%s61 + $0x98] sm:$0xff]
        %v2996 = vld [vmem:[%s61 + $0xa0] sm:$0xff]
        %v2997 = vld [vmem:[%s61 + $0xa8] sm:$0xff]
        %v2998 = vld [vmem:[%s61 + $0xb0] sm:$0xff]
        %v2999 = vld [vmem:[%s61 + $0xb8] sm:$0xff]
        %v3000 = vld [vmem:[%s61 + $0xc0] sm:$0xff]
        %v3001 = vld [vmem:[%s61 + $0xc8] sm:$0xff]
        %v3002 = vld [vmem:[%s61 + $0xd0] sm:$0xff]
        %v3003 = vld [vmem:[%s61 + $0xd8] sm:$0xff]
        %v3004 = vld [vmem:[%s61 + $0xe0] sm:$0xff]
        %v3005 = vld [vmem:[%s61 + $0xe8] sm:$0xff]
        %v3006 = vld [vmem:[%s61 + $0xf0] sm:$0xff]
        %v3007 = vld [vmem:[%s61 + $0xf8] sm:$0xff]
        %v3008 = vld [vmem:[%s61 + $0x100] sm:$0xff]
        %v3009 = vld [vmem:[%s61 + $0x108] sm:$0xff]
        %v3010 = vld [vmem:[%s61 + $0x110] sm:$0xff]
        %v3011 = vld [vmem:[%s61 + $0x118] sm:$0xff]
        %v3012 = vld [vmem:[%s61 + $0x120] sm:$0xff]
        %v3013 = vld [vmem:[%s61 + $0x128] sm:$0xff]
        %v3014 = vld [vmem:[%s61 + $0x130] sm:$0xff]
        %v3015 = vld [vmem:[%s61 + $0x138] sm:$0xff]
        %v3016 = vld [vmem:[%s61 + $0x140] sm:$0xff]
        %v3017 = vld [vmem:[%s61 + $0x148] sm:$0xff]
        %v3018 = vld [vmem:[%s61 + $0x150] sm:$0xff]
        %v3019 = vld [vmem:[%s61 + $0x158] sm:$0xff]
        %v3020 = vld [vmem:[%s61 + $0x160] sm:$0xff]
        %v3021 = vld [vmem:[%s61 + $0x168] sm:$0xff]
        %v3022 = vld [vmem:[%s61 + $0x170] sm:$0xff]
        %v3023 = vld [vmem:[%s61 + $0x178] sm:$0xff]
        %v3024 = vld [vmem:[%s61 + $0x180] sm:$0xff]
        %v3025 = vld [vmem:[%s61 + $0x188] sm:$0xff]
        %v3026 = vld [vmem:[%s61 + $0x190] sm:$0xff]
        %v3027 = vld [vmem:[%s61 + $0x198] sm:$0xff]
        %v3028 = vld [vmem:[%s61 + $0x1a0] sm:$0xff]
        %v3029 = vld [vmem:[%s61 + $0x1a8] sm:$0xff]
        %v3030 = vld [vmem:[%s61 + $0x1b0] sm:$0xff]
        %v3031 = vld [vmem:[%s61 + $0x1b8] sm:$0xff]
        %v3032 = vld [vmem:[%s61 + $0x1c0] sm:$0xff]
        %v3033 = vld [vmem:[%s61 + $0x1c8] sm:$0xff]
        %v3034 = vld [vmem:[%s61 + $0x1d0] sm:$0xff]
        %v3035 = vld [vmem:[%s61 + $0x1d8] sm:$0xff]
        %v3036 = vld [vmem:[%s61 + $0x1e0] sm:$0xff]
        %v3037 = vld [vmem:[%s61 + $0x1e8] sm:$0xff]
        %v3038 = vld [vmem:[%s61 + $0x1f0] sm:$0xff]
        %v3039 = vld [vmem:[%s61 + $0x1f8] sm:$0xff]
        %v3040 = vld [vmem:[%s61 + $0x200] sm:$0xff]
        %v3041 = vld [vmem:[%s61 + $0x208] sm:$0xff]
        %v3042 = vld [vmem:[%s61 + $0x210] sm:$0xff]
        %v3043 = vld [vmem:[%s61 + $0x218] sm:$0xff]
        %v3044 = vld [vmem:[%s61 + $0x220] sm:$0xff]
        %v3045 = vld [vmem:[%s61 + $0x228] sm:$0xff]
        %v3046 = vld [vmem:[%s61 + $0x230] sm:$0xff]
        %v3047 = vld [vmem:[%s61 + $0x238] sm:$0xff]
        %v3048 = vld [vmem:[%s61 + $0x240] sm:$0xff]
        %v3049 = vld [vmem:[%s61 + $0x248] sm:$0xff]
        %v3050 = vld [vmem:[%s61 + $0x250] sm:$0xff]
        %v3051 = vld [vmem:[%s61 + $0x258] sm:$0xff]
        %v3052 = vld [vmem:[%s61 + $0x260] sm:$0xff]
        %v3053 = vld [vmem:[%s61 + $0x268] sm:$0xff]
        %v3054 = vld [vmem:[%s61 + $0x270] sm:$0xff]
        %v3055 = vld [vmem:[%s61 + $0x278] sm:$0xff]
        %v3056 = vld [vmem:[%s61 + $0x280] sm:$0xff]
        %v3057 = vld [vmem:[%s61 + $0x288] sm:$0xff]
        %v3058 = vld [vmem:[%s61 + $0x290] sm:$0xff]
        %v3059 = vld [vmem:[%s61 + $0x298] sm:$0xff]
        %v3060 = vld [vmem:[%s61 + $0x2a0] sm:$0xff]
        %v3061 = vld [vmem:[%s61 + $0x2a8] sm:$0xff]
        %v3062 = vld [vmem:[%s61 + $0x2b0] sm:$0xff]
        %v3063 = vld [vmem:[%s61 + $0x2b8] sm:$0xff]
        %v3064 = vld [vmem:[%s61 + $0x2c0] sm:$0xff]
        %v3065 = vld [vmem:[%s61 + $0x2c8] sm:$0xff]
        %v3066 = vld [vmem:[%s61 + $0x2d0] sm:$0xff]
        %v3067 = vld [vmem:[%s61 + $0x2d8] sm:$0xff]
        %v3068 = vld [vmem:[%s61 + $0x2e0] sm:$0xff]
        %v3069 = vld [vmem:[%s61 + $0x2e8] sm:$0xff]
        %v3070 = vld [vmem:[%s61 + $0x2f0] sm:$0xff]
        %v3071 = vld [vmem:[%s61 + $0x2f8] sm:$0xff]
        %v3072 = vld [vmem:[%s61 + $0x300] sm:$0xff]
        %v3073 = vld [vmem:[%s61 + $0x308] sm:$0xff]
        %v3074 = vld [vmem:[%s61 + $0x310] sm:$0xff]
        %v3075 = vld [vmem:[%s61 + $0x318] sm:$0xff]
        %v3076 = vld [vmem:[%s61 + $0x320] sm:$0xff]
        %v3077 = vld [vmem:[%s61 + $0x328] sm:$0xff]
        %v3078 = vld [vmem:[%s61 + $0x330] sm:$0xff]
        %v3079 = vld [vmem:[%s61 + $0x338] sm:$0xff]
        %v3080 = vld [vmem:[%s61 + $0x340] sm:$0xff]
        %v3081 = vld [vmem:[%s61 + $0x348] sm:$0xff]
        %v3082 = vld [vmem:[%s61 + $0x350] sm:$0xff]
        %v3083 = vld [vmem:[%s61 + $0x358] sm:$0xff]
        %v3084 = vld [vmem:[%s61 + $0x360] sm:$0xff]
        %v3085 = vld [vmem:[%s61 + $0x368] sm:$0xff]
        %v3086 = vld [vmem:[%s61 + $0x370] sm:$0xff]
        %v3087 = vld [vmem:[%s61 + $0x378] sm:$0xff]
        %v3088 = vld [vmem:[%s61 + $0x380] sm:$0xff]
        %v3089 = vld [vmem:[%s61 + $0x388] sm:$0xff]
        %v3090 = vld [vmem:[%s61 + $0x390] sm:$0xff]
        %v3091 = vld [vmem:[%s61 + $0x398] sm:$0xff]
        %v3092 = vld [vmem:[%s61 + $0x3a0] sm:$0xff]
        %v3093 = vld [vmem:[%s61 + $0x3a8] sm:$0xff]
        %v3094 = vld [vmem:[%s61 + $0x3b0] sm:$0xff]
        %v3095 = vld [vmem:[%s61 + $0x3b8] sm:$0xff]
        %v3096 = vld [vmem:[%s61 + $0x3c0] sm:$0xff]
        %v3097 = vld [vmem:[%s61 + $0x3c8] sm:$0xff]
        %v3098 = vld [vmem:[%s61 + $0x3d0] sm:$0xff]
        %v3099 = vld [vmem:[%s61 + $0x3d8] sm:$0xff]
        %v3100 = vld [vmem:[%s61 + $0x3e0] sm:$0xff]
        %v3101 = vld [vmem:[%s61 + $0x3e8] sm:$0xff]
        %v3102 = vld [vmem:[%s61 + $0x3f0] sm:$0xff]
        %v3103 = vld [vmem:[%s61 + $0x3f8] sm:$0xff]
        %v3104 = vld [vmem:[%s61 + $0x400] sm:$0xff]
        %v3105 = vld [vmem:[%s61 + $0x408] sm:$0xff]
        %v3106 = vld [vmem:[%s61 + $0x410] sm:$0xff]
        %v3107 = vld [vmem:[%s61 + $0x418] sm:$0xff]
        %v3108 = vld [vmem:[%s61 + $0x420] sm:$0xff]
        %v3109 = vld [vmem:[%s61 + $0x428] sm:$0xff]
        %v3110 = vld [vmem:[%s61 + $0x430] sm:$0xff]
        %v3111 = vld [vmem:[%s61 + $0x438] sm:$0xff]
        %v3112 = vld [vmem:[%s61 + $0x440] sm:$0xff]
        %v3113 = vld [vmem:[%s61 + $0x448] sm:$0xff]
        %v3114 = vld [vmem:[%s61 + $0x450] sm:$0xff]
        %v3115 = vld [vmem:[%s61 + $0x458] sm:$0xff]
        %v3116 = vld [vmem:[%s61 + $0x460] sm:$0xff]
        %v3117 = vld [vmem:[%s61 + $0x468] sm:$0xff]
        %v3118 = vld [vmem:[%s61 + $0x470] sm:$0xff]
        %v3119 = vld [vmem:[%s61 + $0x478] sm:$0xff]
        %v3120 = vld [vmem:[%s61 + $0x480] sm:$0xff]
        %v3121 = vld [vmem:[%s61 + $0x488] sm:$0xff]
        %v3122 = vld [vmem:[%s61 + $0x490] sm:$0xff]
        %v3123 = vld [vmem:[%s61 + $0x498] sm:$0xff]
        %v3124 = vld [vmem:[%s61 + $0x4a0] sm:$0xff]
        %v3125 = vld [vmem:[%s61 + $0x4a8] sm:$0xff]
        %v3126 = vld [vmem:[%s61 + $0x4b0] sm:$0xff]
        %v3127 = vld [vmem:[%s61 + $0x4b8] sm:$0xff]
        %v3128 = vld [vmem:[%s61 + $0x4c0] sm:$0xff]
        %v3129 = vld [vmem:[%s61 + $0x4c8] sm:$0xff]
        %v3130 = vld [vmem:[%s61 + $0x4d0] sm:$0xff]
        %v3131 = vld [vmem:[%s61 + $0x4d8] sm:$0xff]
        %v3132 = vld [vmem:[%s61 + $0x4e0] sm:$0xff]
        %v3133 = vld [vmem:[%s61 + $0x4e8] sm:$0xff]
        %v3134 = vld [vmem:[%s61 + $0x4f0] sm:$0xff]
        %v3135 = vld [vmem:[%s61 + $0x4f8] sm:$0xff]
        %v3136 = vld [vmem:[%s61 + $0x500] sm:$0xff]
        %v3137 = vld [vmem:[%s61 + $0x508] sm:$0xff]
        %v3138 = vld [vmem:[%s61 + $0x510] sm:$0xff]
        %v3139 = vld [vmem:[%s61 + $0x518] sm:$0xff]
        %v3140 = vld [vmem:[%s61 + $0x520] sm:$0xff]
        %v3141 = vld [vmem:[%s61 + $0x528] sm:$0xff]
        %v3142 = vld [vmem:[%s61 + $0x530] sm:$0xff]
        %v3143 = vld [vmem:[%s61 + $0x538] sm:$0xff]
        %v3144 = vld [vmem:[%s61 + $0x540] sm:$0xff]
        %v3145 = vld [vmem:[%s61 + $0x548] sm:$0xff]
        %v3146 = vld [vmem:[%s61 + $0x550] sm:$0xff]
        %v3147 = vld [vmem:[%s61 + $0x558] sm:$0xff]
        %v3148 = vld [vmem:[%s61 + $0x560] sm:$0xff]
        %v3149 = vld [vmem:[%s61 + $0x568] sm:$0xff]
        %v3150 = vld [vmem:[%s61 + $0x570] sm:$0xff]
        %v3151 = vld [vmem:[%s61 + $0x578] sm:$0xff]
        %v3152 = vld [vmem:[%s61 + $0x580] sm:$0xff]
        %v3153 = vld [vmem:[%s61 + $0x588] sm:$0xff]
        %v3154 = vld [vmem:[%s61 + $0x590] sm:$0xff]
        %v3155 = vld [vmem:[%s61 + $0x598] sm:$0xff]
        %v3156 = vld [vmem:[%s61 + $0x5a0] sm:$0xff]
        %v3157 = vld [vmem:[%s61 + $0x5a8] sm:$0xff]
        %v3158 = vld [vmem:[%s61 + $0x5b0] sm:$0xff]
        %v3159 = vld [vmem:[%s61 + $0x5b8] sm:$0xff]
        %v3160 = vld [vmem:[%s61 + $0x5c0] sm:$0xff]
        %v3161 = vld [vmem:[%s61 + $0x5c8] sm:$0xff]
        %v3162 = vld [vmem:[%s61 + $0x5d0] sm:$0xff]
        %v3163 = vld [vmem:[%s61 + $0x5d8] sm:$0xff]
        %v3164 = vld [vmem:[%s61 + $0x5e0] sm:$0xff]
        %v3165 = vld [vmem:[%s61 + $0x5e8] sm:$0xff]
        %v3166 = vld [vmem:[%s61 + $0x5f0] sm:$0xff]
        %v3167 = vld [vmem:[%s61 + $0x5f8] sm:$0xff]
        %v3168 = vld [vmem:[%s61 + $0x600] sm:$0xff]
        %v3169 = vld [vmem:[%s61 + $0x608] sm:$0xff]
        %v3170 = vld [vmem:[%s61 + $0x610] sm:$0xff]
        %v3171 = vld [vmem:[%s61 + $0x618] sm:$0xff]
        %v3172 = vld [vmem:[%s61 + $0x620] sm:$0xff]
        %v3173 = vld [vmem:[%s61 + $0x628] sm:$0xff]
        %v3174 = vld [vmem:[%s61 + $0x630] sm:$0xff]
        %v3175 = vld [vmem:[%s61 + $0x638] sm:$0xff]
        %v3176 = vld [vmem:[%s61 + $0x640] sm:$0xff]
        %v3177 = vld [vmem:[%s61 + $0x648] sm:$0xff]
        %v3178 = vld [vmem:[%s61 + $0x650] sm:$0xff]
        %v3179 = vld [vmem:[%s61 + $0x658] sm:$0xff]
        %v3180 = vld [vmem:[%s61 + $0x660] sm:$0xff]
        %v3181 = vld [vmem:[%s61 + $0x668] sm:$0xff]
        %v3182 = vld [vmem:[%s61 + $0x670] sm:$0xff]
        %v3183 = vld [vmem:[%s61 + $0x678] sm:$0xff]
        %v3184 = vld [vmem:[%s61 + $0x680] sm:$0xff]
        %v3185 = vld [vmem:[%s61 + $0x688] sm:$0xff]
        %v3186 = vld [vmem:[%s61 + $0x690] sm:$0xff]
        %v3187 = vld [vmem:[%s61 + $0x698] sm:$0xff]
        %v3188 = vld [vmem:[%s61 + $0x6a0] sm:$0xff]
        %v3189 = vld [vmem:[%s61 + $0x6a8] sm:$0xff]
        %v3190 = vld [vmem:[%s61 + $0x6b0] sm:$0xff]
        %v3191 = vld [vmem:[%s61 + $0x6b8] sm:$0xff]
        %v3192 = vld [vmem:[%s61 + $0x6c0] sm:$0xff]
        %v3193 = vld [vmem:[%s61 + $0x6c8] sm:$0xff]
        %v3194 = vld [vmem:[%s61 + $0x6d0] sm:$0xff]
        %v3195 = vld [vmem:[%s61 + $0x6d8] sm:$0xff]
        %v3196 = vld [vmem:[%s61 + $0x6e0] sm:$0xff]
        %v3197 = vld [vmem:[%s61 + $0x6e8] sm:$0xff]
        %v3198 = vld [vmem:[%s61 + $0x6f0] sm:$0xff]
        %v3199 = vld [vmem:[%s61 + $0x6f8] sm:$0xff]
        %v3200 = vld [vmem:[%s61 + $0x700] sm:$0xff]
        %v3201 = vld [vmem:[%s61 + $0x708] sm:$0xff]
        %v3202 = vld [vmem:[%s61 + $0x710] sm:$0xff]
        %v3203 = vld [vmem:[%s61 + $0x718] sm:$0xff]
        %v3204 = vld [vmem:[%s61 + $0x720] sm:$0xff]
        %v3205 = vld [vmem:[%s61 + $0x728] sm:$0xff]
        %v3206 = vld [vmem:[%s61 + $0x730] sm:$0xff]
        %v3207 = vld [vmem:[%s61 + $0x738] sm:$0xff]
        %v3208 = vld [vmem:[%s61 + $0x740] sm:$0xff]
        %v3209 = vld [vmem:[%s61 + $0x748] sm:$0xff]
        %v3210 = vld [vmem:[%s61 + $0x750] sm:$0xff]
        %v3211 = vld [vmem:[%s61 + $0x758] sm:$0xff]
        %v3212 = vld [vmem:[%s61 + $0x760] sm:$0xff]
        %v3213 = vld [vmem:[%s61 + $0x768] sm:$0xff]
        %v3214 = vld [vmem:[%s61 + $0x770] sm:$0xff]
        %v3215 = vld [vmem:[%s61 + $0x778] sm:$0xff]
        %v3216 = vld [vmem:[%s61 + $0x780] sm:$0xff]
        %v3217 = vld [vmem:[%s61 + $0x788] sm:$0xff]
        %v3218 = vld [vmem:[%s61 + $0x790] sm:$0xff]
        %v3219 = vld [vmem:[%s61 + $0x798] sm:$0xff]
        %v3220 = vld [vmem:[%s61 + $0x7a0] sm:$0xff]
        %v3221 = vld [vmem:[%s61 + $0x7a8] sm:$0xff]
        %v3222 = vld [vmem:[%s61 + $0x7b0] sm:$0xff]
        %v3223 = vld [vmem:[%s61 + $0x7b8] sm:$0xff]
        %v3224 = vld [vmem:[%s61 + $0x7c0] sm:$0xff]
        %v3225 = vld [vmem:[%s61 + $0x7c8] sm:$0xff]
        %v3226 = vld [vmem:[%s61 + $0x7d0] sm:$0xff]
        %v3227 = vld [vmem:[%s61 + $0x7d8] sm:$0xff]
        %v3228 = vld [vmem:[%s61 + $0x7e0] sm:$0xff]
        %v3229 = vld [vmem:[%s61 + $0x7e8] sm:$0xff]
        %v3230 = vld [vmem:[%s61 + $0x7f0] sm:$0xff]
        %v3231 = vld [vmem:[%s61 + $0x7f8] sm:$0xff]
        %v3232 = vld [vmem:[%s63] sm:$0x1]
        %v3234 = vlaneseq
        %v3235 = vshrl.u32 %v3234, 7
        %v3236 = vsub.s32 0, %v3235
        %v3237 = vrot.slane %v3232, %v3236
        %3239 = vmatprep.subr.mxu0 0.0
        %3240 = vmatpush1.msra.mxu0 %v2976
        %3241 = vmatprep.subr.mxu0 0.0
        %3242 = vmatpush1.msra.mxu0 %v2977
        %3243 = vmatprep.subr.mxu0 0.0
        %3244 = vmatpush1.msra.mxu0 %v2978
        %3245 = vmatprep.subr.mxu0 0.0
        %3246 = vmatpush1.msra.mxu0 %v2979
        %3247 = vmatprep.subr.mxu0 0.0
        %3248 = vmatpush1.msra.mxu0 %v2980
        %3249 = vmatprep.subr.mxu0 0.0
        %3250 = vmatpush1.msra.mxu0 %v2981
        %3251 = vmatprep.subr.mxu0 0.0
        %3252 = vmatpush1.msra.mxu0 %v2982
        %3253 = vmatprep.subr.mxu0 0.0
        %3254 = vmatpush1.msra.mxu0 %v2983
        %3255 = vmatprep.subr.mxu0 0.0
        %3256 = vmatpush1.msra.mxu0 %v2984
        %3257 = vmatprep.subr.mxu0 0.0
        %3258 = vmatpush1.msra.mxu0 %v2985
        %3259 = vmatprep.subr.mxu0 0.0
        %3260 = vmatpush1.msra.mxu0 %v2986
        %3261 = vmatprep.subr.mxu0 0.0
        %3262 = vmatpush1.msra.mxu0 %v2987
        %3263 = vmatprep.subr.mxu0 0.0
        %3264 = vmatpush1.msra.mxu0 %v2988
        %3265 = vmatprep.subr.mxu0 0.0
        %3266 = vmatpush1.msra.mxu0 %v2989
        %3267 = vmatprep.subr.mxu0 0.0
        %3268 = vmatpush1.msra.mxu0 %v2990
        %3269 = vmatprep.subr.mxu0 0.0
        %3270 = vmatpush1.msra.mxu0 %v2991
        %3271 = vmatprep.subr.mxu0 0.0
        %3272 = vmatpush1.msra.mxu0 %v2992
        %3273 = vmatprep.subr.mxu0 0.0
        %3274 = vmatpush1.msra.mxu0 %v2993
        %3275 = vmatprep.subr.mxu0 0.0
        %3276 = vmatpush1.msra.mxu0 %v2994
        %3277 = vmatprep.subr.mxu0 0.0
        %3278 = vmatpush1.msra.mxu0 %v2995
        %3279 = vmatprep.subr.mxu0 0.0
        %3280 = vmatpush1.msra.mxu0 %v2996
        %3281 = vmatprep.subr.mxu0 0.0
        %3282 = vmatpush1.msra.mxu0 %v2997
        %3283 = vmatprep.subr.mxu0 0.0
        %3284 = vmatpush1.msra.mxu0 %v2998
        %3285 = vmatprep.subr.mxu0 0.0
        %3286 = vmatpush1.msra.mxu0 %v2999
        %3287 = vmatprep.subr.mxu0 0.0
        %3288 = vmatpush1.msra.mxu0 %v3000
        %3289 = vmatprep.subr.mxu0 0.0
        %3290 = vmatpush1.msra.mxu0 %v3001
        %3291 = vmatprep.subr.mxu0 0.0
        %3292 = vmatpush1.msra.mxu0 %v3002
        %3293 = vmatprep.subr.mxu0 0.0
        %3294 = vmatpush1.msra.mxu0 %v3003
        %3295 = vmatprep.subr.mxu0 0.0
        %3296 = vmatpush1.msra.mxu0 %v3004
        %3297 = vmatprep.subr.mxu0 0.0
        %3298 = vmatpush1.msra.mxu0 %v3005
        %3299 = vmatprep.subr.mxu0 0.0
        %3300 = vmatpush1.msra.mxu0 %v3006
        %3301 = vmatprep.subr.mxu0 0.0
        %3302 = vmatpush1.msra.mxu0 %v3007
        %3303 = vmatprep.mubr.f32.mxu0 %v2961
        %3304 = vmatmul.mubr.f32.gmra.mrb[0].mxu0 %v2960
        %v3305 = vpop.f32.mrb[0].mxu0
        %v3306 = vadd.f32 %v3237, %v3305
        %v3307 = vpop.f32.mrb[0].mxu0
        %3308 = vdwg.mxu0
        %3309 = vmatprep.subr.mxu0 0.0
        %3310 = vmatpush1.msra.mxu0 %v3008
        %3311 = vmatprep.subr.mxu0 0.0
        %3312 = vmatpush1.msra.mxu0 %v3009
        %3313 = vmatprep.subr.mxu0 0.0
        %3314 = vmatpush1.msra.mxu0 %v3010
        %3315 = vmatprep.subr.mxu0 0.0
        %3316 = vmatpush1.msra.mxu0 %v3011
        %3317 = vmatprep.subr.mxu0 0.0
        %3318 = vmatpush1.msra.mxu0 %v3012
        %3319 = vmatprep.subr.mxu0 0.0
        %3320 = vmatpush1.msra.mxu0 %v3013
        %3321 = vmatprep.subr.mxu0 0.0
        %3322 = vmatpush1.msra.mxu0 %v3014
        %3323 = vmatprep.subr.mxu0 0.0
        %3324 = vmatpush1.msra.mxu0 %v3015
        %3325 = vmatprep.subr.mxu0 0.0
        %3326 = vmatpush1.msra.mxu0 %v3016
        %3327 = vmatprep.subr.mxu0 0.0
        %3328 = vmatpush1.msra.mxu0 %v3017
        %3329 = vmatprep.subr.mxu0 0.0
        %3330 = vmatpush1.msra.mxu0 %v3018
        %3331 = vmatprep.subr.mxu0 0.0
        %3332 = vmatpush1.msra.mxu0 %v3019
        %3333 = vmatprep.subr.mxu0 0.0
        %3334 = vmatpush1.msra.mxu0 %v3020
        %3335 = vmatprep.subr.mxu0 0.0
        %3336 = vmatpush1.msra.mxu0 %v3021
        %3337 = vmatprep.subr.mxu0 0.0
        %3338 = vmatpush1.msra.mxu0 %v3022
        %3339 = vmatprep.subr.mxu0 0.0
        %3340 = vmatpush1.msra.mxu0 %v3023
        %3341 = vmatprep.subr.mxu0 0.0
        %3342 = vmatpush1.msra.mxu0 %v3024
        %3343 = vmatprep.subr.mxu0 0.0
        %3344 = vmatpush1.msra.mxu0 %v3025
        %3345 = vmatprep.subr.mxu0 0.0
        %3346 = vmatpush1.msra.mxu0 %v3026
        %3347 = vmatprep.subr.mxu0 0.0
        %3348 = vmatpush1.msra.mxu0 %v3027
        %3349 = vmatprep.subr.mxu0 0.0
        %3350 = vmatpush1.msra.mxu0 %v3028
        %3351 = vmatprep.subr.mxu0 0.0
        %3352 = vmatpush1.msra.mxu0 %v3029
        %3353 = vmatprep.subr.mxu0 0.0
        %3354 = vmatpush1.msra.mxu0 %v3030
        %3355 = vmatprep.subr.mxu0 0.0
        %3356 = vmatpush1.msra.mxu0 %v3031
        %3357 = vmatprep.subr.mxu0 0.0
        %3358 = vmatpush1.msra.mxu0 %v3032
        %3359 = vmatprep.subr.mxu0 0.0
        %3360 = vmatpush1.msra.mxu0 %v3033
        %3361 = vmatprep.subr.mxu0 0.0
        %3362 = vmatpush1.msra.mxu0 %v3034
        %3363 = vmatprep.subr.mxu0 0.0
        %3364 = vmatpush1.msra.mxu0 %v3035
        %3365 = vmatprep.subr.mxu0 0.0
        %3366 = vmatpush1.msra.mxu0 %v3036
        %3367 = vmatprep.subr.mxu0 0.0
        %3368 = vmatpush1.msra.mxu0 %v3037
        %3369 = vmatprep.subr.mxu0 0.0
        %3370 = vmatpush1.msra.mxu0 %v3038
        %3371 = vmatprep.subr.mxu0 0.0
        %3372 = vmatpush1.msra.mxu0 %v3039
        %3373 = vmatprep.mubr.f32.mxu0 %v2963
        %3374 = vmatmul.mubr.f32.gmra.mrb[0].mxu0 %v2962
        %v3375 = vpop.f32.mrb[0].mxu0
        %v3376 = vadd.f32 %v3306, %v3375
        %v3377 = vpop.f32.mrb[0].mxu0
        %3378 = vdwg.mxu0
        %3379 = vmatprep.subr.mxu0 0.0
        %3380 = vmatpush1.msra.mxu0 %v3040
        %3381 = vmatprep.subr.mxu0 0.0
        %3382 = vmatpush1.msra.mxu0 %v3041
        %3383 = vmatprep.subr.mxu0 0.0
        %3384 = vmatpush1.msra.mxu0 %v3042
        %3385 = vmatprep.subr.mxu0 0.0
        %3386 = vmatpush1.msra.mxu0 %v3043
        %3387 = vmatprep.subr.mxu0 0.0
        %3388 = vmatpush1.msra.mxu0 %v3044
        %3389 = vmatprep.subr.mxu0 0.0
        %3390 = vmatpush1.msra.mxu0 %v3045
        %3391 = vmatprep.subr.mxu0 0.0
        %3392 = vmatpush1.msra.mxu0 %v3046
        %3393 = vmatprep.subr.mxu0 0.0
        %3394 = vmatpush1.msra.mxu0 %v3047
        %3395 = vmatprep.subr.mxu0 0.0
        %3396 = vmatpush1.msra.mxu0 %v3048
        %3397 = vmatprep.subr.mxu0 0.0
        %3398 = vmatpush1.msra.mxu0 %v3049
        %3399 = vmatprep.subr.mxu0 0.0
        %3400 = vmatpush1.msra.mxu0 %v3050
        %3401 = vmatprep.subr.mxu0 0.0
        %3402 = vmatpush1.msra.mxu0 %v3051
        %3403 = vmatprep.subr.mxu0 0.0
        %3404 = vmatpush1.msra.mxu0 %v3052
        %3405 = vmatprep.subr.mxu0 0.0
        %3406 = vmatpush1.msra.mxu0 %v3053
        %3407 = vmatprep.subr.mxu0 0.0
        %3408 = vmatpush1.msra.mxu0 %v3054
        %3409 = vmatprep.subr.mxu0 0.0
        %3410 = vmatpush1.msra.mxu0 %v3055
        %3411 = vmatprep.subr.mxu0 0.0
        %3412 = vmatpush1.msra.mxu0 %v3056
        %3413 = vmatprep.subr.mxu0 0.0
        %3414 = vmatpush1.msra.mxu0 %v3057
        %3415 = vmatprep.subr.mxu0 0.0
        %3416 = vmatpush1.msra.mxu0 %v3058
        %3417 = vmatprep.subr.mxu0 0.0
        %3418 = vmatpush1.msra.mxu0 %v3059
        %3419 = vmatprep.subr.mxu0 0.0
        %3420 = vmatpush1.msra.mxu0 %v3060
        %3421 = vmatprep.subr.mxu0 0.0
        %3422 = vmatpush1.msra.mxu0 %v3061
        %3423 = vmatprep.subr.mxu0 0.0
        %3424 = vmatpush1.msra.mxu0 %v3062
        %3425 = vmatprep.subr.mxu0 0.0
        %3426 = vmatpush1.msra.mxu0 %v3063
        %3427 = vmatprep.subr.mxu0 0.0
        %3428 = vmatpush1.msra.mxu0 %v3064
        %3429 = vmatprep.subr.mxu0 0.0
        %3430 = vmatpush1.msra.mxu0 %v3065
        %3431 = vmatprep.subr.mxu0 0.0
        %3432 = vmatpush1.msra.mxu0 %v3066
        %3433 = vmatprep.subr.mxu0 0.0
        %3434 = vmatpush1.msra.mxu0 %v3067
        %3435 = vmatprep.subr.mxu0 0.0
        %3436 = vmatpush1.msra.mxu0 %v3068
        %3437 = vmatprep.subr.mxu0 0.0
        %3438 = vmatpush1.msra.mxu0 %v3069
        %3439 = vmatprep.subr.mxu0 0.0
        %3440 = vmatpush1.msra.mxu0 %v3070
        %3441 = vmatprep.subr.mxu0 0.0
        %3442 = vmatpush1.msra.mxu0 %v3071
        %3443 = vmatprep.mubr.f32.mxu0 %v2965
        %3444 = vmatmul.mubr.f32.gmra.mrb[0].mxu0 %v2964
        %v3445 = vpop.f32.mrb[0].mxu0
        %v3446 = vadd.f32 %v3376, %v3445
        %v3447 = vpop.f32.mrb[0].mxu0
        %3448 = vdwg.mxu0
        %3449 = vmatprep.subr.mxu0 0.0
        %3450 = vmatpush1.msra.mxu0 %v3072
        %3451 = vmatprep.subr.mxu0 0.0
        %3452 = vmatpush1.msra.mxu0 %v3073
        %3453 = vmatprep.subr.mxu0 0.0
        %3454 = vmatpush1.msra.mxu0 %v3074
        %3455 = vmatprep.subr.mxu0 0.0
        %3456 = vmatpush1.msra.mxu0 %v3075
        %3457 = vmatprep.subr.mxu0 0.0
        %3458 = vmatpush1.msra.mxu0 %v3076
        %3459 = vmatprep.subr.mxu0 0.0
        %3460 = vmatpush1.msra.mxu0 %v3077
        %3461 = vmatprep.subr.mxu0 0.0
        %3462 = vmatpush1.msra.mxu0 %v3078
        %3463 = vmatprep.subr.mxu0 0.0
        %3464 = vmatpush1.msra.mxu0 %v3079
        %3465 = vmatprep.subr.mxu0 0.0
        %3466 = vmatpush1.msra.mxu0 %v3080
        %3467 = vmatprep.subr.mxu0 0.0
        %3468 = vmatpush1.msra.mxu0 %v3081
        %3469 = vmatprep.subr.mxu0 0.0
        %3470 = vmatpush1.msra.mxu0 %v3082
        %3471 = vmatprep.subr.mxu0 0.0
        %3472 = vmatpush1.msra.mxu0 %v3083
        %3473 = vmatprep.subr.mxu0 0.0
        %3474 = vmatpush1.msra.mxu0 %v3084
        %3475 = vmatprep.subr.mxu0 0.0
        %3476 = vmatpush1.msra.mxu0 %v3085
        %3477 = vmatprep.subr.mxu0 0.0
        %3478 = vmatpush1.msra.mxu0 %v3086
        %3479 = vmatprep.subr.mxu0 0.0
        %3480 = vmatpush1.msra.mxu0 %v3087
        %3481 = vmatprep.subr.mxu0 0.0
        %3482 = vmatpush1.msra.mxu0 %v3088
        %3483 = vmatprep.subr.mxu0 0.0
        %3484 = vmatpush1.msra.mxu0 %v3089
        %3485 = vmatprep.subr.mxu0 0.0
        %3486 = vmatpush1.msra.mxu0 %v3090
        %3487 = vmatprep.subr.mxu0 0.0
        %3488 = vmatpush1.msra.mxu0 %v3091
        %3489 = vmatprep.subr.mxu0 0.0
        %3490 = vmatpush1.msra.mxu0 %v3092
        %3491 = vmatprep.subr.mxu0 0.0
        %3492 = vmatpush1.msra.mxu0 %v3093
        %3493 = vmatprep.subr.mxu0 0.0
        %3494 = vmatpush1.msra.mxu0 %v3094
        %3495 = vmatprep.subr.mxu0 0.0
        %3496 = vmatpush1.msra.mxu0 %v3095
        %3497 = vmatprep.subr.mxu0 0.0
        %3498 = vmatpush1.msra.mxu0 %v3096
        %3499 = vmatprep.subr.mxu0 0.0
        %3500 = vmatpush1.msra.mxu0 %v3097
        %3501 = vmatprep.subr.mxu0 0.0
        %3502 = vmatpush1.msra.mxu0 %v3098
        %3503 = vmatprep.subr.mxu0 0.0
        %3504 = vmatpush1.msra.mxu0 %v3099
        %3505 = vmatprep.subr.mxu0 0.0
        %3506 = vmatpush1.msra.mxu0 %v3100
        %3507 = vmatprep.subr.mxu0 0.0
        %3508 = vmatpush1.msra.mxu0 %v3101
        %3509 = vmatprep.subr.mxu0 0.0
        %3510 = vmatpush1.msra.mxu0 %v3102
        %3511 = vmatprep.subr.mxu0 0.0
        %3512 = vmatpush1.msra.mxu0 %v3103
        %3513 = vmatprep.mubr.f32.mxu0 %v2967
        %3514 = vmatmul.mubr.f32.gmra.mrb[0].mxu0 %v2966
        %v3515 = vpop.f32.mrb[0].mxu0
        %v3516 = vadd.f32 %v3446, %v3515
        %v3517 = vpop.f32.mrb[0].mxu0
        %3518 = vdwg.mxu0
        %3519 = vmatprep.subr.mxu0 0.0
        %3520 = vmatpush1.msra.mxu0 %v3104
        %3521 = vmatprep.subr.mxu0 0.0
        %3522 = vmatpush1.msra.mxu0 %v3105
        %3523 = vmatprep.subr.mxu0 0.0
        %3524 = vmatpush1.msra.mxu0 %v3106
        %3525 = vmatprep.subr.mxu0 0.0
        %3526 = vmatpush1.msra.mxu0 %v3107
        %3527 = vmatprep.subr.mxu0 0.0
        %3528 = vmatpush1.msra.mxu0 %v3108
        %3529 = vmatprep.subr.mxu0 0.0
        %3530 = vmatpush1.msra.mxu0 %v3109
        %3531 = vmatprep.subr.mxu0 0.0
        %3532 = vmatpush1.msra.mxu0 %v3110
        %3533 = vmatprep.subr.mxu0 0.0
        %3534 = vmatpush1.msra.mxu0 %v3111
        %3535 = vmatprep.subr.mxu0 0.0
        %3536 = vmatpush1.msra.mxu0 %v3112
        %3537 = vmatprep.subr.mxu0 0.0
        %3538 = vmatpush1.msra.mxu0 %v3113
        %3539 = vmatprep.subr.mxu0 0.0
        %3540 = vmatpush1.msra.mxu0 %v3114
        %3541 = vmatprep.subr.mxu0 0.0
        %3542 = vmatpush1.msra.mxu0 %v3115
        %3543 = vmatprep.subr.mxu0 0.0
        %3544 = vmatpush1.msra.mxu0 %v3116
        %3545 = vmatprep.subr.mxu0 0.0
        %3546 = vmatpush1.msra.mxu0 %v3117
        %3547 = vmatprep.subr.mxu0 0.0
        %3548 = vmatpush1.msra.mxu0 %v3118
        %3549 = vmatprep.subr.mxu0 0.0
        %3550 = vmatpush1.msra.mxu0 %v3119
        %3551 = vmatprep.subr.mxu0 0.0
        %3552 = vmatpush1.msra.mxu0 %v3120
        %3553 = vmatprep.subr.mxu0 0.0
        %3554 = vmatpush1.msra.mxu0 %v3121
        %3555 = vmatprep.subr.mxu0 0.0
        %3556 = vmatpush1.msra.mxu0 %v3122
        %3557 = vmatprep.subr.mxu0 0.0
        %3558 = vmatpush1.msra.mxu0 %v3123
        %3559 = vmatprep.subr.mxu0 0.0
        %3560 = vmatpush1.msra.mxu0 %v3124
        %3561 = vmatprep.subr.mxu0 0.0
        %3562 = vmatpush1.msra.mxu0 %v3125
        %3563 = vmatprep.subr.mxu0 0.0
        %3564 = vmatpush1.msra.mxu0 %v3126
        %3565 = vmatprep.subr.mxu0 0.0
        %3566 = vmatpush1.msra.mxu0 %v3127
        %3567 = vmatprep.subr.mxu0 0.0
        %3568 = vmatpush1.msra.mxu0 %v3128
        %3569 = vmatprep.subr.mxu0 0.0
        %3570 = vmatpush1.msra.mxu0 %v3129
        %3571 = vmatprep.subr.mxu0 0.0
        %3572 = vmatpush1.msra.mxu0 %v3130
        %3573 = vmatprep.subr.mxu0 0.0
        %3574 = vmatpush1.msra.mxu0 %v3131
        %3575 = vmatprep.subr.mxu0 0.0
        %3576 = vmatpush1.msra.mxu0 %v3132
        %3577 = vmatprep.subr.mxu0 0.0
        %3578 = vmatpush1.msra.mxu0 %v3133
        %3579 = vmatprep.subr.mxu0 0.0
        %3580 = vmatpush1.msra.mxu0 %v3134
        %3581 = vmatprep.subr.mxu0 0.0
        %3582 = vmatpush1.msra.mxu0 %v3135
        %3583 = vmatprep.mubr.f32.mxu0 %v2969
        %3584 = vmatmul.mubr.f32.gmra.mrb[0].mxu0 %v2968
        %v3585 = vpop.f32.mrb[0].mxu0
        %v3586 = vadd.f32 %v3516, %v3585
        %v3587 = vpop.f32.mrb[0].mxu0
        %3588 = vdwg.mxu0
        %3589 = vmatprep.subr.mxu0 0.0
        %3590 = vmatpush1.msra.mxu0 %v3136
        %3591 = vmatprep.subr.mxu0 0.0
        %3592 = vmatpush1.msra.mxu0 %v3137
        %3593 = vmatprep.subr.mxu0 0.0
        %3594 = vmatpush1.msra.mxu0 %v3138
        %3595 = vmatprep.subr.mxu0 0.0
        %3596 = vmatpush1.msra.mxu0 %v3139
        %3597 = vmatprep.subr.mxu0 0.0
        %3598 = vmatpush1.msra.mxu0 %v3140
        %3599 = vmatprep.subr.mxu0 0.0
        %3600 = vmatpush1.msra.mxu0 %v3141
        %3601 = vmatprep.subr.mxu0 0.0
        %3602 = vmatpush1.msra.mxu0 %v3142
        %3603 = vmatprep.subr.mxu0 0.0
        %3604 = vmatpush1.msra.mxu0 %v3143
        %3605 = vmatprep.subr.mxu0 0.0
        %3606 = vmatpush1.msra.mxu0 %v3144
        %3607 = vmatprep.subr.mxu0 0.0
        %3608 = vmatpush1.msra.mxu0 %v3145
        %3609 = vmatprep.subr.mxu0 0.0
        %3610 = vmatpush1.msra.mxu0 %v3146
        %3611 = vmatprep.subr.mxu0 0.0
        %3612 = vmatpush1.msra.mxu0 %v3147
        %3613 = vmatprep.subr.mxu0 0.0
        %3614 = vmatpush1.msra.mxu0 %v3148
        %3615 = vmatprep.subr.mxu0 0.0
        %3616 = vmatpush1.msra.mxu0 %v3149
        %3617 = vmatprep.subr.mxu0 0.0
        %3618 = vmatpush1.msra.mxu0 %v3150
        %3619 = vmatprep.subr.mxu0 0.0
        %3620 = vmatpush1.msra.mxu0 %v3151
        %3621 = vmatprep.subr.mxu0 0.0
        %3622 = vmatpush1.msra.mxu0 %v3152
        %3623 = vmatprep.subr.mxu0 0.0
        %3624 = vmatpush1.msra.mxu0 %v3153
        %3625 = vmatprep.subr.mxu0 0.0
        %3626 = vmatpush1.msra.mxu0 %v3154
        %3627 = vmatprep.subr.mxu0 0.0
        %3628 = vmatpush1.msra.mxu0 %v3155
        %3629 = vmatprep.subr.mxu0 0.0
        %3630 = vmatpush1.msra.mxu0 %v3156
        %3631 = vmatprep.subr.mxu0 0.0
        %3632 = vmatpush1.msra.mxu0 %v3157
        %3633 = vmatprep.subr.mxu0 0.0
        %3634 = vmatpush1.msra.mxu0 %v3158
        %3635 = vmatprep.subr.mxu0 0.0
        %3636 = vmatpush1.msra.mxu0 %v3159
        %3637 = vmatprep.subr.mxu0 0.0
        %3638 = vmatpush1.msra.mxu0 %v3160
        %3639 = vmatprep.subr.mxu0 0.0
        %3640 = vmatpush1.msra.mxu0 %v3161
        %3641 = vmatprep.subr.mxu0 0.0
        %3642 = vmatpush1.msra.mxu0 %v3162
        %3643 = vmatprep.subr.mxu0 0.0
        %3644 = vmatpush1.msra.mxu0 %v3163
        %3645 = vmatprep.subr.mxu0 0.0
        %3646 = vmatpush1.msra.mxu0 %v3164
        %3647 = vmatprep.subr.mxu0 0.0
        %3648 = vmatpush1.msra.mxu0 %v3165
        %3649 = vmatprep.subr.mxu0 0.0
        %3650 = vmatpush1.msra.mxu0 %v3166
        %3651 = vmatprep.subr.mxu0 0.0
        %3652 = vmatpush1.msra.mxu0 %v3167
        %3653 = vmatprep.mubr.f32.mxu0 %v2971
        %3654 = vmatmul.mubr.f32.gmra.mrb[0].mxu0 %v2970
        %v3655 = vpop.f32.mrb[0].mxu0
        %v3656 = vadd.f32 %v3586, %v3655
        %v3657 = vpop.f32.mrb[0].mxu0
        %3658 = vdwg.mxu0
        %3659 = vmatprep.subr.mxu0 0.0
        %3660 = vmatpush1.msra.mxu0 %v3168
        %3661 = vmatprep.subr.mxu0 0.0
        %3662 = vmatpush1.msra.mxu0 %v3169
        %3663 = vmatprep.subr.mxu0 0.0
        %3664 = vmatpush1.msra.mxu0 %v3170
        %3665 = vmatprep.subr.mxu0 0.0
        %3666 = vmatpush1.msra.mxu0 %v3171
        %3667 = vmatprep.subr.mxu0 0.0
        %3668 = vmatpush1.msra.mxu0 %v3172
        %3669 = vmatprep.subr.mxu0 0.0
        %3670 = vmatpush1.msra.mxu0 %v3173
        %3671 = vmatprep.subr.mxu0 0.0
        %3672 = vmatpush1.msra.mxu0 %v3174
        %3673 = vmatprep.subr.mxu0 0.0
        %3674 = vmatpush1.msra.mxu0 %v3175
        %3675 = vmatprep.subr.mxu0 0.0
        %3676 = vmatpush1.msra.mxu0 %v3176
        %3677 = vmatprep.subr.mxu0 0.0
        %3678 = vmatpush1.msra.mxu0 %v3177
        %3679 = vmatprep.subr.mxu0 0.0
        %3680 = vmatpush1.msra.mxu0 %v3178
        %3681 = vmatprep.subr.mxu0 0.0
        %3682 = vmatpush1.msra.mxu0 %v3179
        %3683 = vmatprep.subr.mxu0 0.0
        %3684 = vmatpush1.msra.mxu0 %v3180
        %3685 = vmatprep.subr.mxu0 0.0
        %3686 = vmatpush1.msra.mxu0 %v3181
        %3687 = vmatprep.subr.mxu0 0.0
        %3688 = vmatpush1.msra.mxu0 %v3182
        %3689 = vmatprep.subr.mxu0 0.0
        %3690 = vmatpush1.msra.mxu0 %v3183
        %3691 = vmatprep.subr.mxu0 0.0
        %3692 = vmatpush1.msra.mxu0 %v3184
        %3693 = vmatprep.subr.mxu0 0.0
        %3694 = vmatpush1.msra.mxu0 %v3185
        %3695 = vmatprep.subr.mxu0 0.0
        %3696 = vmatpush1.msra.mxu0 %v3186
        %3697 = vmatprep.subr.mxu0 0.0
        %3698 = vmatpush1.msra.mxu0 %v3187
        %3699 = vmatprep.subr.mxu0 0.0
        %3700 = vmatpush1.msra.mxu0 %v3188
        %3701 = vmatprep.subr.mxu0 0.0
        %3702 = vmatpush1.msra.mxu0 %v3189
        %3703 = vmatprep.subr.mxu0 0.0
        %3704 = vmatpush1.msra.mxu0 %v3190
        %3705 = vmatprep.subr.mxu0 0.0
        %3706 = vmatpush1.msra.mxu0 %v3191
        %3707 = vmatprep.subr.mxu0 0.0
        %3708 = vmatpush1.msra.mxu0 %v3192
        %3709 = vmatprep.subr.mxu0 0.0
        %3710 = vmatpush1.msra.mxu0 %v3193
        %3711 = vmatprep.subr.mxu0 0.0
        %3712 = vmatpush1.msra.mxu0 %v3194
        %3713 = vmatprep.subr.mxu0 0.0
        %3714 = vmatpush1.msra.mxu0 %v3195
        %3715 = vmatprep.subr.mxu0 0.0
        %3716 = vmatpush1.msra.mxu0 %v3196
        %3717 = vmatprep.subr.mxu0 0.0
        %3718 = vmatpush1.msra.mxu0 %v3197
        %3719 = vmatprep.subr.mxu0 0.0
        %3720 = vmatpush1.msra.mxu0 %v3198
        %3721 = vmatprep.subr.mxu0 0.0
        %3722 = vmatpush1.msra.mxu0 %v3199
        %3723 = vmatprep.mubr.f32.mxu0 %v2973
        %3724 = vmatmul.mubr.f32.gmra.mrb[0].mxu0 %v2972
        %v3725 = vpop.f32.mrb[0].mxu0
        %v3726 = vadd.f32 %v3656, %v3725
        %v3727 = vpop.f32.mrb[0].mxu0
        %3728 = vdwg.mxu0
        %3729 = vmatprep.subr.mxu0 0.0
        %3730 = vmatpush1.msra.mxu0 %v3200
        %3731 = vmatprep.subr.mxu0 0.0
        %3732 = vmatpush1.msra.mxu0 %v3201
        %3733 = vmatprep.subr.mxu0 0.0
        %3734 = vmatpush1.msra.mxu0 %v3202
        %3735 = vmatprep.subr.mxu0 0.0
        %3736 = vmatpush1.msra.mxu0 %v3203
        %3737 = vmatprep.subr.mxu0 0.0
        %3738 = vmatpush1.msra.mxu0 %v3204
        %3739 = vmatprep.subr.mxu0 0.0
        %3740 = vmatpush1.msra.mxu0 %v3205
        %3741 = vmatprep.subr.mxu0 0.0
        %3742 = vmatpush1.msra.mxu0 %v3206
        %3743 = vmatprep.subr.mxu0 0.0
        %3744 = vmatpush1.msra.mxu0 %v3207
        %3745 = vmatprep.subr.mxu0 0.0
        %3746 = vmatpush1.msra.mxu0 %v3208
        %3747 = vmatprep.subr.mxu0 0.0
        %3748 = vmatpush1.msra.mxu0 %v3209
        %3749 = vmatprep.subr.mxu0 0.0
        %3750 = vmatpush1.msra.mxu0 %v3210
        %3751 = vmatprep.subr.mxu0 0.0
        %3752 = vmatpush1.msra.mxu0 %v3211
        %3753 = vmatprep.subr.mxu0 0.0
        %3754 = vmatpush1.msra.mxu0 %v3212
        %3755 = vmatprep.subr.mxu0 0.0
        %3756 = vmatpush1.msra.mxu0 %v3213
        %3757 = vmatprep.subr.mxu0 0.0
        %3758 = vmatpush1.msra.mxu0 %v3214
        %3759 = vmatprep.subr.mxu0 0.0
        %3760 = vmatpush1.msra.mxu0 %v3215
        %3761 = vmatprep.subr.mxu0 0.0
        %3762 = vmatpush1.msra.mxu0 %v3216
        %3763 = vmatprep.subr.mxu0 0.0
        %3764 = vmatpush1.msra.mxu0 %v3217
        %3765 = vmatprep.subr.mxu0 0.0
        %3766 = vmatpush1.msra.mxu0 %v3218
        %3767 = vmatprep.subr.mxu0 0.0
        %3768 = vmatpush1.msra.mxu0 %v3219
        %3769 = vmatprep.subr.mxu0 0.0
        %3770 = vmatpush1.msra.mxu0 %v3220
        %3771 = vmatprep.subr.mxu0 0.0
        %3772 = vmatpush1.msra.mxu0 %v3221
        %3773 = vmatprep.subr.mxu0 0.0
        %3774 = vmatpush1.msra.mxu0 %v3222
        %3775 = vmatprep.subr.mxu0 0.0
        %3776 = vmatpush1.msra.mxu0 %v3223
        %3777 = vmatprep.subr.mxu0 0.0
        %3778 = vmatpush1.msra.mxu0 %v3224
        %3779 = vmatprep.subr.mxu0 0.0
        %3780 = vmatpush1.msra.mxu0 %v3225
        %3781 = vmatprep.subr.mxu0 0.0
        %3782 = vmatpush1.msra.mxu0 %v3226
        %3783 = vmatprep.subr.mxu0 0.0
        %3784 = vmatpush1.msra.mxu0 %v3227
        %3785 = vmatprep.subr.mxu0 0.0
        %3786 = vmatpush1.msra.mxu0 %v3228
        %3787 = vmatprep.subr.mxu0 0.0
        %3788 = vmatpush1.msra.mxu0 %v3229
        %3789 = vmatprep.subr.mxu0 0.0
        %3790 = vmatpush1.msra.mxu0 %v3230
        %3791 = vmatprep.subr.mxu0 0.0
        %3792 = vmatpush1.msra.mxu0 %v3231
        %3793 = vmatprep.mubr.f32.mxu0 %v2975
        %3794 = vmatmul.mubr.f32.gmra.mrb[0].mxu0 %v2974
        %v3795 = vpop.f32.mrb[0].mxu0
        %v3796 = vadd.f32 %v3726, %v3795
        %v3797 = vpop.f32.mrb[0].mxu0
        %3798 = vdwg.mxu0
        %v3799 = vadd.f32 %v2240, %v3796
        %v3800 = vld [vmem:[%s65] sm:$0x1]
        %v3801 = vld [vmem:[%s67] sm:$0x1]
        %v3802 = vsel %vm1677, %v3799, 0.0
        %3803 = vadd.xlane.f32.xlu0 %v3802
        %v3804 = vpop.xlane.xlu0 %3803
        %v3805 = vmul.f32 %v3804, %v1681
        %v3806 = vsub.f32 %v3799, %v3805
        %v3807 = vmul.f32 %v3806, %v3806
        %v3808 = vsel %vm1677, %v3807, 0.0
        %3809 = vadd.xlane.f32.xlu0 %v3808
        %v3810 = vpop.xlane.xlu0 %3809
        %v3811 = vmul.f32 %v3810, %v1681
        %v3812 = vadd.f32 %v3811, 1e-05
        %v3813 = vrsqrt.pop %v3812
        %v3814 = vmul.f32 %v3806, %v3813
        %v3816 = vlaneseq
        %v3817 = vshrl.u32 %v3816, 7
        %v3818 = vsub.s32 0, %v3817
        %v3819 = vrot.slane %v3800, %v3818
        %v3821 = vmul.f32 %v3814, %v3819
        %v3823 = vlaneseq
        %v3824 = vshrl.u32 %v3823, 7
        %v3825 = vsub.s32 0, %v3824
        %v3826 = vrot.slane %v3801, %v3825
        %v3828 = vadd.f32 %v3821, %v3826
        %v3829 = vld [vmem:[%s69] sm:$0xff]
        %v3830 = vld [vmem:[%s69 + $0x8] sm:$0xff]
        %v3831 = vld [vmem:[%s71] sm:$0x1]
        %v3833 = vlaneseq
        %v3834 = vshrl.u32 %v3833, 7
        %v3835 = vsub.s32 0, %v3834
        %v3836 = vrot.slane %v3831, %v3835
        %v3839 = vsel %vm1122, %v1112, 0
        %3841 = vmatprep.subr.mxu0 0.0
        %3842 = vmatpush1.msra.mxu0 %v3829
        %3843 = vmatprep.subr.mxu0 0.0
        %3844 = vmatpush1.msra.mxu0 %v3830
        %3845 = vmatprep.subr.mxu0 0.0
        %3846 = vmatpush1.msra.mxu0 0.0
        %3847 = vmatprep.subr.mxu0 0.0
        %3848 = vmatpush1.msra.mxu0 0.0
        %3849 = vmatprep.subr.mxu0 0.0
        %3850 = vmatpush1.msra.mxu0 0.0
        %3851 = vmatprep.subr.mxu0 0.0
        %3852 = vmatpush1.msra.mxu0 0.0
        %3853 = vmatprep.subr.mxu0 0.0
        %3854 = vmatpush1.msra.mxu0 0.0
        %3855 = vmatprep.subr.mxu0 0.0
        %3856 = vmatpush1.msra.mxu0 0.0
        %3857 = vmatprep.subr.mxu0 0.0
        %3858 = vmatpush1.msra.mxu0 0.0
        %3859 = vmatprep.subr.mxu0 0.0
        %3860 = vmatpush1.msra.mxu0 0.0
        %3861 = vmatprep.subr.mxu0 0.0
        %3862 = vmatpush1.msra.mxu0 0.0
        %3863 = vmatprep.subr.mxu0 0.0
        %3864 = vmatpush1.msra.mxu0 0.0
        %3865 = vmatprep.subr.mxu0 0.0
        %3866 = vmatpush1.msra.mxu0 0.0
        %3867 = vmatprep.subr.mxu0 0.0
        %3868 = vmatpush1.msra.mxu0 0.0
        %3869 = vmatprep.subr.mxu0 0.0
        %3870 = vmatpush1.msra.mxu0 0.0
        %3871 = vmatprep.subr.mxu0 0.0
        %3872 = vmatpush1.msra.mxu0 0.0
        %3873 = vmatprep.subr.mxu0 0.0
        %3874 = vmatpush1.msra.mxu0 0.0
        %3875 = vmatprep.subr.mxu0 0.0
        %3876 = vmatpush1.msra.mxu0 0.0
        %3877 = vmatprep.subr.mxu0 0.0
        %3878 = vmatpush1.msra.mxu0 0.0
        %3879 = vmatprep.subr.mxu0 0.0
        %3880 = vmatpush1.msra.mxu0 0.0
        %3881 = vmatprep.subr.mxu0 0.0
        %3882 = vmatpush1.msra.mxu0 0.0
        %3883 = vmatprep.subr.mxu0 0.0
        %3884 = vmatpush1.msra.mxu0 0.0
        %3885 = vmatprep.subr.mxu0 0.0
        %3886 = vmatpush1.msra.mxu0 0.0
        %3887 = vmatprep.subr.mxu0 0.0
        %3888 = vmatpush1.msra.mxu0 0.0
        %3889 = vmatprep.subr.mxu0 0.0
        %3890 = vmatpush1.msra.mxu0 0.0
        %3891 = vmatprep.subr.mxu0 0.0
        %3892 = vmatpush1.msra.mxu0 0.0
        %3893 = vmatprep.subr.mxu0 0.0
        %3894 = vmatpush1.msra.mxu0 0.0
        %3895 = vmatprep.subr.mxu0 0.0
        %3896 = vmatpush1.msra.mxu0 0.0
        %3897 = vmatprep.subr.mxu0 0.0
        %3898 = vmatpush1.msra.mxu0 0.0
        %3899 = vmatprep.subr.mxu0 0.0
        %3900 = vmatpush1.msra.mxu0 0.0
        %3901 = vmatprep.subr.mxu0 0.0
        %3902 = vmatpush1.msra.mxu0 0.0
        %3903 = vmatprep.subr.mxu0 0.0
        %3904 = vmatpush1.msra.mxu0 0.0
        %3905 = vmatprep.mubr.f32.mxu0 0.0
        %3906 = vmatmul.mubr.f32.gmra.mrb[0].mxu0 %v3839
        %v3907 = vpop.f32.mrb[0].mxu0
        %v3908 = vadd.f32 %v3836, %v3907
        %v3909 = vpop.f32.mrb[0].mxu0
        %3910 = vdwg.mxu0
        %v3911 = vmax.f32 %v3908, 0.0
        %v3912 = vadd.f32 %v3828, %v3911
        %3913 = vst.msk [vmem:[%s1102] sm:$0xff] %vm1677, %v3912
        %s3914 = sand.u32 %s861, 1
        %s3915 = scalar_lea.sflag [#allocation3], %s3914
        %s3916 = sand.u32 %s861, 1
        %s3917 = smul.addr %s3916, 8
        %s3918 = scalar_lea.vmem [#allocation2], %s3917
        // Predicated region
        $region165: #{tpu_custom_call.1} parent=163 // pred_check
          %p3919 = pneg %p871
        $region166: #{tpu_custom_call.1} parent=163 // pred_check_branch
          %3921 = sbr.rel (%p3919) target = $region168
        $region167: #{tpu_custom_call.1} parent=163 // pred_region
          %s3923 = ssub.s32 128, 128
          %3924 = vsyncadd %s3915, %s3923
          %s3925 = smul.addr %s87, 128
          %s3926 = scalar_lea.hbm %s73, %s3925
          %s3928 = sshll.u32 %s3918, 4
          %s3929 = int_to_ptr.vmem [resolvable:$true] %s3928
          %3931 = dma.vmem_to_hbm [thread:$0]  %s3929, 128, %s3926, %s3915
        $region168: #{tpu_custom_call.1} parent=163 // pred_fallthru
          _
      $region164: #{tpu_custom_call.1} parent=5 // pred_fallthru
        _
      %p3932 = scmp.le.s32.totalorder 2, %s82
      // Predicated region
      $region169: #{tpu_custom_call.1} parent=5 // pred_check
        %p3933 = pneg %p3932
      $region170: #{tpu_custom_call.1} parent=5 // pred_check_branch
        %3935 = sbr.rel (%p3933) target = $region172
      $region171: #{tpu_custom_call.1} parent=5 // pred_region
        %s3936 = ssub.s32 %s82, 2
        // Predicated region
        $region173: #{tpu_custom_call.1} parent=171 // pred_check
          %p3937 = pneg %p877
        $region174: #{tpu_custom_call.1} parent=171 // pred_check_branch
          %3939 = sbr.rel (%p3937) target = $region176
        $region175: #{tpu_custom_call.1} parent=171 // pred_region
          %s3940 = sand.u32 %s862, 1
          %s3941 = scalar_lea.sflag [#allocation3], %s3940
          %s3942 = sand.u32 %s862, 1
          %s3943 = smul.addr %s3942, 8
          %s3944 = scalar_lea.vmem [#allocation2], %s3943
          %3945 = dma.done %s3941, 128
        $region176: #{tpu_custom_call.1} parent=171 // pred_fallthru
          _
      $region172: #{tpu_custom_call.1} parent=5 // pred_fallthru
        _
    $region6: #{tpu_custom_call.1} parent=1 // loop_footer
      %s86 = sadd.s32 1, %s82
    $region7: #{tpu_custom_call.1} parent=1 // loop_footer_branch
      %81 = sbr.rel target = $region3
    $region8: #{tpu_custom_call.1} parent=1 // loop_exit
      _
    %3946 = vsyncpa [#allocation3], 1
    %s3947 = scalar_lea.sflag [#allocation3], 1
    %3948 = vsyncpa %s3947, 1

</llo_original>
